<compile_context>
chip_gen: v7x
topology: tpu7x:2x2x1
jax: 0.10.0
libtpu: 0.0.40
codegen_flags: <defaults>
</compile_context>

<pallas_src>
import functools

import jax
import jax.numpy as jnp
from jax import lax
from jax.experimental import pallas as pl
from jax.experimental.pallas import tpu as pltpu

LANE = 128       # pad all matmul output (lane) dims to this
C1_OUT = 16      # conv1 real output channels
C2_OUT = 32      # conv2 real output channels
FC1_OUT = 256


# ----------------------------------------------------------------------------
# Pallas kernel 1: Y = relu?(X @ W + b), tiled over M (rows)
# X/W are bf16 (MXU native), accumulation + bias + ReLU in f32, store bf16.
# ----------------------------------------------------------------------------
def _matmul_bias_kernel(x_ref, w_ref, b_ref, o_ref, *, relu):
    acc = jnp.dot(x_ref[...], w_ref[...], preferred_element_type=jnp.float32)
    acc = acc + b_ref[...]            # (1, N) f32 broadcasts over rows
    if relu:
        acc = jnp.maximum(acc, 0.0)
    o_ref[...] = acc.astype(o_ref.dtype)


def pallas_linear(x, w, b_row, *, relu=False, tile_m=2048,
                  out_dtype=jnp.bfloat16):
    """y = relu?(x @ w + b). x:(M,K) bf16, w:(K,N) bf16, b_row:(1,N) f32."""
    M, K = x.shape
    Kw, N = w.shape
    assert K == Kw and b_row.shape == (1, N)
    if M <= tile_m:
        tm, grid = M, (1,)                        # full-dim block, always legal
    else:
        tm, grid = tile_m, (pl.cdiv(M, tile_m),)  # partial last block is masked
    return pl.pallas_call(
        functools.partial(_matmul_bias_kernel, relu=relu),
        out_shape=jax.ShapeDtypeStruct((M, N), out_dtype),
        grid=grid,
        in_specs=[
            pl.BlockSpec((tm, K), lambda i: (i, 0)),   # activations: tiled over M
            pl.BlockSpec((K, N), lambda i: (0, 0)),    # weights: VMEM-resident
            pl.BlockSpec((1, N), lambda i: (0, 0)),    # bias row: VMEM-resident
        ],
        out_specs=pl.BlockSpec((tm, N), lambda i: (i, 0)),
        compiler_params=pltpu.CompilerParams(
            dimension_semantics=("parallel",)),
    )(x, w, b_row)


# ----------------------------------------------------------------------------
# Pallas kernel 2: fused fc1(+ReLU) + output head, gridded over batch rows.
# The (tm, 256) hidden activation never leaves vregs/VMEM.
# ----------------------------------------------------------------------------
def _fc_head_kernel(x_ref, wf_ref, bf_ref, wo_ref, bo_ref, o_ref):
    h = jnp.dot(x_ref[...], wf_ref[...], preferred_element_type=jnp.float32)
    h = jnp.maximum(h + bf_ref[...], 0.0)
    o = jnp.dot(h.astype(wo_ref.dtype), wo_ref[...],
                preferred_element_type=jnp.float32) + bo_ref[...]
    o_ref[...] = o.astype(o_ref.dtype)


def fused_fc_head(xf, wf, bf, wo, bo, *, tile_m=256):
    B, K = xf.shape
    N = wo.shape[1]
    if B <= tile_m:
        tm, grid = B, (1,)
    else:
        tm, grid = tile_m, (pl.cdiv(B, tile_m),)
    return pl.pallas_call(
        _fc_head_kernel,
        out_shape=jax.ShapeDtypeStruct((B, N), jnp.float32),
        grid=grid,
        in_specs=[
            pl.BlockSpec((tm, K), lambda i: (i, 0)),       # xf: tiled over batch
            pl.BlockSpec(wf.shape, lambda i: (0, 0)),      # weights stay resident
            pl.BlockSpec(bf.shape, lambda i: (0, 0)),
            pl.BlockSpec(wo.shape, lambda i: (0, 0)),
            pl.BlockSpec(bo.shape, lambda i: (0, 0)),
        ],
        out_specs=pl.BlockSpec((tm, N), lambda i: (i, 0)),
        compiler_params=pltpu.CompilerParams(
            dimension_semantics=("parallel",)),
    )(xf, wf, bf, wo, bo)


# ----------------------------------------------------------------------------
# Patch extraction (single fused XLA op). With bf16 data and an exact 0/1
# kernel this is a pure gather, so default precision is exact. Feature order
# of the patch dim is (Cin, kh, kw), matching the weight layouts below.
# ----------------------------------------------------------------------------
def _patches(x, k, s, dims):
    return lax.conv_general_dilated_patches(
        x, (k, k), (s, s), "VALID", dimension_numbers=dims)


# ----------------------------------------------------------------------------
# One-time parameter preparation (layout + padding + bf16). Done at init only.
# ----------------------------------------------------------------------------
def prepare_params(p, n_actions):
    assert n_actions <= LANE
    cin = p["w1"].shape[1]

    # conv1: OIHW (16, Cin, 8, 8) -> (Cin*64, 128) bf16, K order (Cin, kh, kw)
    w1 = jnp.transpose(p["w1"], (1, 2, 3, 0)).reshape(cin * 64, C1_OUT)
    w1 = jnp.pad(w1, ((0, 0), (0, LANE - C1_OUT))).astype(jnp.bfloat16)
    b1 = jnp.pad(p["b1"], (0, LANE - C1_OUT)).reshape(1, LANE)      # f32

    # conv2: OIHW (32, 16, 4, 4) -> (16*16=256, 128) bf16, NO Cin padding
    w2 = jnp.transpose(p["w2"], (1, 2, 3, 0)).reshape(C1_OUT * 16, C2_OUT)
    w2 = jnp.pad(w2, ((0, 0), (0, LANE - C2_OUT))).astype(jnp.bfloat16)
    b2 = jnp.pad(p["b2"], (0, LANE - C2_OUT)).reshape(1, LANE)      # f32

    # fc1: torch (256, 2592) with columns in (c, h, w) order (NCHW flatten).
    # Permute columns once to NHWC flatten order, then store as (K, N) bf16.
    wf1 = p["wf1"].reshape(FC1_OUT, C2_OUT, 9, 9)
    wf1 = jnp.transpose(wf1, (0, 2, 3, 1)).reshape(FC1_OUT, 9 * 9 * C2_OUT)
    wf1 = jnp.transpose(wf1, (1, 0)).astype(jnp.bfloat16)           # (2592, 256)
    bf1 = p["bf1"].reshape(1, FC1_OUT)                              # f32

    # head: (n_actions, 256) -> (256, 128) bf16, zero-padded for lane density
    wo = jnp.pad(jnp.transpose(p["wo"], (1, 0)),
                 ((0, 0), (0, LANE - n_actions))).astype(jnp.bfloat16)
    bo = jnp.pad(p["bo"], (0, LANE - n_actions)).reshape(1, LANE)   # f32

    return {"w1": w1, "b1": b1, "w2": w2, "b2": b2,
            "wf1": wf1, "bf1": bf1, "wo": wo, "bo": bo}


# ----------------------------------------------------------------------------
# DQN forward
# ----------------------------------------------------------------------------
@functools.partial(jax.jit, static_argnames=("n_actions",))
def dqn_forward(x, ip, n_actions):
    B = x.shape[0]
    xb = x.astype(jnp.bfloat16)                              # bf16 MXU operands

    # conv1 + ReLU: NCHW input -> NHWC patches -> lane-dense MXU matmul
    p1 = _patches(xb, 8, 4, ("NCHW", "OIHW", "NHWC"))        # (B, 20, 20, Cin*64)
    oh1, ow1, k1 = p1.shape[1], p1.shape[2], p1.shape[3]
    y1 = pallas_linear(p1.reshape(B * oh1 * ow1, k1), ip["w1"], ip["b1"],
                       relu=True, tile_m=2048)               # (B*400, 128) bf16
    y1 = y1.reshape(B, oh1, ow1, LANE)[..., :C1_OUT]         # keep 16 real chans

    # conv2 + ReLU: slim K=256 patches (no zero channels carried)
    p2 = _patches(y1, 4, 2, ("NHWC", "HWIO", "NHWC"))        # (B, 9, 9, 256)
    oh2, ow2, k2 = p2.shape[1], p2.shape[2], p2.shape[3]
    y2 = pallas_linear(p2.reshape(B * oh2 * ow2, k2), ip["w2"], ip["b2"],
                       relu=True, tile_m=2048)               # (B*81, 128) bf16
    y2 = y2.reshape(B, oh2, ow2, LANE)[..., :C2_OUT]         # drop pad channels
    xf = y2.reshape(B, oh2 * ow2 * C2_OUT)                   # (B, 2592) bf16, NHWC

    # fc1 + ReLU + output head, fused and gridded over batch
    out = fused_fc_head(xf, ip["wf1"], ip["bf1"], ip["wo"], ip["bo"])  # (B, 128)
    return out[:, :n_actions]


# ----------------------------------------------------------------------------
# Init (PyTorch-style layouts) and pure-JAX f32 reference
# ----------------------------------------------------------------------------
def init_params(key, in_channels, n_actions):
    ks = jax.random.split(key, 8)

    def u(k, shape, fan_in):
        bound = 1.0 / jnp.sqrt(fan_in)
        return jax.random.uniform(k, shape, jnp.float32, -bound, bound)

    return {
        "w1": u(ks[0], (16, in_channels, 8, 8), in_channels * 8 * 8),
        "b1": u(ks[1], (16,), in_channels * 8 * 8),
        "w2": u(ks[2], (32, 16, 4, 4), 16 * 4 * 4),
        "b2": u(ks[3], (32,), 16 * 4 * 4),
        "wf1": u(ks[4], (256, 9 * 9 * 32), 9 * 9 * 32),
        "bf1": u(ks[5], (256,), 9 * 9 * 32),
        "wo": u(ks[6], (n_actions, 256), 256),
        "bo": u(ks[7], (n_actions,), 256),
    }


def dqn_reference(x, p):
    y = jax.lax.conv_general_dilated(x, p["w1"], (4, 4), "VALID",
                                     dimension_numbers=("NCHW", "OIHW", "NCHW"))
    y = jax.nn.relu(y + p["b1"][None, :, None, None])
    y = jax.lax.conv_general_dilated(y, p["w2"], (2, 2), "VALID",
                                     dimension_numbers=("NCHW", "OIHW", "NCHW"))
    y = jax.nn.relu(y + p["b2"][None, :, None, None])
    y = y.reshape(y.shape[0], -1)
    y = jax.nn.relu(y @ p["wf1"].T + p["bf1"])
    return y @ p["wo"].T + p["bo"]


if __name__ == "__main__":
    key = jax.random.PRNGKey(0)
    k_in, k_p = jax.random.split(key)

    B, C, H, W = 2, 4, 84, 84        # fc1 hardcodes convw=convh=9 => 84x84 input
    n_actions = 6

    x = jax.random.normal(k_in, (B, C, H, W), jnp.float32)
    params = init_params(k_p, C, n_actions)
    inf_params = prepare_params(params, n_actions)   # one-time layout/padding/bf16

    out = jax.block_until_ready(dqn_forward(x, inf_params, n_actions=n_actions))
    ref = jax.block_until_ready(dqn_reference(x, params))

    assert out.shape == (B, n_actions)
    # bf16 MXU operands with f32 accumulation vs f32 reference: loosened tol.
    assert jnp.allclose(out, ref, atol=2e-2, rtol=2e-2), "mismatch vs reference"

    print("KERNEL_OK")
</pallas_src>

<mosaic_0001>
module attributes {stable_mosaic.version = 11 : i64} {
  func.func @_matmul_bias_kernel(%arg0: i32, %arg1: memref<800x256xbf16, #tpu.memory_space<vmem>>, %arg2: memref<256x128xbf16, #tpu.memory_space<vmem>>, %arg3: memref<1x128xf32, #tpu.memory_space<vmem>>, %arg4: memref<800x128xbf16, #tpu.memory_space<vmem>>) attributes {dimension_semantics = [#tpu.dimension_semantics<parallel>], iteration_bounds = array<i64: 1>, scalar_prefetch = 0 : i64, scratch_operands = 0 : i64, tpu.core_type = #tpu.core_type<tc>, window_params = [{transform_indices = @transform_0, window_bounds = array<i64: 800, 256>}, {pipeline_mode = #tpu.pipeline_mode<synchronous>, transform_indices = @transform_1, window_bounds = array<i64: 256, 128>}, {pipeline_mode = #tpu.pipeline_mode<synchronous>, transform_indices = @transform_2, window_bounds = array<i64: 1, 128>}, {transform_indices = @transform_3, window_bounds = array<i64: 800, 128>}]} {
    %c0 = arith.constant 0 : index
    %c0_0 = arith.constant 0 : index
    %0 = vector.load %arg1[%c0, %c0_0] : memref<800x256xbf16, #tpu.memory_space<vmem>>, vector<800x256xbf16>
    %c0_1 = arith.constant 0 : index
    %c0_2 = arith.constant 0 : index
    %1 = vector.load %arg2[%c0_1, %c0_2] : memref<256x128xbf16, #tpu.memory_space<vmem>>, vector<256x128xbf16>
    %cst = arith.constant dense<0.000000e+00> : vector<800x128xf32>
    %2 = tpu.matmul %0, %1, %cst {dimension_numbers = #tpu.dot_dimension_numbers<[1], [0], [0], [1], [0, 0, 1, 1], [], []>} : vector<800x256xbf16>, vector<256x128xbf16>, vector<800x128xf32> -> vector<800x128xf32>
    %c0_3 = arith.constant 0 : index
    %c0_4 = arith.constant 0 : index
    %3 = vector.load %arg3[%c0_3, %c0_4] : memref<1x128xf32, #tpu.memory_space<vmem>>, vector<1x128xf32>
    %4 = vector.broadcast %3 : vector<1x128xf32> to vector<800x128xf32>
    %5 = arith.addf %2, %4 : vector<800x128xf32>
    %cst_5 = arith.constant 0.000000e+00 : f32
    %6 = vector.broadcast %cst_5 : f32 to vector<800x128xf32>
    %7 = arith.maximumf %5, %6 : vector<800x128xf32>
    %8 = arith.truncf %7 : vector<800x128xf32> to vector<800x128xbf16>
    %c0_6 = arith.constant 0 : index
    %c0_7 = arith.constant 0 : index
    %9 = vector.load %arg4[%c0_6, %c0_7] : memref<800x128xbf16, #tpu.memory_space<vmem>>, vector<800x128xbf16>
    tpu.vector_store %arg4[%c0_6, %c0_7], %8 {strides = array<i32>} : memref<800x128xbf16, #tpu.memory_space<vmem>>, vector<800x128xbf16>,
    return
  }
  func.func @transform_0(%arg0: i32) -> (i32, i32) {
    %c0_i32 = arith.constant 0 : i32
    %c0_i32_0 = arith.constant 0 : i32
    return %arg0, %c0_i32 : i32, i32
  }
  func.func @transform_1(%arg0: i32) -> (i32, i32) {
    %c0_i32 = arith.constant 0 : i32
    %c0_i32_0 = arith.constant 0 : i32
    %c0_i32_1 = arith.constant 0 : i32
    return %c0_i32, %c0_i32_0 : i32, i32
  }
  func.func @transform_2(%arg0: i32) -> (i32, i32) {
    %c0_i32 = arith.constant 0 : i32
    %c0_i32_0 = arith.constant 0 : i32
    %c0_i32_1 = arith.constant 0 : i32
    return %c0_i32, %c0_i32_0 : i32, i32
  }
  func.func @transform_3(%arg0: i32) -> (i32, i32) {
    %c0_i32 = arith.constant 0 : i32
    %c0_i32_0 = arith.constant 0 : i32
    return %arg0, %c0_i32 : i32, i32
  }
}

module attributes {stable_mosaic.version = 11 : i64} {
  func.func @_matmul_bias_kernel(%arg0: i32, %arg1: memref<162x256xbf16, #tpu.memory_space<vmem>>, %arg2: memref<256x128xbf16, #tpu.memory_space<vmem>>, %arg3: memref<1x128xf32, #tpu.memory_space<vmem>>, %arg4: memref<162x128xbf16, #tpu.memory_space<vmem>>) attributes {dimension_semantics = [#tpu.dimension_semantics<parallel>], iteration_bounds = array<i64: 1>, scalar_prefetch = 0 : i64, scratch_operands = 0 : i64, tpu.core_type = #tpu.core_type<tc>, window_params = [{transform_indices = @transform_0, window_bounds = array<i64: 162, 256>}, {pipeline_mode = #tpu.pipeline_mode<synchronous>, transform_indices = @transform_1, window_bounds = array<i64: 256, 128>}, {pipeline_mode = #tpu.pipeline_mode<synchronous>, transform_indices = @transform_2, window_bounds = array<i64: 1, 128>}, {transform_indices = @transform_3, window_bounds = array<i64: 162, 128>}]} {
    %c0 = arith.constant 0 : index
    %c0_0 = arith.constant 0 : index
    %0 = vector.load %arg1[%c0, %c0_0] : memref<162x256xbf16, #tpu.memory_space<vmem>>, vector<162x256xbf16>
    %c0_1 = arith.constant 0 : index
    %c0_2 = arith.constant 0 : index
    %1 = vector.load %arg2[%c0_1, %c0_2] : memref<256x128xbf16, #tpu.memory_space<vmem>>, vector<256x128xbf16>
    %cst = arith.constant dense<0.000000e+00> : vector<162x128xf32>
    %2 = tpu.matmul %0, %1, %cst {dimension_numbers = #tpu.dot_dimension_numbers<[1], [0], [0], [1], [0, 0, 1, 1], [], []>} : vector<162x256xbf16>, vector<256x128xbf16>, vector<162x128xf32> -> vector<162x128xf32>
    %c0_3 = arith.constant 0 : index
    %c0_4 = arith.constant 0 : index
    %3 = vector.load %arg3[%c0_3, %c0_4] : memref<1x128xf32, #tpu.memory_space<vmem>>, vector<1x128xf32>
    %4 = vector.broadcast %3 : vector<1x128xf32> to vector<162x128xf32>
    %5 = arith.addf %2, %4 : vector<162x128xf32>
    %cst_5 = arith.constant 0.000000e+00 : f32
    %6 = vector.broadcast %cst_5 : f32 to vector<162x128xf32>
    %7 = arith.maximumf %5, %6 : vector<162x128xf32>
    %8 = arith.truncf %7 : vector<162x128xf32> to vector<162x128xbf16>
    %c0_6 = arith.constant 0 : index
    %c0_7 = arith.constant 0 : index
    %9 = vector.load %arg4[%c0_6, %c0_7] : memref<162x128xbf16, #tpu.memory_space<vmem>>, vector<162x128xbf16>
    tpu.vector_store %arg4[%c0_6, %c0_7], %8 {strides = array<i32>} : memref<162x128xbf16, #tpu.memory_space<vmem>>, vector<162x128xbf16>,
    return
  }
  func.func @transform_0(%arg0: i32) -> (i32, i32) {
    %c0_i32 = arith.constant 0 : i32
    %c0_i32_0 = arith.constant 0 : i32
    return %arg0, %c0_i32 : i32, i32
  }
  func.func @transform_1(%arg0: i32) -> (i32, i32) {
    %c0_i32 = arith.constant 0 : i32
    %c0_i32_0 = arith.constant 0 : i32
    %c0_i32_1 = arith.constant 0 : i32
    return %c0_i32, %c0_i32_0 : i32, i32
  }
  func.func @transform_2(%arg0: i32) -> (i32, i32) {
    %c0_i32 = arith.constant 0 : i32
    %c0_i32_0 = arith.constant 0 : i32
    %c0_i32_1 = arith.constant 0 : i32
    return %c0_i32, %c0_i32_0 : i32, i32
  }
  func.func @transform_3(%arg0: i32) -> (i32, i32) {
    %c0_i32 = arith.constant 0 : i32
    %c0_i32_0 = arith.constant 0 : i32
    return %arg0, %c0_i32 : i32, i32
  }
}

module attributes {stable_mosaic.version = 11 : i64} {
  func.func @_fc_head_kernel(%arg0: i32, %arg1: memref<2x2592xbf16, #tpu.memory_space<vmem>>, %arg2: memref<2592x256xbf16, #tpu.memory_space<vmem>>, %arg3: memref<1x256xf32, #tpu.memory_space<vmem>>, %arg4: memref<256x128xbf16, #tpu.memory_space<vmem>>, %arg5: memref<1x128xf32, #tpu.memory_space<vmem>>, %arg6: memref<2x128xf32, #tpu.memory_space<vmem>>) attributes {dimension_semantics = [#tpu.dimension_semantics<parallel>], iteration_bounds = array<i64: 1>, scalar_prefetch = 0 : i64, scratch_operands = 0 : i64, tpu.core_type = #tpu.core_type<tc>, window_params = [{transform_indices = @transform_0, window_bounds = array<i64: 2, 2592>}, {pipeline_mode = #tpu.pipeline_mode<synchronous>, transform_indices = @transform_1, window_bounds = array<i64: 2592, 256>}, {pipeline_mode = #tpu.pipeline_mode<synchronous>, transform_indices = @transform_2, window_bounds = array<i64: 1, 256>}, {pipeline_mode = #tpu.pipeline_mode<synchronous>, transform_indices = @transform_3, window_bounds = array<i64: 256, 128>}, {pipeline_mode = #tpu.pipeline_mode<synchronous>, transform_indices = @transform_4, window_bounds = array<i64: 1, 128>}, {transform_indices = @transform_5, window_bounds = array<i64: 2, 128>}]} {
    %c0 = arith.constant 0 : index
    %c0_0 = arith.constant 0 : index
    %0 = vector.load %arg1[%c0, %c0_0] : memref<2x2592xbf16, #tpu.memory_space<vmem>>, vector<2x2592xbf16>
    %c0_1 = arith.constant 0 : index
    %c0_2 = arith.constant 0 : index
    %1 = vector.load %arg2[%c0_1, %c0_2] : memref<2592x256xbf16, #tpu.memory_space<vmem>>, vector<2592x256xbf16>
    %cst = arith.constant dense<0.000000e+00> : vector<2x256xf32>
    %2 = tpu.matmul %0, %1, %cst {dimension_numbers = #tpu.dot_dimension_numbers<[1], [0], [0], [1], [0, 0, 1, 1], [], []>} : vector<2x2592xbf16>, vector<2592x256xbf16>, vector<2x256xf32> -> vector<2x256xf32>
    %c0_3 = arith.constant 0 : index
    %c0_4 = arith.constant 0 : index
    %3 = vector.load %arg3[%c0_3, %c0_4] : memref<1x256xf32, #tpu.memory_space<vmem>>, vector<1x256xf32>
    %4 = vector.broadcast %3 : vector<1x256xf32> to vector<2x256xf32>
    %5 = arith.addf %2, %4 : vector<2x256xf32>
    %cst_5 = arith.constant 0.000000e+00 : f32
    %6 = vector.broadcast %cst_5 : f32 to vector<2x256xf32>
    %7 = arith.maximumf %5, %6 : vector<2x256xf32>
    %8 = arith.truncf %7 : vector<2x256xf32> to vector<2x256xbf16>
    %c0_6 = arith.constant 0 : index
    %c0_7 = arith.constant 0 : index
    %9 = vector.load %arg4[%c0_6, %c0_7] : memref<256x128xbf16, #tpu.memory_space<vmem>>, vector<256x128xbf16>
    %cst_8 = arith.constant dense<0.000000e+00> : vector<2x128xf32>
    %10 = tpu.matmul %8, %9, %cst_8 {dimension_numbers = #tpu.dot_dimension_numbers<[1], [0], [0], [1], [0, 0, 1, 1], [], []>} : vector<2x256xbf16>, vector<256x128xbf16>, vector<2x128xf32> -> vector<2x128xf32>
    %c0_9 = arith.constant 0 : index
    %c0_10 = arith.constant 0 : index
    %11 = vector.load %arg5[%c0_9, %c0_10] : memref<1x128xf32, #tpu.memory_space<vmem>>, vector<1x128xf32>
    %12 = vector.broadcast %11 : vector<1x128xf32> to vector<2x128xf32>
    %13 = arith.addf %10, %12 : vector<2x128xf32>
    %c0_11 = arith.constant 0 : index
    %c0_12 = arith.constant 0 : index
    %14 = vector.load %arg6[%c0_11, %c0_12] : memref<2x128xf32, #tpu.memory_space<vmem>>, vector<2x128xf32>
    tpu.vector_store %arg6[%c0_11, %c0_12], %13 {strides = array<i32>} : memref<2x128xf32, #tpu.memory_space<vmem>>, vector<2x128xf32>,
    return
  }
  func.func @transform_0(%arg0: i32) -> (i32, i32) {
    %c0_i32 = arith.constant 0 : i32
    %c0_i32_0 = arith.constant 0 : i32
    return %arg0, %c0_i32 : i32, i32
  }
  func.func @transform_1(%arg0: i32) -> (i32, i32) {
    %c0_i32 = arith.constant 0 : i32
    %c0_i32_0 = arith.constant 0 : i32
    %c0_i32_1 = arith.constant 0 : i32
    return %c0_i32, %c0_i32_0 : i32, i32
  }
  func.func @transform_2(%arg0: i32) -> (i32, i32) {
    %c0_i32 = arith.constant 0 : i32
    %c0_i32_0 = arith.constant 0 : i32
    %c0_i32_1 = arith.constant 0 : i32
    return %c0_i32, %c0_i32_0 : i32, i32
  }
  func.func @transform_3(%arg0: i32) -> (i32, i32) {
    %c0_i32 = arith.constant 0 : i32
    %c0_i32_0 = arith.constant 0 : i32
    %c0_i32_1 = arith.constant 0 : i32
    return %c0_i32, %c0_i32_0 : i32, i32
  }
  func.func @transform_4(%arg0: i32) -> (i32, i32) {
    %c0_i32 = arith.constant 0 : i32
    %c0_i32_0 = arith.constant 0 : i32
    %c0_i32_1 = arith.constant 0 : i32
    return %c0_i32, %c0_i32_0 : i32, i32
  }
  func.func @transform_5(%arg0: i32) -> (i32, i32) {
    %c0_i32 = arith.constant 0 : i32
    %c0_i32_0 = arith.constant 0 : i32
    return %arg0, %c0_i32 : i32, i32
  }
}

</mosaic_0001>

<llo_original>
// kernel: dqn_forward.3
$region0: #{dqn_forward.3}
  #allocation0 [shape = 'u32[]', space=smem, size = 0x4, offset = 0x4, fixed_abs, tag = 'smem constant byte address 0x4 - core index']
  #allocation1 [shape = 'u32[144,128]{1,0:T(1,128)}', space=vmem, size = 0x12000, scoped, tag = 'internal scratch']
  %s0 = inlined_call_operand.vmem [shape: bf16[800,256], index: 0, kind: input, shape index: {}]
  %s1 = inlined_call_operand.vmem [shape: bf16[256,128], index: 1, kind: input, shape index: {}]
  %s2 = inlined_call_operand.vmem [shape: f32[1,128], index: 2, kind: input, shape index: {}]
  %s3 = inlined_call_operand.vmem [shape: bf16[800,128], index: 3, kind: output, shape index: {}]
  %s4 = sld [smem:[#allocation0]]
  $region22: #{dqn_forward.3} parent=0
    _
  %s6 = ssub.s32 1, %s4
  %s7 = scalar_select 0, %s6, %s4
  // Predicated region
  $region2: #{dqn_forward.3} parent=0 // pred_check
    _
  $region3: #{dqn_forward.3} parent=0 // pred_check_branch
    %9 = sbr.rel (0) target = $region5
  $region4: #{dqn_forward.3} parent=0 // pred_region
    _
  $region5: #{dqn_forward.3} parent=0 // pred_fallthru
    _
  // Predicated region
  $region6: #{dqn_forward.3} parent=0 // pred_check
    _
  $region7: #{dqn_forward.3} parent=0 // pred_check_branch
    %11 = sbr.rel (0) target = $region9
  $region8: #{dqn_forward.3} parent=0 // pred_region
    _
  $region9: #{dqn_forward.3} parent=0 // pred_fallthru
    _
  // Predicated region
  $region10: #{dqn_forward.3} parent=0 // pred_check
    _
  $region11: #{dqn_forward.3} parent=0 // pred_check_branch
    %13 = sbr.rel (0) target = $region13
  $region12: #{dqn_forward.3} parent=0 // pred_region
    _
  $region13: #{dqn_forward.3} parent=0 // pred_fallthru
    _
  %v15 = vld [vmem:[%s0] sm:$0xff]
  %v16 = vld [vmem:[%s0 + $0x8] sm:$0xff]
  %v17 = vld [vmem:[%s0 + $0x10] sm:$0xff]
  %v18 = vld [vmem:[%s0 + $0x18] sm:$0xff]
  %v19 = vld [vmem:[%s0 + $0x20] sm:$0xff]
  %v20 = vld [vmem:[%s0 + $0x28] sm:$0xff]
  %v21 = vld [vmem:[%s0 + $0x30] sm:$0xff]
  %v22 = vld [vmem:[%s0 + $0x38] sm:$0xff]
  %v23 = vld [vmem:[%s0 + $0x40] sm:$0xff]
  %v24 = vld [vmem:[%s0 + $0x48] sm:$0xff]
  %v25 = vld [vmem:[%s0 + $0x50] sm:$0xff]
  %v26 = vld [vmem:[%s0 + $0x58] sm:$0xff]
  %v27 = vld [vmem:[%s0 + $0x60] sm:$0xff]
  %v28 = vld [vmem:[%s0 + $0x68] sm:$0xff]
  %v29 = vld [vmem:[%s0 + $0x70] sm:$0xff]
  %v30 = vld [vmem:[%s0 + $0x78] sm:$0xff]
  %v31 = vld [vmem:[%s0 + $0x80] sm:$0xff]
  %v32 = vld [vmem:[%s0 + $0x88] sm:$0xff]
  %v33 = vld [vmem:[%s0 + $0x90] sm:$0xff]
  %v34 = vld [vmem:[%s0 + $0x98] sm:$0xff]
  %v35 = vld [vmem:[%s0 + $0xa0] sm:$0xff]
  %v36 = vld [vmem:[%s0 + $0xa8] sm:$0xff]
  %v37 = vld [vmem:[%s0 + $0xb0] sm:$0xff]
  %v38 = vld [vmem:[%s0 + $0xb8] sm:$0xff]
  %v39 = vld [vmem:[%s0 + $0xc0] sm:$0xff]
  %v40 = vld [vmem:[%s0 + $0xc8] sm:$0xff]
  %v41 = vld [vmem:[%s0 + $0xd0] sm:$0xff]
  %v42 = vld [vmem:[%s0 + $0xd8] sm:$0xff]
  %v43 = vld [vmem:[%s0 + $0xe0] sm:$0xff]
  %v44 = vld [vmem:[%s0 + $0xe8] sm:$0xff]
  %v45 = vld [vmem:[%s0 + $0xf0] sm:$0xff]
  %v46 = vld [vmem:[%s0 + $0xf8] sm:$0xff]
  %v47 = vld [vmem:[%s0 + $0x100] sm:$0xff]
  %v48 = vld [vmem:[%s0 + $0x108] sm:$0xff]
  %v49 = vld [vmem:[%s0 + $0x110] sm:$0xff]
  %v50 = vld [vmem:[%s0 + $0x118] sm:$0xff]
  %v51 = vld [vmem:[%s0 + $0x120] sm:$0xff]
  %v52 = vld [vmem:[%s0 + $0x128] sm:$0xff]
  %v53 = vld [vmem:[%s0 + $0x130] sm:$0xff]
  %v54 = vld [vmem:[%s0 + $0x138] sm:$0xff]
  %v55 = vld [vmem:[%s0 + $0x140] sm:$0xff]
  %v56 = vld [vmem:[%s0 + $0x148] sm:$0xff]
  %v57 = vld [vmem:[%s0 + $0x150] sm:$0xff]
  %v58 = vld [vmem:[%s0 + $0x158] sm:$0xff]
  %v59 = vld [vmem:[%s0 + $0x160] sm:$0xff]
  %v60 = vld [vmem:[%s0 + $0x168] sm:$0xff]
  %v61 = vld [vmem:[%s0 + $0x170] sm:$0xff]
  %v62 = vld [vmem:[%s0 + $0x178] sm:$0xff]
  %v63 = vld [vmem:[%s0 + $0x180] sm:$0xff]
  %v64 = vld [vmem:[%s0 + $0x188] sm:$0xff]
  %v65 = vld [vmem:[%s0 + $0x190] sm:$0xff]
  %v66 = vld [vmem:[%s0 + $0x198] sm:$0xff]
  %v67 = vld [vmem:[%s0 + $0x1a0] sm:$0xff]
  %v68 = vld [vmem:[%s0 + $0x1a8] sm:$0xff]
  %v69 = vld [vmem:[%s0 + $0x1b0] sm:$0xff]
  %v70 = vld [vmem:[%s0 + $0x1b8] sm:$0xff]
  %v71 = vld [vmem:[%s0 + $0x1c0] sm:$0xff]
  %v72 = vld [vmem:[%s0 + $0x1c8] sm:$0xff]
  %v73 = vld [vmem:[%s0 + $0x1d0] sm:$0xff]
  %v74 = vld [vmem:[%s0 + $0x1d8] sm:$0xff]
  %v75 = vld [vmem:[%s0 + $0x1e0] sm:$0xff]
  %v76 = vld [vmem:[%s0 + $0x1e8] sm:$0xff]
  %v77 = vld [vmem:[%s0 + $0x1f0] sm:$0xff]
  %v78 = vld [vmem:[%s0 + $0x1f8] sm:$0xff]
  %v79 = vld [vmem:[%s0 + $0x200] sm:$0xff]
  %v80 = vld [vmem:[%s0 + $0x208] sm:$0xff]
  %v81 = vld [vmem:[%s0 + $0x210] sm:$0xff]
  %v82 = vld [vmem:[%s0 + $0x218] sm:$0xff]
  %v83 = vld [vmem:[%s0 + $0x220] sm:$0xff]
  %v84 = vld [vmem:[%s0 + $0x228] sm:$0xff]
  %v85 = vld [vmem:[%s0 + $0x230] sm:$0xff]
  %v86 = vld [vmem:[%s0 + $0x238] sm:$0xff]
  %v87 = vld [vmem:[%s0 + $0x240] sm:$0xff]
  %v88 = vld [vmem:[%s0 + $0x248] sm:$0xff]
  %v89 = vld [vmem:[%s0 + $0x250] sm:$0xff]
  %v90 = vld [vmem:[%s0 + $0x258] sm:$0xff]
  %v91 = vld [vmem:[%s0 + $0x260] sm:$0xff]
  %v92 = vld [vmem:[%s0 + $0x268] sm:$0xff]
  %v93 = vld [vmem:[%s0 + $0x270] sm:$0xff]
  %v94 = vld [vmem:[%s0 + $0x278] sm:$0xff]
  %v95 = vld [vmem:[%s0 + $0x280] sm:$0xff]
  %v96 = vld [vmem:[%s0 + $0x288] sm:$0xff]
  %v97 = vld [vmem:[%s0 + $0x290] sm:$0xff]
  %v98 = vld [vmem:[%s0 + $0x298] sm:$0xff]
  %v99 = vld [vmem:[%s0 + $0x2a0] sm:$0xff]
  %v100 = vld [vmem:[%s0 + $0x2a8] sm:$0xff]
  %v101 = vld [vmem:[%s0 + $0x2b0] sm:$0xff]
  %v102 = vld [vmem:[%s0 + $0x2b8] sm:$0xff]
  %v103 = vld [vmem:[%s0 + $0x2c0] sm:$0xff]
  %v104 = vld [vmem:[%s0 + $0x2c8] sm:$0xff]
  %v105 = vld [vmem:[%s0 + $0x2d0] sm:$0xff]
  %v106 = vld [vmem:[%s0 + $0x2d8] sm:$0xff]
  %v107 = vld [vmem:[%s0 + $0x2e0] sm:$0xff]
  %v108 = vld [vmem:[%s0 + $0x2e8] sm:$0xff]
  %v109 = vld [vmem:[%s0 + $0x2f0] sm:$0xff]
  %v110 = vld [vmem:[%s0 + $0x2f8] sm:$0xff]
  %v111 = vld [vmem:[%s0 + $0x300] sm:$0xff]
  %v112 = vld [vmem:[%s0 + $0x308] sm:$0xff]
  %v113 = vld [vmem:[%s0 + $0x310] sm:$0xff]
  %v114 = vld [vmem:[%s0 + $0x318] sm:$0xff]
  %v115 = vld [vmem:[%s1] sm:$0xf]
  %v116 = vld [vmem:[%s1 + $0x4] sm:$0xf]
  %v117 = vld [vmem:[%s1 + $0x8] sm:$0xf]
  %v118 = vld [vmem:[%s1 + $0xc] sm:$0xf]
  %v119 = vld [vmem:[%s1 + $0x10] sm:$0xf]
  %v120 = vld [vmem:[%s1 + $0x14] sm:$0xf]
  %v121 = vld [vmem:[%s1 + $0x18] sm:$0xf]
  %v122 = vld [vmem:[%s1 + $0x1c] sm:$0xf]
  %v123 = vld [vmem:[%s1 + $0x20] sm:$0xf]
  %v124 = vld [vmem:[%s1 + $0x24] sm:$0xf]
  %v125 = vld [vmem:[%s1 + $0x28] sm:$0xf]
  %v126 = vld [vmem:[%s1 + $0x2c] sm:$0xf]
  %v127 = vld [vmem:[%s1 + $0x30] sm:$0xf]
  %v128 = vld [vmem:[%s1 + $0x34] sm:$0xf]
  %v129 = vld [vmem:[%s1 + $0x38] sm:$0xf]
  %v130 = vld [vmem:[%s1 + $0x3c] sm:$0xf]
  %v131 = vld [vmem:[%s1 + $0x40] sm:$0xf]
  %v132 = vld [vmem:[%s1 + $0x44] sm:$0xf]
  %v133 = vld [vmem:[%s1 + $0x48] sm:$0xf]
  %v134 = vld [vmem:[%s1 + $0x4c] sm:$0xf]
  %v135 = vld [vmem:[%s1 + $0x50] sm:$0xf]
  %v136 = vld [vmem:[%s1 + $0x54] sm:$0xf]
  %v137 = vld [vmem:[%s1 + $0x58] sm:$0xf]
  %v138 = vld [vmem:[%s1 + $0x5c] sm:$0xf]
  %v139 = vld [vmem:[%s1 + $0x60] sm:$0xf]
  %v140 = vld [vmem:[%s1 + $0x64] sm:$0xf]
  %v141 = vld [vmem:[%s1 + $0x68] sm:$0xf]
  %v142 = vld [vmem:[%s1 + $0x6c] sm:$0xf]
  %v143 = vld [vmem:[%s1 + $0x70] sm:$0xf]
  %v144 = vld [vmem:[%s1 + $0x74] sm:$0xf]
  %v145 = vld [vmem:[%s1 + $0x78] sm:$0xf]
  %v146 = vld [vmem:[%s1 + $0x7c] sm:$0xf]
  %v147 = vld [vmem:[%s2] sm:$0x1]
  %v149 = vlaneseq
  %v150 = vshrl.u32 %v149, 7
  %v151 = vsub.s32 0, %v150
  %v152 = vrot.slane %v147, %v151
  %v254 = vunpack.c.l.b16 %v15
  %v255 = vunpack.c.h.b16 %v15
  %v256 = vunpack.c.l.b16 %v16
  %v257 = vunpack.c.h.b16 %v16
  %v258 = vunpack.c.l.b16 %v17
  %v259 = vunpack.c.h.b16 %v17
  %v260 = vunpack.c.l.b16 %v18
  %v261 = vunpack.c.h.b16 %v18
  %v262 = vunpack.c.l.b16 %v19
  %v263 = vunpack.c.h.b16 %v19
  %v264 = vunpack.c.l.b16 %v20
  %v265 = vunpack.c.h.b16 %v20
  %v266 = vunpack.c.l.b16 %v21
  %v267 = vunpack.c.h.b16 %v21
  %v268 = vunpack.c.l.b16 %v22
  %v269 = vunpack.c.h.b16 %v22
  %v270 = vunpack.c.l.b16 %v23
  %v271 = vunpack.c.h.b16 %v23
  %v272 = vunpack.c.l.b16 %v24
  %v273 = vunpack.c.h.b16 %v24
  %v274 = vunpack.c.l.b16 %v25
  %v275 = vunpack.c.h.b16 %v25
  %v276 = vunpack.c.l.b16 %v26
  %v277 = vunpack.c.h.b16 %v26
  %v278 = vunpack.c.l.b16 %v27
  %v279 = vunpack.c.h.b16 %v27
  %v280 = vunpack.c.l.b16 %v28
  %v281 = vunpack.c.h.b16 %v28
  %v282 = vunpack.c.l.b16 %v29
  %v283 = vunpack.c.h.b16 %v29
  %v284 = vunpack.c.l.b16 %v30
  %v285 = vunpack.c.h.b16 %v30
  %v286 = vunpack.c.l.b16 %v31
  %v287 = vunpack.c.h.b16 %v31
  %v288 = vunpack.c.l.b16 %v32
  %v289 = vunpack.c.h.b16 %v32
  %v290 = vunpack.c.l.b16 %v33
  %v291 = vunpack.c.h.b16 %v33
  %v292 = vunpack.c.l.b16 %v34
  %v293 = vunpack.c.h.b16 %v34
  %v294 = vunpack.c.l.b16 %v35
  %v295 = vunpack.c.h.b16 %v35
  %v296 = vunpack.c.l.b16 %v36
  %v297 = vunpack.c.h.b16 %v36
  %v298 = vunpack.c.l.b16 %v37
  %v299 = vunpack.c.h.b16 %v37
  %v300 = vunpack.c.l.b16 %v38
  %v301 = vunpack.c.h.b16 %v38
  %v302 = vunpack.c.l.b16 %v39
  %v303 = vunpack.c.h.b16 %v39
  %v304 = vunpack.c.l.b16 %v40
  %v305 = vunpack.c.h.b16 %v40
  %v306 = vunpack.c.l.b16 %v41
  %v307 = vunpack.c.h.b16 %v41
  %v308 = vunpack.c.l.b16 %v42
  %v309 = vunpack.c.h.b16 %v42
  %v310 = vunpack.c.l.b16 %v43
  %v311 = vunpack.c.h.b16 %v43
  %v312 = vunpack.c.l.b16 %v44
  %v313 = vunpack.c.h.b16 %v44
  %v314 = vunpack.c.l.b16 %v45
  %v315 = vunpack.c.h.b16 %v45
  %v316 = vunpack.c.l.b16 %v46
  %v317 = vunpack.c.h.b16 %v46
  %v318 = vunpack.c.l.b16 %v47
  %v319 = vunpack.c.h.b16 %v47
  %v320 = vunpack.c.l.b16 %v48
  %v321 = vunpack.c.h.b16 %v48
  %v322 = vunpack.c.l.b16 %v49
  %v323 = vunpack.c.h.b16 %v49
  %v324 = vunpack.c.l.b16 %v50
  %v325 = vunpack.c.h.b16 %v50
  %v326 = vunpack.c.l.b16 %v51
  %v327 = vunpack.c.h.b16 %v51
  %v328 = vunpack.c.l.b16 %v52
  %v329 = vunpack.c.h.b16 %v52
  %v330 = vunpack.c.l.b16 %v53
  %v331 = vunpack.c.h.b16 %v53
  %v332 = vunpack.c.l.b16 %v54
  %v333 = vunpack.c.h.b16 %v54
  %v334 = vunpack.c.l.b16 %v55
  %v335 = vunpack.c.h.b16 %v55
  %v336 = vunpack.c.l.b16 %v56
  %v337 = vunpack.c.h.b16 %v56
  %v338 = vunpack.c.l.b16 %v57
  %v339 = vunpack.c.h.b16 %v57
  %v340 = vunpack.c.l.b16 %v58
  %v341 = vunpack.c.h.b16 %v58
  %v342 = vunpack.c.l.b16 %v59
  %v343 = vunpack.c.h.b16 %v59
  %v344 = vunpack.c.l.b16 %v60
  %v345 = vunpack.c.h.b16 %v60
  %v346 = vunpack.c.l.b16 %v61
  %v347 = vunpack.c.h.b16 %v61
  %v348 = vunpack.c.l.b16 %v62
  %v349 = vunpack.c.h.b16 %v62
  %v350 = vunpack.c.l.b16 %v63
  %v351 = vunpack.c.h.b16 %v63
  %v352 = vunpack.c.l.b16 %v64
  %v353 = vunpack.c.h.b16 %v64
  %v354 = vunpack.c.l.b16 %v65
  %v355 = vunpack.c.h.b16 %v65
  %v356 = vunpack.c.l.b16 %v66
  %v357 = vunpack.c.h.b16 %v66
  %v358 = vunpack.c.l.b16 %v67
  %v359 = vunpack.c.h.b16 %v67
  %v360 = vunpack.c.l.b16 %v68
  %v361 = vunpack.c.h.b16 %v68
  %v362 = vunpack.c.l.b16 %v69
  %v363 = vunpack.c.h.b16 %v69
  %v364 = vunpack.c.l.b16 %v70
  %v365 = vunpack.c.h.b16 %v70
  %v366 = vunpack.c.l.b16 %v71
  %v367 = vunpack.c.h.b16 %v71
  %v368 = vunpack.c.l.b16 %v72
  %v369 = vunpack.c.h.b16 %v72
  %v370 = vunpack.c.l.b16 %v73
  %v371 = vunpack.c.h.b16 %v73
  %v372 = vunpack.c.l.b16 %v74
  %v373 = vunpack.c.h.b16 %v74
  %v374 = vunpack.c.l.b16 %v75
  %v375 = vunpack.c.h.b16 %v75
  %v376 = vunpack.c.l.b16 %v76
  %v377 = vunpack.c.h.b16 %v76
  %v378 = vunpack.c.l.b16 %v77
  %v379 = vunpack.c.h.b16 %v77
  %v380 = vunpack.c.l.b16 %v78
  %v381 = vunpack.c.h.b16 %v78
  %v382 = vunpack.c.l.b16 %v79
  %v383 = vunpack.c.h.b16 %v79
  %v384 = vunpack.c.l.b16 %v80
  %v385 = vunpack.c.h.b16 %v80
  %v386 = vunpack.c.l.b16 %v81
  %v387 = vunpack.c.h.b16 %v81
  %v388 = vunpack.c.l.b16 %v82
  %v389 = vunpack.c.h.b16 %v82
  %v390 = vunpack.c.l.b16 %v83
  %v391 = vunpack.c.h.b16 %v83
  %v392 = vunpack.c.l.b16 %v84
  %v393 = vunpack.c.h.b16 %v84
  %v394 = vunpack.c.l.b16 %v85
  %v395 = vunpack.c.h.b16 %v85
  %v396 = vunpack.c.l.b16 %v86
  %v397 = vunpack.c.h.b16 %v86
  %v398 = vunpack.c.l.b16 %v87
  %v399 = vunpack.c.h.b16 %v87
  %v400 = vunpack.c.l.b16 %v88
  %v401 = vunpack.c.h.b16 %v88
  %v402 = vunpack.c.l.b16 %v89
  %v403 = vunpack.c.h.b16 %v89
  %v404 = vunpack.c.l.b16 %v90
  %v405 = vunpack.c.h.b16 %v90
  %v406 = vunpack.c.l.b16 %v91
  %v407 = vunpack.c.h.b16 %v91
  %v408 = vunpack.c.l.b16 %v92
  %v409 = vunpack.c.h.b16 %v92
  %v410 = vunpack.c.l.b16 %v93
  %v411 = vunpack.c.h.b16 %v93
  %v412 = vunpack.c.l.b16 %v94
  %v413 = vunpack.c.h.b16 %v94
  %v414 = vunpack.c.l.b16 %v95
  %v415 = vunpack.c.h.b16 %v95
  %v416 = vunpack.c.l.b16 %v96
  %v417 = vunpack.c.h.b16 %v96
  %v418 = vunpack.c.l.b16 %v97
  %v419 = vunpack.c.h.b16 %v97
  %v420 = vunpack.c.l.b16 %v98
  %v421 = vunpack.c.h.b16 %v98
  %v422 = vunpack.c.l.b16 %v99
  %v423 = vunpack.c.h.b16 %v99
  %v424 = vunpack.c.l.b16 %v100
  %v425 = vunpack.c.h.b16 %v100
  %v426 = vunpack.c.l.b16 %v101
  %v427 = vunpack.c.h.b16 %v101
  %v428 = vunpack.c.l.b16 %v102
  %v429 = vunpack.c.h.b16 %v102
  %v430 = vunpack.c.l.b16 %v103
  %v431 = vunpack.c.h.b16 %v103
  %v432 = vunpack.c.l.b16 %v104
  %v433 = vunpack.c.h.b16 %v104
  %v434 = vunpack.c.l.b16 %v105
  %v435 = vunpack.c.h.b16 %v105
  %v436 = vunpack.c.l.b16 %v106
  %v437 = vunpack.c.h.b16 %v106
  %v438 = vunpack.c.l.b16 %v107
  %v439 = vunpack.c.h.b16 %v107
  %v440 = vunpack.c.l.b16 %v108
  %v441 = vunpack.c.h.b16 %v108
  %v442 = vunpack.c.l.b16 %v109
  %v443 = vunpack.c.h.b16 %v109
  %v444 = vunpack.c.l.b16 %v110
  %v445 = vunpack.c.h.b16 %v110
  %v446 = vunpack.c.l.b16 %v111
  %v447 = vunpack.c.h.b16 %v111
  %v448 = vunpack.c.l.b16 %v112
  %v449 = vunpack.c.h.b16 %v112
  %v450 = vunpack.c.l.b16 %v113
  %v451 = vunpack.c.h.b16 %v113
  %v452 = vunpack.c.l.b16 %v114
  %v453 = vunpack.c.h.b16 %v114
  %v454 = vpack.c.b16 %v256, %v254
  %v455 = vpack.c.b16 %v257, %v255
  %v456 = vpack.c.b16 %v260, %v258
  %v457 = vpack.c.b16 %v261, %v259
  %v458 = vpack.c.b16 %v264, %v262
  %v459 = vpack.c.b16 %v265, %v263
  %v460 = vpack.c.b16 %v268, %v266
  %v461 = vpack.c.b16 %v269, %v267
  %v462 = vpack.c.b16 %v272, %v270
  %v463 = vpack.c.b16 %v273, %v271
  %v464 = vpack.c.b16 %v276, %v274
  %v465 = vpack.c.b16 %v277, %v275
  %v466 = vpack.c.b16 %v280, %v278
  %v467 = vpack.c.b16 %v281, %v279
  %v468 = vpack.c.b16 %v284, %v282
  %v469 = vpack.c.b16 %v285, %v283
  %v470 = vpack.c.b16 %v288, %v286
  %v471 = vpack.c.b16 %v289, %v287
  %v472 = vpack.c.b16 %v292, %v290
  %v473 = vpack.c.b16 %v293, %v291
  %v474 = vpack.c.b16 %v296, %v294
  %v475 = vpack.c.b16 %v297, %v295
  %v476 = vpack.c.b16 %v300, %v298
  %v477 = vpack.c.b16 %v301, %v299
  %v478 = vpack.c.b16 %v304, %v302
  %v479 = vpack.c.b16 %v305, %v303
  %v480 = vpack.c.b16 %v308, %v306
  %v481 = vpack.c.b16 %v309, %v307
  %v482 = vpack.c.b16 %v312, %v310
  %v483 = vpack.c.b16 %v313, %v311
  %v484 = vpack.c.b16 %v316, %v314
  %v485 = vpack.c.b16 %v317, %v315
  %v486 = vpack.c.b16 %v320, %v318
  %v487 = vpack.c.b16 %v321, %v319
  %v488 = vpack.c.b16 %v324, %v322
  %v489 = vpack.c.b16 %v325, %v323
  %v490 = vpack.c.b16 %v328, %v326
  %v491 = vpack.c.b16 %v329, %v327
  %v492 = vpack.c.b16 %v332, %v330
  %v493 = vpack.c.b16 %v333, %v331
  %v494 = vpack.c.b16 %v336, %v334
  %v495 = vpack.c.b16 %v337, %v335
  %v496 = vpack.c.b16 %v340, %v338
  %v497 = vpack.c.b16 %v341, %v339
  %v498 = vpack.c.b16 %v344, %v342
  %v499 = vpack.c.b16 %v345, %v343
  %v500 = vpack.c.b16 %v348, %v346
  %v501 = vpack.c.b16 %v349, %v347
  %v502 = vpack.c.b16 %v352, %v350
  %v503 = vpack.c.b16 %v353, %v351
  %v504 = vpack.c.b16 %v356, %v354
  %v505 = vpack.c.b16 %v357, %v355
  %v506 = vpack.c.b16 %v360, %v358
  %v507 = vpack.c.b16 %v361, %v359
  %v508 = vpack.c.b16 %v364, %v362
  %v509 = vpack.c.b16 %v365, %v363
  %v510 = vpack.c.b16 %v368, %v366
  %v511 = vpack.c.b16 %v369, %v367
  %v512 = vpack.c.b16 %v372, %v370
  %v513 = vpack.c.b16 %v373, %v371
  %v514 = vpack.c.b16 %v376, %v374
  %v515 = vpack.c.b16 %v377, %v375
  %v516 = vpack.c.b16 %v380, %v378
  %v517 = vpack.c.b16 %v381, %v379
  %v518 = vpack.c.b16 %v384, %v382
  %v519 = vpack.c.b16 %v385, %v383
  %v520 = vpack.c.b16 %v388, %v386
  %v521 = vpack.c.b16 %v389, %v387
  %v522 = vpack.c.b16 %v392, %v390
  %v523 = vpack.c.b16 %v393, %v391
  %v524 = vpack.c.b16 %v396, %v394
  %v525 = vpack.c.b16 %v397, %v395
  %v526 = vpack.c.b16 %v400, %v398
  %v527 = vpack.c.b16 %v401, %v399
  %v528 = vpack.c.b16 %v404, %v402
  %v529 = vpack.c.b16 %v405, %v403
  %v530 = vpack.c.b16 %v408, %v406
  %v531 = vpack.c.b16 %v409, %v407
  %v532 = vpack.c.b16 %v412, %v410
  %v533 = vpack.c.b16 %v413, %v411
  %v534 = vpack.c.b16 %v416, %v414
  %v535 = vpack.c.b16 %v417, %v415
  %v536 = vpack.c.b16 %v420, %v418
  %v537 = vpack.c.b16 %v421, %v419
  %v538 = vpack.c.b16 %v424, %v422
  %v539 = vpack.c.b16 %v425, %v423
  %v540 = vpack.c.b16 %v428, %v426
  %v541 = vpack.c.b16 %v429, %v427
  %v542 = vpack.c.b16 %v432, %v430
  %v543 = vpack.c.b16 %v433, %v431
  %v544 = vpack.c.b16 %v436, %v434
  %v545 = vpack.c.b16 %v437, %v435
  %v546 = vpack.c.b16 %v440, %v438
  %v547 = vpack.c.b16 %v441, %v439
  %v548 = vpack.c.b16 %v444, %v442
  %v549 = vpack.c.b16 %v445, %v443
  %v550 = vpack.c.b16 %v448, %v446
  %v551 = vpack.c.b16 %v449, %v447
  %v552 = vpack.c.b16 %v452, %v450
  %v553 = vpack.c.b16 %v453, %v451
  %v686 = vunpack.c.l.b16 %v115
  %v687 = vunpack.c.l.b16 %v116
  %v688 = vunpack.c.l.b16 %v117
  %v689 = vunpack.c.l.b16 %v118
  %v690 = vunpack.c.l.b16 %v119
  %v691 = vunpack.c.l.b16 %v120
  %v692 = vunpack.c.l.b16 %v121
  %v693 = vunpack.c.l.b16 %v122
  %v694 = vunpack.c.l.b16 %v123
  %v695 = vunpack.c.l.b16 %v124
  %v696 = vunpack.c.l.b16 %v125
  %v697 = vunpack.c.l.b16 %v126
  %v698 = vunpack.c.l.b16 %v127
  %v699 = vunpack.c.l.b16 %v128
  %v700 = vunpack.c.l.b16 %v129
  %v701 = vunpack.c.l.b16 %v130
  %v702 = vunpack.c.l.b16 %v131
  %v703 = vunpack.c.l.b16 %v132
  %v704 = vunpack.c.l.b16 %v133
  %v705 = vunpack.c.l.b16 %v134
  %v706 = vunpack.c.l.b16 %v135
  %v707 = vunpack.c.l.b16 %v136
  %v708 = vunpack.c.l.b16 %v137
  %v709 = vunpack.c.l.b16 %v138
  %v710 = vunpack.c.l.b16 %v139
  %v711 = vunpack.c.l.b16 %v140
  %v712 = vunpack.c.l.b16 %v141
  %v713 = vunpack.c.l.b16 %v142
  %v714 = vunpack.c.l.b16 %v143
  %v715 = vunpack.c.l.b16 %v144
  %v716 = vunpack.c.l.b16 %v145
  %v717 = vunpack.c.l.b16 %v146
  %v718 = vpack.c.b16 %v687, %v686
  %v719 = vpack.c.b16 %v689, %v688
  %v720 = vpack.c.b16 %v691, %v690
  %v721 = vpack.c.b16 %v693, %v692
  %v722 = vpack.c.b16 %v695, %v694
  %v723 = vpack.c.b16 %v697, %v696
  %v724 = vpack.c.b16 %v699, %v698
  %v725 = vpack.c.b16 %v701, %v700
  %v726 = vpack.c.b16 %v703, %v702
  %v727 = vpack.c.b16 %v705, %v704
  %v728 = vpack.c.b16 %v707, %v706
  %v729 = vpack.c.b16 %v709, %v708
  %v730 = vpack.c.b16 %v711, %v710
  %v731 = vpack.c.b16 %v713, %v712
  %v732 = vpack.c.b16 %v715, %v714
  %v733 = vpack.c.b16 %v717, %v716
  %750 = vmatprep.subr.bf16.mxu0 0
  %751 = vmatpush1.bf16.msra.mxu0 %v718
  %752 = vmatprep.subr.bf16.mxu0 0
  %753 = vmatpush1.bf16.msra.mxu0 %v719
  %754 = vmatprep.subr.bf16.mxu0 0
  %755 = vmatpush1.bf16.msra.mxu0 %v720
  %756 = vmatprep.subr.bf16.mxu0 0
  %757 = vmatpush1.bf16.msra.mxu0 %v721
  %758 = vmatprep.subr.bf16.mxu0 0
  %759 = vmatpush1.bf16.msra.mxu0 %v722
  %760 = vmatprep.subr.bf16.mxu0 0
  %761 = vmatpush1.bf16.msra.mxu0 %v723
  %762 = vmatprep.subr.bf16.mxu0 0
  %763 = vmatpush1.bf16.msra.mxu0 %v724
  %764 = vmatprep.subr.bf16.mxu0 0
  %765 = vmatpush1.bf16.msra.mxu0 %v725
  %766 = vmatprep.subr.bf16.mxu0 0
  %767 = vmatpush1.bf16.msra.mxu0 %v726
  %768 = vmatprep.subr.bf16.mxu0 0
  %769 = vmatpush1.bf16.msra.mxu0 %v727
  %770 = vmatprep.subr.bf16.mxu0 0
  %771 = vmatpush1.bf16.msra.mxu0 %v728
  %772 = vmatprep.subr.bf16.mxu0 0
  %773 = vmatpush1.bf16.msra.mxu0 %v729
  %774 = vmatprep.subr.bf16.mxu0 0
  %775 = vmatpush1.bf16.msra.mxu0 %v730
  %776 = vmatprep.subr.bf16.mxu0 0
  %777 = vmatpush1.bf16.msra.mxu0 %v731
  %778 = vmatprep.subr.bf16.mxu0 0
  %779 = vmatpush1.bf16.msra.mxu0 %v732
  %780 = vmatprep.subr.bf16.mxu0 0
  %781 = vmatpush1.bf16.msra.mxu0 %v733
  %782 = vmatprep.mubr.bf16.mxu0 %v455
  %783 = vmatmul.mubr.bf16.gmra.mrb[0].mxu0 %v454
  %v784 = vpop.f32.mrb[0].mxu0
  %v785 = vadd.f32 %v152, %v784
  %v786 = vpop.f32.mrb[0].mxu0
  %v787 = vpop.f32.mrb[0].mxu0
  %v788 = vadd.f32 %v152, %v787
  %v789 = vpop.f32.mrb[0].mxu0
  %790 = vmatprep.mubr.bf16.mxu0 %v457
  %791 = vmatmul.mubr.bf16.gmra.mrb[0].mxu0 %v456
  %v792 = vpop.f32.mrb[0].mxu0
  %v793 = vadd.f32 %v152, %v792
  %v794 = vpop.f32.mrb[0].mxu0
  %v795 = vpop.f32.mrb[0].mxu0
  %v796 = vadd.f32 %v152, %v795
  %v797 = vpop.f32.mrb[0].mxu0
  %798 = vmatprep.mubr.bf16.mxu0 %v459
  %799 = vmatmul.mubr.bf16.gmra.mrb[0].mxu0 %v458
  %v800 = vpop.f32.mrb[0].mxu0
  %v801 = vadd.f32 %v152, %v800
  %v802 = vpop.f32.mrb[0].mxu0
  %v803 = vpop.f32.mrb[0].mxu0
  %v804 = vadd.f32 %v152, %v803
  %v805 = vpop.f32.mrb[0].mxu0
  %806 = vmatprep.mubr.bf16.mxu0 %v461
  %807 = vmatmul.mubr.bf16.gmra.mrb[0].mxu0 %v460
  %v808 = vpop.f32.mrb[0].mxu0
  %v809 = vadd.f32 %v152, %v808
  %v810 = vpop.f32.mrb[0].mxu0
  %v811 = vpop.f32.mrb[0].mxu0
  %v812 = vadd.f32 %v152, %v811
  %v813 = vpop.f32.mrb[0].mxu0
  %814 = vmatprep.mubr.bf16.mxu0 %v463
  %815 = vmatmul.mubr.bf16.gmra.mrb[0].mxu0 %v462
  %v816 = vpop.f32.mrb[0].mxu0
  %v817 = vadd.f32 %v152, %v816
  %v818 = vpop.f32.mrb[0].mxu0
  %v819 = vpop.f32.mrb[0].mxu0
  %v820 = vadd.f32 %v152, %v819
  %v821 = vpop.f32.mrb[0].mxu0
  %822 = vmatprep.mubr.bf16.mxu0 %v465
  %823 = vmatmul.mubr.bf16.gmra.mrb[0].mxu0 %v464
  %v824 = vpop.f32.mrb[0].mxu0
  %v825 = vadd.f32 %v152, %v824
  %v826 = vpop.f32.mrb[0].mxu0
  %v827 = vpop.f32.mrb[0].mxu0
  %v828 = vadd.f32 %v152, %v827
  %v829 = vpop.f32.mrb[0].mxu0
  %830 = vmatprep.mubr.bf16.mxu0 %v467
  %831 = vmatmul.mubr.bf16.gmra.mrb[0].mxu0 %v466
  %v832 = vpop.f32.mrb[0].mxu0
  %v833 = vadd.f32 %v152, %v832
  %v834 = vpop.f32.mrb[0].mxu0
  %v835 = vpop.f32.mrb[0].mxu0
  %v836 = vadd.f32 %v152, %v835
  %v837 = vpop.f32.mrb[0].mxu0
  %838 = vmatprep.mubr.bf16.mxu0 %v469
  %839 = vmatmul.mubr.bf16.gmra.mrb[0].mxu0 %v468
  %v840 = vpop.f32.mrb[0].mxu0
  %v841 = vadd.f32 %v152, %v840
  %v842 = vpop.f32.mrb[0].mxu0
  %v843 = vpop.f32.mrb[0].mxu0
  %v844 = vadd.f32 %v152, %v843
  %v845 = vpop.f32.mrb[0].mxu0
  %846 = vmatprep.mubr.bf16.mxu0 %v471
  %847 = vmatmul.mubr.bf16.gmra.mrb[0].mxu0 %v470
  %v848 = vpop.f32.mrb[0].mxu0
  %v849 = vadd.f32 %v152, %v848
  %v850 = vpop.f32.mrb[0].mxu0
  %v851 = vpop.f32.mrb[0].mxu0
  %v852 = vadd.f32 %v152, %v851
  %v853 = vpop.f32.mrb[0].mxu0
  %854 = vmatprep.mubr.bf16.mxu0 %v473
  %855 = vmatmul.mubr.bf16.gmra.mrb[0].mxu0 %v472
  %v856 = vpop.f32.mrb[0].mxu0
  %v857 = vadd.f32 %v152, %v856
  %v858 = vpop.f32.mrb[0].mxu0
  %v859 = vpop.f32.mrb[0].mxu0
  %v860 = vadd.f32 %v152, %v859
  %v861 = vpop.f32.mrb[0].mxu0
  %862 = vmatprep.mubr.bf16.mxu0 %v475
  %863 = vmatmul.mubr.bf16.gmra.mrb[0].mxu0 %v474
  %v864 = vpop.f32.mrb[0].mxu0
  %v865 = vadd.f32 %v152, %v864
  %v866 = vpop.f32.mrb[0].mxu0
  %v867 = vpop.f32.mrb[0].mxu0
  %v868 = vadd.f32 %v152, %v867
  %v869 = vpop.f32.mrb[0].mxu0
  %870 = vmatprep.mubr.bf16.mxu0 %v477
  %871 = vmatmul.mubr.bf16.gmra.mrb[0].mxu0 %v476
  %v872 = vpop.f32.mrb[0].mxu0
  %v873 = vadd.f32 %v152, %v872
  %v874 = vpop.f32.mrb[0].mxu0
  %v875 = vpop.f32.mrb[0].mxu0
  %v876 = vadd.f32 %v152, %v875
  %v877 = vpop.f32.mrb[0].mxu0
  %878 = vmatprep.mubr.bf16.mxu0 %v479
  %879 = vmatmul.mubr.bf16.gmra.mrb[0].mxu0 %v478
  %v880 = vpop.f32.mrb[0].mxu0
  %v881 = vadd.f32 %v152, %v880
  %v882 = vpop.f32.mrb[0].mxu0
  %v883 = vpop.f32.mrb[0].mxu0
  %v884 = vadd.f32 %v152, %v883
  %v885 = vpop.f32.mrb[0].mxu0
  %886 = vmatprep.mubr.bf16.mxu0 %v481
  %887 = vmatmul.mubr.bf16.gmra.mrb[0].mxu0 %v480
  %v888 = vpop.f32.mrb[0].mxu0
  %v889 = vadd.f32 %v152, %v888
  %v890 = vpop.f32.mrb[0].mxu0
  %v891 = vpop.f32.mrb[0].mxu0
  %v892 = vadd.f32 %v152, %v891
  %v893 = vpop.f32.mrb[0].mxu0
  %894 = vmatprep.mubr.bf16.mxu0 %v483
  %895 = vmatmul.mubr.bf16.gmra.mrb[0].mxu0 %v482
  %v896 = vpop.f32.mrb[0].mxu0
  %v897 = vadd.f32 %v152, %v896
  %v898 = vpop.f32.mrb[0].mxu0
  %v899 = vpop.f32.mrb[0].mxu0
  %v900 = vadd.f32 %v152, %v899
  %v901 = vpop.f32.mrb[0].mxu0
  %902 = vmatprep.mubr.bf16.mxu0 %v485
  %903 = vmatmul.mubr.bf16.gmra.mrb[0].mxu0 %v484
  %v904 = vpop.f32.mrb[0].mxu0
  %v905 = vadd.f32 %v152, %v904
  %v906 = vpop.f32.mrb[0].mxu0
  %v907 = vpop.f32.mrb[0].mxu0
  %v908 = vadd.f32 %v152, %v907
  %v909 = vpop.f32.mrb[0].mxu0
  %910 = vmatprep.mubr.bf16.mxu0 %v487
  %911 = vmatmul.mubr.bf16.gmra.mrb[0].mxu0 %v486
  %v912 = vpop.f32.mrb[0].mxu0
  %v913 = vadd.f32 %v152, %v912
  %v914 = vpop.f32.mrb[0].mxu0
  %v915 = vpop.f32.mrb[0].mxu0
  %v916 = vadd.f32 %v152, %v915
  %v917 = vpop.f32.mrb[0].mxu0
  %918 = vmatprep.mubr.bf16.mxu0 %v489
  %919 = vmatmul.mubr.bf16.gmra.mrb[0].mxu0 %v488
  %v920 = vpop.f32.mrb[0].mxu0
  %v921 = vadd.f32 %v152, %v920
  %v922 = vpop.f32.mrb[0].mxu0
  %v923 = vpop.f32.mrb[0].mxu0
  %v924 = vadd.f32 %v152, %v923
  %v925 = vpop.f32.mrb[0].mxu0
  %926 = vmatprep.mubr.bf16.mxu0 %v491
  %927 = vmatmul.mubr.bf16.gmra.mrb[0].mxu0 %v490
  %v928 = vpop.f32.mrb[0].mxu0
  %v929 = vadd.f32 %v152, %v928
  %v930 = vpop.f32.mrb[0].mxu0
  %v931 = vpop.f32.mrb[0].mxu0
  %v932 = vadd.f32 %v152, %v931
  %v933 = vpop.f32.mrb[0].mxu0
  %934 = vmatprep.mubr.bf16.mxu0 %v493
  %935 = vmatmul.mubr.bf16.gmra.mrb[0].mxu0 %v492
  %v936 = vpop.f32.mrb[0].mxu0
  %v937 = vadd.f32 %v152, %v936
  %v938 = vpop.f32.mrb[0].mxu0
  %v939 = vpop.f32.mrb[0].mxu0
  %v940 = vadd.f32 %v152, %v939
  %v941 = vpop.f32.mrb[0].mxu0
  %942 = vmatprep.mubr.bf16.mxu0 %v495
  %943 = vmatmul.mubr.bf16.gmra.mrb[0].mxu0 %v494
  %v944 = vpop.f32.mrb[0].mxu0
  %v945 = vadd.f32 %v152, %v944
  %v946 = vpop.f32.mrb[0].mxu0
  %v947 = vpop.f32.mrb[0].mxu0
  %v948 = vadd.f32 %v152, %v947
  %v949 = vpop.f32.mrb[0].mxu0
  %950 = vmatprep.mubr.bf16.mxu0 %v497
  %951 = vmatmul.mubr.bf16.gmra.mrb[0].mxu0 %v496
  %v952 = vpop.f32.mrb[0].mxu0
  %v953 = vadd.f32 %v152, %v952
  %v954 = vpop.f32.mrb[0].mxu0
  %v955 = vpop.f32.mrb[0].mxu0
  %v956 = vadd.f32 %v152, %v955
  %v957 = vpop.f32.mrb[0].mxu0
  %958 = vmatprep.mubr.bf16.mxu0 %v499
  %959 = vmatmul.mubr.bf16.gmra.mrb[0].mxu0 %v498
  %v960 = vpop.f32.mrb[0].mxu0
  %v961 = vadd.f32 %v152, %v960
  %v962 = vpop.f32.mrb[0].mxu0
  %v963 = vpop.f32.mrb[0].mxu0
  %v964 = vadd.f32 %v152, %v963
  %v965 = vpop.f32.mrb[0].mxu0
  %966 = vmatprep.mubr.bf16.mxu0 %v501
  %967 = vmatmul.mubr.bf16.gmra.mrb[0].mxu0 %v500
  %v968 = vpop.f32.mrb[0].mxu0
  %v969 = vadd.f32 %v152, %v968
  %v970 = vpop.f32.mrb[0].mxu0
  %v971 = vpop.f32.mrb[0].mxu0
  %v972 = vadd.f32 %v152, %v971
  %v973 = vpop.f32.mrb[0].mxu0
  %974 = vmatprep.mubr.bf16.mxu0 %v503
  %975 = vmatmul.mubr.bf16.gmra.mrb[0].mxu0 %v502
  %v976 = vpop.f32.mrb[0].mxu0
  %v977 = vadd.f32 %v152, %v976
  %v978 = vpop.f32.mrb[0].mxu0
  %v979 = vpop.f32.mrb[0].mxu0
  %v980 = vadd.f32 %v152, %v979
  %v981 = vpop.f32.mrb[0].mxu0
  %982 = vmatprep.mubr.bf16.mxu0 %v505
  %983 = vmatmul.mubr.bf16.gmra.mrb[0].mxu0 %v504
  %v984 = vpop.f32.mrb[0].mxu0
  %v985 = vadd.f32 %v152, %v984
  %v986 = vpop.f32.mrb[0].mxu0
  %v987 = vpop.f32.mrb[0].mxu0
  %v988 = vadd.f32 %v152, %v987
  %v989 = vpop.f32.mrb[0].mxu0
  %990 = vmatprep.mubr.bf16.mxu0 %v507
  %991 = vmatmul.mubr.bf16.gmra.mrb[0].mxu0 %v506
  %v992 = vpop.f32.mrb[0].mxu0
  %v993 = vadd.f32 %v152, %v992
  %v994 = vpop.f32.mrb[0].mxu0
  %v995 = vpop.f32.mrb[0].mxu0
  %v996 = vadd.f32 %v152, %v995
  %v997 = vpop.f32.mrb[0].mxu0
  %998 = vmatprep.mubr.bf16.mxu0 %v509
  %999 = vmatmul.mubr.bf16.gmra.mrb[0].mxu0 %v508
  %v1000 = vpop.f32.mrb[0].mxu0
  %v1001 = vadd.f32 %v152, %v1000
  %v1002 = vpop.f32.mrb[0].mxu0
  %v1003 = vpop.f32.mrb[0].mxu0
  %v1004 = vadd.f32 %v152, %v1003
  %v1005 = vpop.f32.mrb[0].mxu0
  %1006 = vmatprep.mubr.bf16.mxu0 %v511
  %1007 = vmatmul.mubr.bf16.gmra.mrb[0].mxu0 %v510
  %v1008 = vpop.f32.mrb[0].mxu0
  %v1009 = vadd.f32 %v152, %v1008
  %v1010 = vpop.f32.mrb[0].mxu0
  %v1011 = vpop.f32.mrb[0].mxu0
  %v1012 = vadd.f32 %v152, %v1011
  %v1013 = vpop.f32.mrb[0].mxu0
  %1014 = vmatprep.mubr.bf16.mxu0 %v513
  %1015 = vmatmul.mubr.bf16.gmra.mrb[0].mxu0 %v512
  %v1016 = vpop.f32.mrb[0].mxu0
  %v1017 = vadd.f32 %v152, %v1016
  %v1018 = vpop.f32.mrb[0].mxu0
  %v1019 = vpop.f32.mrb[0].mxu0
  %v1020 = vadd.f32 %v152, %v1019
  %v1021 = vpop.f32.mrb[0].mxu0
  %1022 = vmatprep.mubr.bf16.mxu0 %v515
  %1023 = vmatmul.mubr.bf16.gmra.mrb[0].mxu0 %v514
  %v1024 = vpop.f32.mrb[0].mxu0
  %v1025 = vadd.f32 %v152, %v1024
  %v1026 = vpop.f32.mrb[0].mxu0
  %v1027 = vpop.f32.mrb[0].mxu0
  %v1028 = vadd.f32 %v152, %v1027
  %v1029 = vpop.f32.mrb[0].mxu0
  %1030 = vmatprep.mubr.bf16.mxu0 %v517
  %1031 = vmatmul.mubr.bf16.gmra.mrb[0].mxu0 %v516
  %v1032 = vpop.f32.mrb[0].mxu0
  %v1033 = vadd.f32 %v152, %v1032
  %v1034 = vpop.f32.mrb[0].mxu0
  %v1035 = vpop.f32.mrb[0].mxu0
  %v1036 = vadd.f32 %v152, %v1035
  %v1037 = vpop.f32.mrb[0].mxu0
  %1038 = vmatprep.mubr.bf16.mxu0 %v519
  %1039 = vmatmul.mubr.bf16.gmra.mrb[0].mxu0 %v518
  %v1040 = vpop.f32.mrb[0].mxu0
  %v1041 = vadd.f32 %v152, %v1040
  %v1042 = vpop.f32.mrb[0].mxu0
  %v1043 = vpop.f32.mrb[0].mxu0
  %v1044 = vadd.f32 %v152, %v1043
  %v1045 = vpop.f32.mrb[0].mxu0
  %1046 = vmatprep.mubr.bf16.mxu0 %v521
  %1047 = vmatmul.mubr.bf16.gmra.mrb[0].mxu0 %v520
  %v1048 = vpop.f32.mrb[0].mxu0
  %v1049 = vadd.f32 %v152, %v1048
  %v1050 = vpop.f32.mrb[0].mxu0
  %v1051 = vpop.f32.mrb[0].mxu0
  %v1052 = vadd.f32 %v152, %v1051
  %v1053 = vpop.f32.mrb[0].mxu0
  %1054 = vmatprep.mubr.bf16.mxu0 %v523
  %1055 = vmatmul.mubr.bf16.gmra.mrb[0].mxu0 %v522
  %v1056 = vpop.f32.mrb[0].mxu0
  %v1057 = vadd.f32 %v152, %v1056
  %v1058 = vpop.f32.mrb[0].mxu0
  %v1059 = vpop.f32.mrb[0].mxu0
  %v1060 = vadd.f32 %v152, %v1059
  %v1061 = vpop.f32.mrb[0].mxu0
  %1062 = vmatprep.mubr.bf16.mxu0 %v525
  %1063 = vmatmul.mubr.bf16.gmra.mrb[0].mxu0 %v524
  %v1064 = vpop.f32.mrb[0].mxu0
  %v1065 = vadd.f32 %v152, %v1064
  %v1066 = vpop.f32.mrb[0].mxu0
  %v1067 = vpop.f32.mrb[0].mxu0
  %v1068 = vadd.f32 %v152, %v1067
  %v1069 = vpop.f32.mrb[0].mxu0
  %1070 = vmatprep.mubr.bf16.mxu0 %v527
  %1071 = vmatmul.mubr.bf16.gmra.mrb[0].mxu0 %v526
  %v1072 = vpop.f32.mrb[0].mxu0
  %v1073 = vadd.f32 %v152, %v1072
  %v1074 = vpop.f32.mrb[0].mxu0
  %v1075 = vpop.f32.mrb[0].mxu0
  %v1076 = vadd.f32 %v152, %v1075
  %v1077 = vpop.f32.mrb[0].mxu0
  %1078 = vmatprep.mubr.bf16.mxu0 %v529
  %1079 = vmatmul.mubr.bf16.gmra.mrb[0].mxu0 %v528
  %v1080 = vpop.f32.mrb[0].mxu0
  %v1081 = vadd.f32 %v152, %v1080
  %v1082 = vpop.f32.mrb[0].mxu0
  %v1083 = vpop.f32.mrb[0].mxu0
  %v1084 = vadd.f32 %v152, %v1083
  %v1085 = vpop.f32.mrb[0].mxu0
  %1086 = vmatprep.mubr.bf16.mxu0 %v531
  %1087 = vmatmul.mubr.bf16.gmra.mrb[0].mxu0 %v530
  %v1088 = vpop.f32.mrb[0].mxu0
  %v1089 = vadd.f32 %v152, %v1088
  %v1090 = vpop.f32.mrb[0].mxu0
  %v1091 = vpop.f32.mrb[0].mxu0
  %v1092 = vadd.f32 %v152, %v1091
  %v1093 = vpop.f32.mrb[0].mxu0
  %1094 = vmatprep.mubr.bf16.mxu0 %v533
  %1095 = vmatmul.mubr.bf16.gmra.mrb[0].mxu0 %v532
  %v1096 = vpop.f32.mrb[0].mxu0
  %v1097 = vadd.f32 %v152, %v1096
  %v1098 = vpop.f32.mrb[0].mxu0
  %v1099 = vpop.f32.mrb[0].mxu0
  %v1100 = vadd.f32 %v152, %v1099
  %v1101 = vpop.f32.mrb[0].mxu0
  %1102 = vmatprep.mubr.bf16.mxu0 %v535
  %1103 = vmatmul.mubr.bf16.gmra.mrb[0].mxu0 %v534
  %v1104 = vpop.f32.mrb[0].mxu0
  %v1105 = vadd.f32 %v152, %v1104
  %v1106 = vpop.f32.mrb[0].mxu0
  %v1107 = vpop.f32.mrb[0].mxu0
  %v1108 = vadd.f32 %v152, %v1107
  %v1109 = vpop.f32.mrb[0].mxu0
  %1110 = vmatprep.mubr.bf16.mxu0 %v537
  %1111 = vmatmul.mubr.bf16.gmra.mrb[0].mxu0 %v536
  %v1112 = vpop.f32.mrb[0].mxu0
  %v1113 = vadd.f32 %v152, %v1112
  %v1114 = vpop.f32.mrb[0].mxu0
  %v1115 = vpop.f32.mrb[0].mxu0
  %v1116 = vadd.f32 %v152, %v1115
  %v1117 = vpop.f32.mrb[0].mxu0
  %1118 = vmatprep.mubr.bf16.mxu0 %v539
  %1119 = vmatmul.mubr.bf16.gmra.mrb[0].mxu0 %v538
  %v1120 = vpop.f32.mrb[0].mxu0
  %v1121 = vadd.f32 %v152, %v1120
  %v1122 = vpop.f32.mrb[0].mxu0
  %v1123 = vpop.f32.mrb[0].mxu0
  %v1124 = vadd.f32 %v152, %v1123
  %v1125 = vpop.f32.mrb[0].mxu0
  %1126 = vmatprep.mubr.bf16.mxu0 %v541
  %1127 = vmatmul.mubr.bf16.gmra.mrb[0].mxu0 %v540
  %v1128 = vpop.f32.mrb[0].mxu0
  %v1129 = vadd.f32 %v152, %v1128
  %v1130 = vpop.f32.mrb[0].mxu0
  %v1131 = vpop.f32.mrb[0].mxu0
  %v1132 = vadd.f32 %v152, %v1131
  %v1133 = vpop.f32.mrb[0].mxu0
  %1134 = vmatprep.mubr.bf16.mxu0 %v543
  %1135 = vmatmul.mubr.bf16.gmra.mrb[0].mxu0 %v542
  %v1136 = vpop.f32.mrb[0].mxu0
  %v1137 = vadd.f32 %v152, %v1136
  %v1138 = vpop.f32.mrb[0].mxu0
  %v1139 = vpop.f32.mrb[0].mxu0
  %v1140 = vadd.f32 %v152, %v1139
  %v1141 = vpop.f32.mrb[0].mxu0
  %1142 = vmatprep.mubr.bf16.mxu0 %v545
  %1143 = vmatmul.mubr.bf16.gmra.mrb[0].mxu0 %v544
  %v1144 = vpop.f32.mrb[0].mxu0
  %v1145 = vadd.f32 %v152, %v1144
  %v1146 = vpop.f32.mrb[0].mxu0
  %v1147 = vpop.f32.mrb[0].mxu0
  %v1148 = vadd.f32 %v152, %v1147
  %v1149 = vpop.f32.mrb[0].mxu0
  %1150 = vmatprep.mubr.bf16.mxu0 %v547
  %1151 = vmatmul.mubr.bf16.gmra.mrb[0].mxu0 %v546
  %v1152 = vpop.f32.mrb[0].mxu0
  %v1153 = vadd.f32 %v152, %v1152
  %v1154 = vpop.f32.mrb[0].mxu0
  %v1155 = vpop.f32.mrb[0].mxu0
  %v1156 = vadd.f32 %v152, %v1155
  %v1157 = vpop.f32.mrb[0].mxu0
  %1158 = vmatprep.mubr.bf16.mxu0 %v549
  %1159 = vmatmul.mubr.bf16.gmra.mrb[0].mxu0 %v548
  %v1160 = vpop.f32.mrb[0].mxu0
  %v1161 = vadd.f32 %v152, %v1160
  %v1162 = vpop.f32.mrb[0].mxu0
  %v1163 = vpop.f32.mrb[0].mxu0
  %v1164 = vadd.f32 %v152, %v1163
  %v1165 = vpop.f32.mrb[0].mxu0
  %1166 = vmatprep.mubr.bf16.mxu0 %v551
  %1167 = vmatmul.mubr.bf16.gmra.mrb[0].mxu0 %v550
  %v1168 = vpop.f32.mrb[0].mxu0
  %v1169 = vadd.f32 %v152, %v1168
  %v1170 = vpop.f32.mrb[0].mxu0
  %v1171 = vpop.f32.mrb[0].mxu0
  %v1172 = vadd.f32 %v152, %v1171
  %v1173 = vpop.f32.mrb[0].mxu0
  %1174 = vmatprep.mubr.bf16.mxu0 %v553
  %1175 = vmatmul.mubr.bf16.gmra.mrb[0].mxu0 %v552
  %v1176 = vpop.f32.mrb[0].mxu0
  %v1177 = vadd.f32 %v152, %v1176
  %v1178 = vpop.f32.mrb[0].mxu0
  %v1179 = vpop.f32.mrb[0].mxu0
  %v1180 = vadd.f32 %v152, %v1179
  %v1181 = vpop.f32.mrb[0].mxu0
  %1182 = vdwg.mxu0
  %v1183 = vmax.f32 %v785, 0.0
  %v1184 = vmax.f32 %v788, 0.0
  %v1185 = vmax.f32 %v793, 0.0
  %v1186 = vmax.f32 %v796, 0.0
  %v1187 = vmax.f32 %v801, 0.0
  %v1188 = vmax.f32 %v804, 0.0
  %v1189 = vmax.f32 %v809, 0.0
  %v1190 = vmax.f32 %v812, 0.0
  %v1191 = vmax.f32 %v817, 0.0
  %v1192 = vmax.f32 %v820, 0.0
  %v1193 = vmax.f32 %v825, 0.0
  %v1194 = vmax.f32 %v828, 0.0
  %v1195 = vmax.f32 %v833, 0.0
  %v1196 = vmax.f32 %v836, 0.0
  %v1197 = vmax.f32 %v841, 0.0
  %v1198 = vmax.f32 %v844, 0.0
  %v1199 = vmax.f32 %v849, 0.0
  %v1200 = vmax.f32 %v852, 0.0
  %v1201 = vmax.f32 %v857, 0.0
  %v1202 = vmax.f32 %v860, 0.0
  %v1203 = vmax.f32 %v865, 0.0
  %v1204 = vmax.f32 %v868, 0.0
  %v1205 = vmax.f32 %v873, 0.0
  %v1206 = vmax.f32 %v876, 0.0
  %v1207 = vmax.f32 %v881, 0.0
  %v1208 = vmax.f32 %v884, 0.0
  %v1209 = vmax.f32 %v889, 0.0
  %v1210 = vmax.f32 %v892, 0.0
  %v1211 = vmax.f32 %v897, 0.0
  %v1212 = vmax.f32 %v900, 0.0
  %v1213 = vmax.f32 %v905, 0.0
  %v1214 = vmax.f32 %v908, 0.0
  %v1215 = vmax.f32 %v913, 0.0
  %v1216 = vmax.f32 %v916, 0.0
  %v1217 = vmax.f32 %v921, 0.0
  %v1218 = vmax.f32 %v924, 0.0
  %v1219 = vmax.f32 %v929, 0.0
  %v1220 = vmax.f32 %v932, 0.0
  %v1221 = vmax.f32 %v937, 0.0
  %v1222 = vmax.f32 %v940, 0.0
  %v1223 = vmax.f32 %v945, 0.0
  %v1224 = vmax.f32 %v948, 0.0
  %v1225 = vmax.f32 %v953, 0.0
  %v1226 = vmax.f32 %v956, 0.0
  %v1227 = vmax.f32 %v961, 0.0
  %v1228 = vmax.f32 %v964, 0.0
  %v1229 = vmax.f32 %v969, 0.0
  %v1230 = vmax.f32 %v972, 0.0
  %v1231 = vmax.f32 %v977, 0.0
  %v1232 = vmax.f32 %v980, 0.0
  %v1233 = vmax.f32 %v985, 0.0
  %v1234 = vmax.f32 %v988, 0.0
  %v1235 = vmax.f32 %v993, 0.0
  %v1236 = vmax.f32 %v996, 0.0
  %v1237 = vmax.f32 %v1001, 0.0
  %v1238 = vmax.f32 %v1004, 0.0
  %v1239 = vmax.f32 %v1009, 0.0
  %v1240 = vmax.f32 %v1012, 0.0
  %v1241 = vmax.f32 %v1017, 0.0
  %v1242 = vmax.f32 %v1020, 0.0
  %v1243 = vmax.f32 %v1025, 0.0
  %v1244 = vmax.f32 %v1028, 0.0
  %v1245 = vmax.f32 %v1033, 0.0
  %v1246 = vmax.f32 %v1036, 0.0
  %v1247 = vmax.f32 %v1041, 0.0
  %v1248 = vmax.f32 %v1044, 0.0
  %v1249 = vmax.f32 %v1049, 0.0
  %v1250 = vmax.f32 %v1052, 0.0
  %v1251 = vmax.f32 %v1057, 0.0
  %v1252 = vmax.f32 %v1060, 0.0
  %v1253 = vmax.f32 %v1065, 0.0
  %v1254 = vmax.f32 %v1068, 0.0
  %v1255 = vmax.f32 %v1073, 0.0
  %v1256 = vmax.f32 %v1076, 0.0
  %v1257 = vmax.f32 %v1081, 0.0
  %v1258 = vmax.f32 %v1084, 0.0
  %v1259 = vmax.f32 %v1089, 0.0
  %v1260 = vmax.f32 %v1092, 0.0
  %v1261 = vmax.f32 %v1097, 0.0
  %v1262 = vmax.f32 %v1100, 0.0
  %v1263 = vmax.f32 %v1105, 0.0
  %v1264 = vmax.f32 %v1108, 0.0
  %v1265 = vmax.f32 %v1113, 0.0
  %v1266 = vmax.f32 %v1116, 0.0
  %v1267 = vmax.f32 %v1121, 0.0
  %v1268 = vmax.f32 %v1124, 0.0
  %v1269 = vmax.f32 %v1129, 0.0
  %v1270 = vmax.f32 %v1132, 0.0
  %v1271 = vmax.f32 %v1137, 0.0
  %v1272 = vmax.f32 %v1140, 0.0
  %v1273 = vmax.f32 %v1145, 0.0
  %v1274 = vmax.f32 %v1148, 0.0
  %v1275 = vmax.f32 %v1153, 0.0
  %v1276 = vmax.f32 %v1156, 0.0
  %v1277 = vmax.f32 %v1161, 0.0
  %v1278 = vmax.f32 %v1164, 0.0
  %v1279 = vmax.f32 %v1169, 0.0
  %v1280 = vmax.f32 %v1172, 0.0
  %v1281 = vmax.f32 %v1177, 0.0
  %v1282 = vmax.f32 %v1180, 0.0
  %v1283 = vpack.c.bf16 %v1184, %v1183
  %v1284 = vpack.c.bf16 %v1186, %v1185
  %v1285 = vpack.c.bf16 %v1188, %v1187
  %v1286 = vpack.c.bf16 %v1190, %v1189
  %v1287 = vpack.c.bf16 %v1192, %v1191
  %v1288 = vpack.c.bf16 %v1194, %v1193
  %v1289 = vpack.c.bf16 %v1196, %v1195
  %v1290 = vpack.c.bf16 %v1198, %v1197
  %v1291 = vpack.c.bf16 %v1200, %v1199
  %v1292 = vpack.c.bf16 %v1202, %v1201
  %v1293 = vpack.c.bf16 %v1204, %v1203
  %v1294 = vpack.c.bf16 %v1206, %v1205
  %v1295 = vpack.c.bf16 %v1208, %v1207
  %v1296 = vpack.c.bf16 %v1210, %v1209
  %v1297 = vpack.c.bf16 %v1212, %v1211
  %v1298 = vpack.c.bf16 %v1214, %v1213
  %v1299 = vpack.c.bf16 %v1216, %v1215
  %v1300 = vpack.c.bf16 %v1218, %v1217
  %v1301 = vpack.c.bf16 %v1220, %v1219
  %v1302 = vpack.c.bf16 %v1222, %v1221
  %v1303 = vpack.c.bf16 %v1224, %v1223
  %v1304 = vpack.c.bf16 %v1226, %v1225
  %v1305 = vpack.c.bf16 %v1228, %v1227
  %v1306 = vpack.c.bf16 %v1230, %v1229
  %v1307 = vpack.c.bf16 %v1232, %v1231
  %v1308 = vpack.c.bf16 %v1234, %v1233
  %v1309 = vpack.c.bf16 %v1236, %v1235
  %v1310 = vpack.c.bf16 %v1238, %v1237
  %v1311 = vpack.c.bf16 %v1240, %v1239
  %v1312 = vpack.c.bf16 %v1242, %v1241
  %v1313 = vpack.c.bf16 %v1244, %v1243
  %v1314 = vpack.c.bf16 %v1246, %v1245
  %v1315 = vpack.c.bf16 %v1248, %v1247
  %v1316 = vpack.c.bf16 %v1250, %v1249
  %v1317 = vpack.c.bf16 %v1252, %v1251
  %v1318 = vpack.c.bf16 %v1254, %v1253
  %v1319 = vpack.c.bf16 %v1256, %v1255
  %v1320 = vpack.c.bf16 %v1258, %v1257
  %v1321 = vpack.c.bf16 %v1260, %v1259
  %v1322 = vpack.c.bf16 %v1262, %v1261
  %v1323 = vpack.c.bf16 %v1264, %v1263
  %v1324 = vpack.c.bf16 %v1266, %v1265
  %v1325 = vpack.c.bf16 %v1268, %v1267
  %v1326 = vpack.c.bf16 %v1270, %v1269
  %v1327 = vpack.c.bf16 %v1272, %v1271
  %v1328 = vpack.c.bf16 %v1274, %v1273
  %v1329 = vpack.c.bf16 %v1276, %v1275
  %v1330 = vpack.c.bf16 %v1278, %v1277
  %v1331 = vpack.c.bf16 %v1280, %v1279
  %v1332 = vpack.c.bf16 %v1282, %v1281
  %v1383 = vunpack.c.l.b16 %v1283
  %v1384 = vunpack.c.h.b16 %v1283
  %v1385 = vunpack.c.l.b16 %v1284
  %v1386 = vunpack.c.h.b16 %v1284
  %v1387 = vunpack.c.l.b16 %v1285
  %v1388 = vunpack.c.h.b16 %v1285
  %v1389 = vunpack.c.l.b16 %v1286
  %v1390 = vunpack.c.h.b16 %v1286
  %v1391 = vunpack.c.l.b16 %v1287
  %v1392 = vunpack.c.h.b16 %v1287
  %v1393 = vunpack.c.l.b16 %v1288
  %v1394 = vunpack.c.h.b16 %v1288
  %v1395 = vunpack.c.l.b16 %v1289
  %v1396 = vunpack.c.h.b16 %v1289
  %v1397 = vunpack.c.l.b16 %v1290
  %v1398 = vunpack.c.h.b16 %v1290
  %v1399 = vunpack.c.l.b16 %v1291
  %v1400 = vunpack.c.h.b16 %v1291
  %v1401 = vunpack.c.l.b16 %v1292
  %v1402 = vunpack.c.h.b16 %v1292
  %v1403 = vunpack.c.l.b16 %v1293
  %v1404 = vunpack.c.h.b16 %v1293
  %v1405 = vunpack.c.l.b16 %v1294
  %v1406 = vunpack.c.h.b16 %v1294
  %v1407 = vunpack.c.l.b16 %v1295
  %v1408 = vunpack.c.h.b16 %v1295
  %v1409 = vunpack.c.l.b16 %v1296
  %v1410 = vunpack.c.h.b16 %v1296
  %v1411 = vunpack.c.l.b16 %v1297
  %v1412 = vunpack.c.h.b16 %v1297
  %v1413 = vunpack.c.l.b16 %v1298
  %v1414 = vunpack.c.h.b16 %v1298
  %v1415 = vunpack.c.l.b16 %v1299
  %v1416 = vunpack.c.h.b16 %v1299
  %v1417 = vunpack.c.l.b16 %v1300
  %v1418 = vunpack.c.h.b16 %v1300
  %v1419 = vunpack.c.l.b16 %v1301
  %v1420 = vunpack.c.h.b16 %v1301
  %v1421 = vunpack.c.l.b16 %v1302
  %v1422 = vunpack.c.h.b16 %v1302
  %v1423 = vunpack.c.l.b16 %v1303
  %v1424 = vunpack.c.h.b16 %v1303
  %v1425 = vunpack.c.l.b16 %v1304
  %v1426 = vunpack.c.h.b16 %v1304
  %v1427 = vunpack.c.l.b16 %v1305
  %v1428 = vunpack.c.h.b16 %v1305
  %v1429 = vunpack.c.l.b16 %v1306
  %v1430 = vunpack.c.h.b16 %v1306
  %v1431 = vunpack.c.l.b16 %v1307
  %v1432 = vunpack.c.h.b16 %v1307
  %v1433 = vunpack.c.l.b16 %v1308
  %v1434 = vunpack.c.h.b16 %v1308
  %v1435 = vunpack.c.l.b16 %v1309
  %v1436 = vunpack.c.h.b16 %v1309
  %v1437 = vunpack.c.l.b16 %v1310
  %v1438 = vunpack.c.h.b16 %v1310
  %v1439 = vunpack.c.l.b16 %v1311
  %v1440 = vunpack.c.h.b16 %v1311
  %v1441 = vunpack.c.l.b16 %v1312
  %v1442 = vunpack.c.h.b16 %v1312
  %v1443 = vunpack.c.l.b16 %v1313
  %v1444 = vunpack.c.h.b16 %v1313
  %v1445 = vunpack.c.l.b16 %v1314
  %v1446 = vunpack.c.h.b16 %v1314
  %v1447 = vunpack.c.l.b16 %v1315
  %v1448 = vunpack.c.h.b16 %v1315
  %v1449 = vunpack.c.l.b16 %v1316
  %v1450 = vunpack.c.h.b16 %v1316
  %v1451 = vunpack.c.l.b16 %v1317
  %v1452 = vunpack.c.h.b16 %v1317
  %v1453 = vunpack.c.l.b16 %v1318
  %v1454 = vunpack.c.h.b16 %v1318
  %v1455 = vunpack.c.l.b16 %v1319
  %v1456 = vunpack.c.h.b16 %v1319
  %v1457 = vunpack.c.l.b16 %v1320
  %v1458 = vunpack.c.h.b16 %v1320
  %v1459 = vunpack.c.l.b16 %v1321
  %v1460 = vunpack.c.h.b16 %v1321
  %v1461 = vunpack.c.l.b16 %v1322
  %v1462 = vunpack.c.h.b16 %v1322
  %v1463 = vunpack.c.l.b16 %v1323
  %v1464 = vunpack.c.h.b16 %v1323
  %v1465 = vunpack.c.l.b16 %v1324
  %v1466 = vunpack.c.h.b16 %v1324
  %v1467 = vunpack.c.l.b16 %v1325
  %v1468 = vunpack.c.h.b16 %v1325
  %v1469 = vunpack.c.l.b16 %v1326
  %v1470 = vunpack.c.h.b16 %v1326
  %v1471 = vunpack.c.l.b16 %v1327
  %v1472 = vunpack.c.h.b16 %v1327
  %v1473 = vunpack.c.l.b16 %v1328
  %v1474 = vunpack.c.h.b16 %v1328
  %v1475 = vunpack.c.l.b16 %v1329
  %v1476 = vunpack.c.h.b16 %v1329
  %v1477 = vunpack.c.l.b16 %v1330
  %v1478 = vunpack.c.h.b16 %v1330
  %v1479 = vunpack.c.l.b16 %v1331
  %v1480 = vunpack.c.h.b16 %v1331
  %v1481 = vunpack.c.l.b16 %v1332
  %v1482 = vunpack.c.h.b16 %v1332
  %v1483 = vpack.c.b16 %v1383, %v1383
  %v1484 = vpack.c.b16 %v1384, %v1384
  %v1485 = vpack.c.b16 %v1385, %v1385
  %v1486 = vpack.c.b16 %v1386, %v1386
  %v1487 = vpack.c.b16 %v1387, %v1387
  %v1488 = vpack.c.b16 %v1388, %v1388
  %v1489 = vpack.c.b16 %v1389, %v1389
  %v1490 = vpack.c.b16 %v1390, %v1390
  %v1491 = vpack.c.b16 %v1391, %v1391
  %v1492 = vpack.c.b16 %v1392, %v1392
  %v1493 = vpack.c.b16 %v1393, %v1393
  %v1494 = vpack.c.b16 %v1394, %v1394
  %v1495 = vpack.c.b16 %v1395, %v1395
  %v1496 = vpack.c.b16 %v1396, %v1396
  %v1497 = vpack.c.b16 %v1397, %v1397
  %v1498 = vpack.c.b16 %v1398, %v1398
  %v1499 = vpack.c.b16 %v1399, %v1399
  %v1500 = vpack.c.b16 %v1400, %v1400
  %v1501 = vpack.c.b16 %v1401, %v1401
  %v1502 = vpack.c.b16 %v1402, %v1402
  %v1503 = vpack.c.b16 %v1403, %v1403
  %v1504 = vpack.c.b16 %v1404, %v1404
  %v1505 = vpack.c.b16 %v1405, %v1405
  %v1506 = vpack.c.b16 %v1406, %v1406
  %v1507 = vpack.c.b16 %v1407, %v1407
  %v1508 = vpack.c.b16 %v1408, %v1408
  %v1509 = vpack.c.b16 %v1409, %v1409
  %v1510 = vpack.c.b16 %v1410, %v1410
  %v1511 = vpack.c.b16 %v1411, %v1411
  %v1512 = vpack.c.b16 %v1412, %v1412
  %v1513 = vpack.c.b16 %v1413, %v1413
  %v1514 = vpack.c.b16 %v1414, %v1414
  %v1515 = vpack.c.b16 %v1415, %v1415
  %v1516 = vpack.c.b16 %v1416, %v1416
  %v1517 = vpack.c.b16 %v1417, %v1417
  %v1518 = vpack.c.b16 %v1418, %v1418
  %v1519 = vpack.c.b16 %v1419, %v1419
  %v1520 = vpack.c.b16 %v1420, %v1420
  %v1521 = vpack.c.b16 %v1421, %v1421
  %v1522 = vpack.c.b16 %v1422, %v1422
  %v1523 = vpack.c.b16 %v1423, %v1423
  %v1524 = vpack.c.b16 %v1424, %v1424
  %v1525 = vpack.c.b16 %v1425, %v1425
  %v1526 = vpack.c.b16 %v1426, %v1426
  %v1527 = vpack.c.b16 %v1427, %v1427
  %v1528 = vpack.c.b16 %v1428, %v1428
  %v1529 = vpack.c.b16 %v1429, %v1429
  %v1530 = vpack.c.b16 %v1430, %v1430
  %v1531 = vpack.c.b16 %v1431, %v1431
  %v1532 = vpack.c.b16 %v1432, %v1432
  %v1533 = vpack.c.b16 %v1433, %v1433
  %v1534 = vpack.c.b16 %v1434, %v1434
  %v1535 = vpack.c.b16 %v1435, %v1435
  %v1536 = vpack.c.b16 %v1436, %v1436
  %v1537 = vpack.c.b16 %v1437, %v1437
  %v1538 = vpack.c.b16 %v1438, %v1438
  %v1539 = vpack.c.b16 %v1439, %v1439
  %v1540 = vpack.c.b16 %v1440, %v1440
  %v1541 = vpack.c.b16 %v1441, %v1441
  %v1542 = vpack.c.b16 %v1442, %v1442
  %v1543 = vpack.c.b16 %v1443, %v1443
  %v1544 = vpack.c.b16 %v1444, %v1444
  %v1545 = vpack.c.b16 %v1445, %v1445
  %v1546 = vpack.c.b16 %v1446, %v1446
  %v1547 = vpack.c.b16 %v1447, %v1447
  %v1548 = vpack.c.b16 %v1448, %v1448
  %v1549 = vpack.c.b16 %v1449, %v1449
  %v1550 = vpack.c.b16 %v1450, %v1450
  %v1551 = vpack.c.b16 %v1451, %v1451
  %v1552 = vpack.c.b16 %v1452, %v1452
  %v1553 = vpack.c.b16 %v1453, %v1453
  %v1554 = vpack.c.b16 %v1454, %v1454
  %v1555 = vpack.c.b16 %v1455, %v1455
  %v1556 = vpack.c.b16 %v1456, %v1456
  %v1557 = vpack.c.b16 %v1457, %v1457
  %v1558 = vpack.c.b16 %v1458, %v1458
  %v1559 = vpack.c.b16 %v1459, %v1459
  %v1560 = vpack.c.b16 %v1460, %v1460
  %v1561 = vpack.c.b16 %v1461, %v1461
  %v1562 = vpack.c.b16 %v1462, %v1462
  %v1563 = vpack.c.b16 %v1463, %v1463
  %v1564 = vpack.c.b16 %v1464, %v1464
  %v1565 = vpack.c.b16 %v1465, %v1465
  %v1566 = vpack.c.b16 %v1466, %v1466
  %v1567 = vpack.c.b16 %v1467, %v1467
  %v1568 = vpack.c.b16 %v1468, %v1468
  %v1569 = vpack.c.b16 %v1469, %v1469
  %v1570 = vpack.c.b16 %v1470, %v1470
  %v1571 = vpack.c.b16 %v1471, %v1471
  %v1572 = vpack.c.b16 %v1472, %v1472
  %v1573 = vpack.c.b16 %v1473, %v1473
  %v1574 = vpack.c.b16 %v1474, %v1474
  %v1575 = vpack.c.b16 %v1475, %v1475
  %v1576 = vpack.c.b16 %v1476, %v1476
  %v1577 = vpack.c.b16 %v1477, %v1477
  %v1578 = vpack.c.b16 %v1478, %v1478
  %v1579 = vpack.c.b16 %v1479, %v1479
  %v1580 = vpack.c.b16 %v1480, %v1480
  %v1581 = vpack.c.b16 %v1481, %v1481
  %v1582 = vpack.c.b16 %v1482, %v1482
  %1683 = vst [vmem:[%s3] sm:$0xf] %v1483
  %1684 = vst [vmem:[%s3 + $0x4] sm:$0xf] %v1484
  %1685 = vst [vmem:[%s3 + $0x8] sm:$0xf] %v1485
  %1686 = vst [vmem:[%s3 + $0xc] sm:$0xf] %v1486
  %1687 = vst [vmem:[%s3 + $0x10] sm:$0xf] %v1487
  %1688 = vst [vmem:[%s3 + $0x14] sm:$0xf] %v1488
  %1689 = vst [vmem:[%s3 + $0x18] sm:$0xf] %v1489
  %1690 = vst [vmem:[%s3 + $0x1c] sm:$0xf] %v1490
  %1691 = vst [vmem:[%s3 + $0x20] sm:$0xf] %v1491
  %1692 = vst [vmem:[%s3 + $0x24] sm:$0xf] %v1492
  %1693 = vst [vmem:[%s3 + $0x28] sm:$0xf] %v1493
  %1694 = vst [vmem:[%s3 + $0x2c] sm:$0xf] %v1494
  %1695 = vst [vmem:[%s3 + $0x30] sm:$0xf] %v1495
  %1696 = vst [vmem:[%s3 + $0x34] sm:$0xf] %v1496
  %1697 = vst [vmem:[%s3 + $0x38] sm:$0xf] %v1497
  %1698 = vst [vmem:[%s3 + $0x3c] sm:$0xf] %v1498
  %1699 = vst [vmem:[%s3 + $0x40] sm:$0xf] %v1499
  %1700 = vst [vmem:[%s3 + $0x44] sm:$0xf] %v1500
  %1701 = vst [vmem:[%s3 + $0x48] sm:$0xf] %v1501
  %1702 = vst [vmem:[%s3 + $0x4c] sm:$0xf] %v1502
  %1703 = vst [vmem:[%s3 + $0x50] sm:$0xf] %v1503
  %1704 = vst [vmem:[%s3 + $0x54] sm:$0xf] %v1504
  %1705 = vst [vmem:[%s3 + $0x58] sm:$0xf] %v1505
  %1706 = vst [vmem:[%s3 + $0x5c] sm:$0xf] %v1506
  %1707 = vst [vmem:[%s3 + $0x60] sm:$0xf] %v1507
  %1708 = vst [vmem:[%s3 + $0x64] sm:$0xf] %v1508
  %1709 = vst [vmem:[%s3 + $0x68] sm:$0xf] %v1509
  %1710 = vst [vmem:[%s3 + $0x6c] sm:$0xf] %v1510
  %1711 = vst [vmem:[%s3 + $0x70] sm:$0xf] %v1511
  %1712 = vst [vmem:[%s3 + $0x74] sm:$0xf] %v1512
  %1713 = vst [vmem:[%s3 + $0x78] sm:$0xf] %v1513
  %1714 = vst [vmem:[%s3 + $0x7c] sm:$0xf] %v1514
  %1715 = vst [vmem:[%s3 + $0x80] sm:$0xf] %v1515
  %1716 = vst [vmem:[%s3 + $0x84] sm:$0xf] %v1516
  %1717 = vst [vmem:[%s3 + $0x88] sm:$0xf] %v1517
  %1718 = vst [vmem:[%s3 + $0x8c] sm:$0xf] %v1518
  %1719 = vst [vmem:[%s3 + $0x90] sm:$0xf] %v1519
  %1720 = vst [vmem:[%s3 + $0x94] sm:$0xf] %v1520
  %1721 = vst [vmem:[%s3 + $0x98] sm:$0xf] %v1521
  %1722 = vst [vmem:[%s3 + $0x9c] sm:$0xf] %v1522
  %1723 = vst [vmem:[%s3 + $0xa0] sm:$0xf] %v1523
  %1724 = vst [vmem:[%s3 + $0xa4] sm:$0xf] %v1524
  %1725 = vst [vmem:[%s3 + $0xa8] sm:$0xf] %v1525
  %1726 = vst [vmem:[%s3 + $0xac] sm:$0xf] %v1526
  %1727 = vst [vmem:[%s3 + $0xb0] sm:$0xf] %v1527
  %1728 = vst [vmem:[%s3 + $0xb4] sm:$0xf] %v1528
  %1729 = vst [vmem:[%s3 + $0xb8] sm:$0xf] %v1529
  %1730 = vst [vmem:[%s3 + $0xbc] sm:$0xf] %v1530
  %1731 = vst [vmem:[%s3 + $0xc0] sm:$0xf] %v1531
  %1732 = vst [vmem:[%s3 + $0xc4] sm:$0xf] %v1532
  %1733 = vst [vmem:[%s3 + $0xc8] sm:$0xf] %v1533
  %1734 = vst [vmem:[%s3 + $0xcc] sm:$0xf] %v1534
  %1735 = vst [vmem:[%s3 + $0xd0] sm:$0xf] %v1535
  %1736 = vst [vmem:[%s3 + $0xd4] sm:$0xf] %v1536
  %1737 = vst [vmem:[%s3 + $0xd8] sm:$0xf] %v1537
  %1738 = vst [vmem:[%s3 + $0xdc] sm:$0xf] %v1538
  %1739 = vst [vmem:[%s3 + $0xe0] sm:$0xf] %v1539
  %1740 = vst [vmem:[%s3 + $0xe4] sm:$0xf] %v1540
  %1741 = vst [vmem:[%s3 + $0xe8] sm:$0xf] %v1541
  %1742 = vst [vmem:[%s3 + $0xec] sm:$0xf] %v1542
  %1743 = vst [vmem:[%s3 + $0xf0] sm:$0xf] %v1543
  %1744 = vst [vmem:[%s3 + $0xf4] sm:$0xf] %v1544
  %1745 = vst [vmem:[%s3 + $0xf8] sm:$0xf] %v1545
  %1746 = vst [vmem:[%s3 + $0xfc] sm:$0xf] %v1546
  %1747 = vst [vmem:[%s3 + $0x100] sm:$0xf] %v1547
  %1748 = vst [vmem:[%s3 + $0x104] sm:$0xf] %v1548
  %1749 = vst [vmem:[%s3 + $0x108] sm:$0xf] %v1549
  %1750 = vst [vmem:[%s3 + $0x10c] sm:$0xf] %v1550
  %1751 = vst [vmem:[%s3 + $0x110] sm:$0xf] %v1551
  %1752 = vst [vmem:[%s3 + $0x114] sm:$0xf] %v1552
  %1753 = vst [vmem:[%s3 + $0x118] sm:$0xf] %v1553
  %1754 = vst [vmem:[%s3 + $0x11c] sm:$0xf] %v1554
  %1755 = vst [vmem:[%s3 + $0x120] sm:$0xf] %v1555
  %1756 = vst [vmem:[%s3 + $0x124] sm:$0xf] %v1556
  %1757 = vst [vmem:[%s3 + $0x128] sm:$0xf] %v1557
  %1758 = vst [vmem:[%s3 + $0x12c] sm:$0xf] %v1558
  %1759 = vst [vmem:[%s3 + $0x130] sm:$0xf] %v1559
  %1760 = vst [vmem:[%s3 + $0x134] sm:$0xf] %v1560
  %1761 = vst [vmem:[%s3 + $0x138] sm:$0xf] %v1561
  %1762 = vst [vmem:[%s3 + $0x13c] sm:$0xf] %v1562
  %1763 = vst [vmem:[%s3 + $0x140] sm:$0xf] %v1563
  %1764 = vst [vmem:[%s3 + $0x144] sm:$0xf] %v1564
  %1765 = vst [vmem:[%s3 + $0x148] sm:$0xf] %v1565
  %1766 = vst [vmem:[%s3 + $0x14c] sm:$0xf] %v1566
  %1767 = vst [vmem:[%s3 + $0x150] sm:$0xf] %v1567
  %1768 = vst [vmem:[%s3 + $0x154] sm:$0xf] %v1568
  %1769 = vst [vmem:[%s3 + $0x158] sm:$0xf] %v1569
  %1770 = vst [vmem:[%s3 + $0x15c] sm:$0xf] %v1570
  %1771 = vst [vmem:[%s3 + $0x160] sm:$0xf] %v1571
  %1772 = vst [vmem:[%s3 + $0x164] sm:$0xf] %v1572
  %1773 = vst [vmem:[%s3 + $0x168] sm:$0xf] %v1573
  %1774 = vst [vmem:[%s3 + $0x16c] sm:$0xf] %v1574
  %1775 = vst [vmem:[%s3 + $0x170] sm:$0xf] %v1575
  %1776 = vst [vmem:[%s3 + $0x174] sm:$0xf] %v1576
  %1777 = vst [vmem:[%s3 + $0x178] sm:$0xf] %v1577
  %1778 = vst [vmem:[%s3 + $0x17c] sm:$0xf] %v1578
  %1779 = vst [vmem:[%s3 + $0x180] sm:$0xf] %v1579
  %1780 = vst [vmem:[%s3 + $0x184] sm:$0xf] %v1580
  %1781 = vst [vmem:[%s3 + $0x188] sm:$0xf] %v1581
  %1782 = vst [vmem:[%s3 + $0x18c] sm:$0xf] %v1582
  // Predicated region
  $region14: #{dqn_forward.3} parent=0 // pred_check
    _
  $region15: #{dqn_forward.3} parent=0 // pred_check_branch
    %1784 = sbr.rel (0) target = $region17
  $region16: #{dqn_forward.3} parent=0 // pred_region
    _
  $region17: #{dqn_forward.3} parent=0 // pred_fallthru
    _
  // Predicated region
  $region18: #{dqn_forward.3} parent=0 // pred_check
    _
  $region19: #{dqn_forward.3} parent=0 // pred_check_branch
    %1786 = sbr.rel (0) target = $region21
  $region20: #{dqn_forward.3} parent=0 // pred_region
    _
  $region21: #{dqn_forward.3} parent=0 // pred_fallthru
    _

// kernel: dqn_forward.4
$region0: #{dqn_forward.4}
  #allocation0 [shape = 'u32[]', space=smem, size = 0x4, offset = 0x4, fixed_abs, tag = 'smem constant byte address 0x4 - core index']
  #allocation1 [shape = 'u32[144,128]{1,0:T(1,128)}', space=vmem, size = 0x12000, scoped, tag = 'internal scratch']
  %s0 = inlined_call_operand.vmem [shape: bf16[162,256], index: 0, kind: input, shape index: {}]
  %s1 = inlined_call_operand.vmem [shape: bf16[256,128], index: 1, kind: input, shape index: {}]
  %s2 = inlined_call_operand.vmem [shape: f32[1,128], index: 2, kind: input, shape index: {}]
  %s3 = inlined_call_operand.vmem [shape: bf16[162,128], index: 3, kind: output, shape index: {}]
  %s4 = sld [smem:[#allocation0]]
  $region22: #{dqn_forward.4} parent=0
    _
  %s6 = ssub.s32 1, %s4
  %s7 = scalar_select 0, %s6, %s4
  // Predicated region
  $region2: #{dqn_forward.4} parent=0 // pred_check
    _
  $region3: #{dqn_forward.4} parent=0 // pred_check_branch
    %9 = sbr.rel (0) target = $region5
  $region4: #{dqn_forward.4} parent=0 // pred_region
    _
  $region5: #{dqn_forward.4} parent=0 // pred_fallthru
    _
  // Predicated region
  $region6: #{dqn_forward.4} parent=0 // pred_check
    _
  $region7: #{dqn_forward.4} parent=0 // pred_check_branch
    %11 = sbr.rel (0) target = $region9
  $region8: #{dqn_forward.4} parent=0 // pred_region
    _
  $region9: #{dqn_forward.4} parent=0 // pred_fallthru
    _
  // Predicated region
  $region10: #{dqn_forward.4} parent=0 // pred_check
    _
  $region11: #{dqn_forward.4} parent=0 // pred_check_branch
    %13 = sbr.rel (0) target = $region13
  $region12: #{dqn_forward.4} parent=0 // pred_region
    _
  $region13: #{dqn_forward.4} parent=0 // pred_fallthru
    _
  %v15 = vld [vmem:[%s0] sm:$0xff]
  %v16 = vld [vmem:[%s0 + $0x8] sm:$0xff]
  %v17 = vld [vmem:[%s0 + $0x10] sm:$0xff]
  %v18 = vld [vmem:[%s0 + $0x18] sm:$0xff]
  %v19 = vld [vmem:[%s0 + $0x20] sm:$0xff]
  %v20 = vld [vmem:[%s0 + $0x28] sm:$0xff]
  %v21 = vld [vmem:[%s0 + $0x30] sm:$0xff]
  %v22 = vld [vmem:[%s0 + $0x38] sm:$0xff]
  %v23 = vld [vmem:[%s0 + $0x40] sm:$0xff]
  %v24 = vld [vmem:[%s0 + $0x48] sm:$0xff]
  %v25 = vld [vmem:[%s0 + $0x50] sm:$0xff]
  %v26 = vld [vmem:[%s0 + $0x58] sm:$0xff]
  %v27 = vld [vmem:[%s0 + $0x60] sm:$0xff]
  %v28 = vld [vmem:[%s0 + $0x68] sm:$0xff]
  %v29 = vld [vmem:[%s0 + $0x70] sm:$0xff]
  %v30 = vld [vmem:[%s0 + $0x78] sm:$0xff]
  %v31 = vld [vmem:[%s0 + $0x80] sm:$0xff]
  %v32 = vld [vmem:[%s0 + $0x88] sm:$0xff]
  %v33 = vld [vmem:[%s0 + $0x90] sm:$0xff]
  %v34 = vld [vmem:[%s0 + $0x98] sm:$0xff]
  %v35 = vld [vmem:[%s0 + $0xa0] sm:$0x11]
  %v36 = vld [vmem:[%s1] sm:$0xf]
  %v37 = vld [vmem:[%s1 + $0x4] sm:$0xf]
  %v38 = vld [vmem:[%s1 + $0x8] sm:$0xf]
  %v39 = vld [vmem:[%s1 + $0xc] sm:$0xf]
  %v40 = vld [vmem:[%s1 + $0x10] sm:$0xf]
  %v41 = vld [vmem:[%s1 + $0x14] sm:$0xf]
  %v42 = vld [vmem:[%s1 + $0x18] sm:$0xf]
  %v43 = vld [vmem:[%s1 + $0x1c] sm:$0xf]
  %v44 = vld [vmem:[%s1 + $0x20] sm:$0xf]
  %v45 = vld [vmem:[%s1 + $0x24] sm:$0xf]
  %v46 = vld [vmem:[%s1 + $0x28] sm:$0xf]
  %v47 = vld [vmem:[%s1 + $0x2c] sm:$0xf]
  %v48 = vld [vmem:[%s1 + $0x30] sm:$0xf]
  %v49 = vld [vmem:[%s1 + $0x34] sm:$0xf]
  %v50 = vld [vmem:[%s1 + $0x38] sm:$0xf]
  %v51 = vld [vmem:[%s1 + $0x3c] sm:$0xf]
  %v52 = vld [vmem:[%s1 + $0x40] sm:$0xf]
  %v53 = vld [vmem:[%s1 + $0x44] sm:$0xf]
  %v54 = vld [vmem:[%s1 + $0x48] sm:$0xf]
  %v55 = vld [vmem:[%s1 + $0x4c] sm:$0xf]
  %v56 = vld [vmem:[%s1 + $0x50] sm:$0xf]
  %v57 = vld [vmem:[%s1 + $0x54] sm:$0xf]
  %v58 = vld [vmem:[%s1 + $0x58] sm:$0xf]
  %v59 = vld [vmem:[%s1 + $0x5c] sm:$0xf]
  %v60 = vld [vmem:[%s1 + $0x60] sm:$0xf]
  %v61 = vld [vmem:[%s1 + $0x64] sm:$0xf]
  %v62 = vld [vmem:[%s1 + $0x68] sm:$0xf]
  %v63 = vld [vmem:[%s1 + $0x6c] sm:$0xf]
  %v64 = vld [vmem:[%s1 + $0x70] sm:$0xf]
  %v65 = vld [vmem:[%s1 + $0x74] sm:$0xf]
  %v66 = vld [vmem:[%s1 + $0x78] sm:$0xf]
  %v67 = vld [vmem:[%s1 + $0x7c] sm:$0xf]
  %v68 = vld [vmem:[%s2] sm:$0x1]
  %v70 = vlaneseq
  %v71 = vshrl.u32 %v70, 7
  %v72 = vsub.s32 0, %v71
  %v73 = vrot.slane %v68, %v72
  %v96 = vunpack.c.l.b16 %v15
  %v97 = vunpack.c.h.b16 %v15
  %v98 = vunpack.c.l.b16 %v16
  %v99 = vunpack.c.h.b16 %v16
  %v100 = vunpack.c.l.b16 %v17
  %v101 = vunpack.c.h.b16 %v17
  %v102 = vunpack.c.l.b16 %v18
  %v103 = vunpack.c.h.b16 %v18
  %v104 = vunpack.c.l.b16 %v19
  %v105 = vunpack.c.h.b16 %v19
  %v106 = vunpack.c.l.b16 %v20
  %v107 = vunpack.c.h.b16 %v20
  %v108 = vunpack.c.l.b16 %v21
  %v109 = vunpack.c.h.b16 %v21
  %v110 = vunpack.c.l.b16 %v22
  %v111 = vunpack.c.h.b16 %v22
  %v112 = vunpack.c.l.b16 %v23
  %v113 = vunpack.c.h.b16 %v23
  %v114 = vunpack.c.l.b16 %v24
  %v115 = vunpack.c.h.b16 %v24
  %v116 = vunpack.c.l.b16 %v25
  %v117 = vunpack.c.h.b16 %v25
  %v118 = vunpack.c.l.b16 %v26
  %v119 = vunpack.c.h.b16 %v26
  %v120 = vunpack.c.l.b16 %v27
  %v121 = vunpack.c.h.b16 %v27
  %v122 = vunpack.c.l.b16 %v28
  %v123 = vunpack.c.h.b16 %v28
  %v124 = vunpack.c.l.b16 %v29
  %v125 = vunpack.c.h.b16 %v29
  %v126 = vunpack.c.l.b16 %v30
  %v127 = vunpack.c.h.b16 %v30
  %v128 = vunpack.c.l.b16 %v31
  %v129 = vunpack.c.h.b16 %v31
  %v130 = vunpack.c.l.b16 %v32
  %v131 = vunpack.c.h.b16 %v32
  %v132 = vunpack.c.l.b16 %v33
  %v133 = vunpack.c.h.b16 %v33
  %v134 = vunpack.c.l.b16 %v34
  %v135 = vunpack.c.h.b16 %v34
  %v136 = vunpack.c.l.b16 %v35
  %v137 = vunpack.c.h.b16 %v35
  %v138 = vpack.c.b16 %v98, %v96
  %v139 = vpack.c.b16 %v99, %v97
  %v140 = vpack.c.b16 %v102, %v100
  %v141 = vpack.c.b16 %v103, %v101
  %v142 = vpack.c.b16 %v106, %v104
  %v143 = vpack.c.b16 %v107, %v105
  %v144 = vpack.c.b16 %v110, %v108
  %v145 = vpack.c.b16 %v111, %v109
  %v146 = vpack.c.b16 %v114, %v112
  %v147 = vpack.c.b16 %v115, %v113
  %v148 = vpack.c.b16 %v118, %v116
  %v149 = vpack.c.b16 %v119, %v117
  %v150 = vpack.c.b16 %v122, %v120
  %v151 = vpack.c.b16 %v123, %v121
  %v152 = vpack.c.b16 %v126, %v124
  %v153 = vpack.c.b16 %v127, %v125
  %v154 = vpack.c.b16 %v130, %v128
  %v155 = vpack.c.b16 %v131, %v129
  %v156 = vpack.c.b16 %v134, %v132
  %v157 = vpack.c.b16 %v135, %v133
  %v158 = vpack.c.b16 %v136, %v136
  %v159 = vpack.c.b16 %v137, %v137
  %v214 = vunpack.c.l.b16 %v36
  %v215 = vunpack.c.l.b16 %v37
  %v216 = vunpack.c.l.b16 %v38
  %v217 = vunpack.c.l.b16 %v39
  %v218 = vunpack.c.l.b16 %v40
  %v219 = vunpack.c.l.b16 %v41
  %v220 = vunpack.c.l.b16 %v42
  %v221 = vunpack.c.l.b16 %v43
  %v222 = vunpack.c.l.b16 %v44
  %v223 = vunpack.c.l.b16 %v45
  %v224 = vunpack.c.l.b16 %v46
  %v225 = vunpack.c.l.b16 %v47
  %v226 = vunpack.c.l.b16 %v48
  %v227 = vunpack.c.l.b16 %v49
  %v228 = vunpack.c.l.b16 %v50
  %v229 = vunpack.c.l.b16 %v51
  %v230 = vunpack.c.l.b16 %v52
  %v231 = vunpack.c.l.b16 %v53
  %v232 = vunpack.c.l.b16 %v54
  %v233 = vunpack.c.l.b16 %v55
  %v234 = vunpack.c.l.b16 %v56
  %v235 = vunpack.c.l.b16 %v57
  %v236 = vunpack.c.l.b16 %v58
  %v237 = vunpack.c.l.b16 %v59
  %v238 = vunpack.c.l.b16 %v60
  %v239 = vunpack.c.l.b16 %v61
  %v240 = vunpack.c.l.b16 %v62
  %v241 = vunpack.c.l.b16 %v63
  %v242 = vunpack.c.l.b16 %v64
  %v243 = vunpack.c.l.b16 %v65
  %v244 = vunpack.c.l.b16 %v66
  %v245 = vunpack.c.l.b16 %v67
  %v246 = vpack.c.b16 %v215, %v214
  %v247 = vpack.c.b16 %v217, %v216
  %v248 = vpack.c.b16 %v219, %v218
  %v249 = vpack.c.b16 %v221, %v220
  %v250 = vpack.c.b16 %v223, %v222
  %v251 = vpack.c.b16 %v225, %v224
  %v252 = vpack.c.b16 %v227, %v226
  %v253 = vpack.c.b16 %v229, %v228
  %v254 = vpack.c.b16 %v231, %v230
  %v255 = vpack.c.b16 %v233, %v232
  %v256 = vpack.c.b16 %v235, %v234
  %v257 = vpack.c.b16 %v237, %v236
  %v258 = vpack.c.b16 %v239, %v238
  %v259 = vpack.c.b16 %v241, %v240
  %v260 = vpack.c.b16 %v243, %v242
  %v261 = vpack.c.b16 %v245, %v244
  %278 = vmatprep.subr.bf16.mxu0 0
  %279 = vmatpush1.bf16.msra.mxu0 %v246
  %280 = vmatprep.subr.bf16.mxu0 0
  %281 = vmatpush1.bf16.msra.mxu0 %v247
  %282 = vmatprep.subr.bf16.mxu0 0
  %283 = vmatpush1.bf16.msra.mxu0 %v248
  %284 = vmatprep.subr.bf16.mxu0 0
  %285 = vmatpush1.bf16.msra.mxu0 %v249
  %286 = vmatprep.subr.bf16.mxu0 0
  %287 = vmatpush1.bf16.msra.mxu0 %v250
  %288 = vmatprep.subr.bf16.mxu0 0
  %289 = vmatpush1.bf16.msra.mxu0 %v251
  %290 = vmatprep.subr.bf16.mxu0 0
  %291 = vmatpush1.bf16.msra.mxu0 %v252
  %292 = vmatprep.subr.bf16.mxu0 0
  %293 = vmatpush1.bf16.msra.mxu0 %v253
  %294 = vmatprep.subr.bf16.mxu0 0
  %295 = vmatpush1.bf16.msra.mxu0 %v254
  %296 = vmatprep.subr.bf16.mxu0 0
  %297 = vmatpush1.bf16.msra.mxu0 %v255
  %298 = vmatprep.subr.bf16.mxu0 0
  %299 = vmatpush1.bf16.msra.mxu0 %v256
  %300 = vmatprep.subr.bf16.mxu0 0
  %301 = vmatpush1.bf16.msra.mxu0 %v257
  %302 = vmatprep.subr.bf16.mxu0 0
  %303 = vmatpush1.bf16.msra.mxu0 %v258
  %304 = vmatprep.subr.bf16.mxu0 0
  %305 = vmatpush1.bf16.msra.mxu0 %v259
  %306 = vmatprep.subr.bf16.mxu0 0
  %307 = vmatpush1.bf16.msra.mxu0 %v260
  %308 = vmatprep.subr.bf16.mxu0 0
  %309 = vmatpush1.bf16.msra.mxu0 %v261
  %310 = vmatprep.mubr.bf16.mxu0 %v139
  %311 = vmatmul.mubr.bf16.gmra.mrb[0].mxu0 %v138
  %v312 = vpop.f32.mrb[0].mxu0
  %v313 = vadd.f32 %v73, %v312
  %v314 = vpop.f32.mrb[0].mxu0
  %v315 = vpop.f32.mrb[0].mxu0
  %v316 = vadd.f32 %v73, %v315
  %v317 = vpop.f32.mrb[0].mxu0
  %318 = vmatprep.mubr.bf16.mxu0 %v141
  %319 = vmatmul.mubr.bf16.gmra.mrb[0].mxu0 %v140
  %v320 = vpop.f32.mrb[0].mxu0
  %v321 = vadd.f32 %v73, %v320
  %v322 = vpop.f32.mrb[0].mxu0
  %v323 = vpop.f32.mrb[0].mxu0
  %v324 = vadd.f32 %v73, %v323
  %v325 = vpop.f32.mrb[0].mxu0
  %326 = vmatprep.mubr.bf16.mxu0 %v143
  %327 = vmatmul.mubr.bf16.gmra.mrb[0].mxu0 %v142
  %v328 = vpop.f32.mrb[0].mxu0
  %v329 = vadd.f32 %v73, %v328
  %v330 = vpop.f32.mrb[0].mxu0
  %v331 = vpop.f32.mrb[0].mxu0
  %v332 = vadd.f32 %v73, %v331
  %v333 = vpop.f32.mrb[0].mxu0
  %334 = vmatprep.mubr.bf16.mxu0 %v145
  %335 = vmatmul.mubr.bf16.gmra.mrb[0].mxu0 %v144
  %v336 = vpop.f32.mrb[0].mxu0
  %v337 = vadd.f32 %v73, %v336
  %v338 = vpop.f32.mrb[0].mxu0
  %v339 = vpop.f32.mrb[0].mxu0
  %v340 = vadd.f32 %v73, %v339
  %v341 = vpop.f32.mrb[0].mxu0
  %342 = vmatprep.mubr.bf16.mxu0 %v147
  %343 = vmatmul.mubr.bf16.gmra.mrb[0].mxu0 %v146
  %v344 = vpop.f32.mrb[0].mxu0
  %v345 = vadd.f32 %v73, %v344
  %v346 = vpop.f32.mrb[0].mxu0
  %v347 = vpop.f32.mrb[0].mxu0
  %v348 = vadd.f32 %v73, %v347
  %v349 = vpop.f32.mrb[0].mxu0
  %350 = vmatprep.mubr.bf16.mxu0 %v149
  %351 = vmatmul.mubr.bf16.gmra.mrb[0].mxu0 %v148
  %v352 = vpop.f32.mrb[0].mxu0
  %v353 = vadd.f32 %v73, %v352
  %v354 = vpop.f32.mrb[0].mxu0
  %v355 = vpop.f32.mrb[0].mxu0
  %v356 = vadd.f32 %v73, %v355
  %v357 = vpop.f32.mrb[0].mxu0
  %358 = vmatprep.mubr.bf16.mxu0 %v151
  %359 = vmatmul.mubr.bf16.gmra.mrb[0].mxu0 %v150
  %v360 = vpop.f32.mrb[0].mxu0
  %v361 = vadd.f32 %v73, %v360
  %v362 = vpop.f32.mrb[0].mxu0
  %v363 = vpop.f32.mrb[0].mxu0
  %v364 = vadd.f32 %v73, %v363
  %v365 = vpop.f32.mrb[0].mxu0
  %366 = vmatprep.mubr.bf16.mxu0 %v153
  %367 = vmatmul.mubr.bf16.gmra.mrb[0].mxu0 %v152
  %v368 = vpop.f32.mrb[0].mxu0
  %v369 = vadd.f32 %v73, %v368
  %v370 = vpop.f32.mrb[0].mxu0
  %v371 = vpop.f32.mrb[0].mxu0
  %v372 = vadd.f32 %v73, %v371
  %v373 = vpop.f32.mrb[0].mxu0
  %374 = vmatprep.mubr.bf16.mxu0 %v155
  %375 = vmatmul.mubr.bf16.gmra.mrb[0].mxu0 %v154
  %v376 = vpop.f32.mrb[0].mxu0
  %v377 = vadd.f32 %v73, %v376
  %v378 = vpop.f32.mrb[0].mxu0
  %v379 = vpop.f32.mrb[0].mxu0
  %v380 = vadd.f32 %v73, %v379
  %v381 = vpop.f32.mrb[0].mxu0
  %382 = vmatprep.mubr.bf16.mxu0 %v157
  %383 = vmatmul.mubr.bf16.gmra.mrb[0].mxu0 %v156
  %v384 = vpop.f32.mrb[0].mxu0
  %v385 = vadd.f32 %v73, %v384
  %v386 = vpop.f32.mrb[0].mxu0
  %v387 = vpop.f32.mrb[0].mxu0
  %v388 = vadd.f32 %v73, %v387
  %v389 = vpop.f32.mrb[0].mxu0
  %390 = vmatprep.mubr.bf16.mxu0 %v159
  %391 = vmatmul.mubr.bf16.gmra.mrb[0].mxu0 %v158
  %v392 = vpop.f32.mrb[0].mxu0
  %v393 = vadd.f32 %v73, %v392
  %v394 = vpop.f32.mrb[0].mxu0
  %v395 = vpop.f32.mrb[0].mxu0
  %v396 = vpop.f32.mrb[0].mxu0
  %397 = vdwg.mxu0
  %v398 = vmax.f32 %v313, 0.0
  %v399 = vmax.f32 %v316, 0.0
  %v400 = vmax.f32 %v321, 0.0
  %v401 = vmax.f32 %v324, 0.0
  %v402 = vmax.f32 %v329, 0.0
  %v403 = vmax.f32 %v332, 0.0
  %v404 = vmax.f32 %v337, 0.0
  %v405 = vmax.f32 %v340, 0.0
  %v406 = vmax.f32 %v345, 0.0
  %v407 = vmax.f32 %v348, 0.0
  %v408 = vmax.f32 %v353, 0.0
  %v409 = vmax.f32 %v356, 0.0
  %v410 = vmax.f32 %v361, 0.0
  %v411 = vmax.f32 %v364, 0.0
  %v412 = vmax.f32 %v369, 0.0
  %v413 = vmax.f32 %v372, 0.0
  %v414 = vmax.f32 %v377, 0.0
  %v415 = vmax.f32 %v380, 0.0
  %v416 = vmax.f32 %v385, 0.0
  %v417 = vmax.f32 %v388, 0.0
  %v418 = vmax.f32 %v393, 0.0
  %v419 = vpack.c.bf16 %v399, %v398
  %v420 = vpack.c.bf16 %v401, %v400
  %v421 = vpack.c.bf16 %v403, %v402
  %v422 = vpack.c.bf16 %v405, %v404
  %v423 = vpack.c.bf16 %v407, %v406
  %v424 = vpack.c.bf16 %v409, %v408
  %v425 = vpack.c.bf16 %v411, %v410
  %v426 = vpack.c.bf16 %v413, %v412
  %v427 = vpack.c.bf16 %v415, %v414
  %v428 = vpack.c.bf16 %v417, %v416
  %v429 = vpack.c.bf16 %v418, %v418
  %v441 = vunpack.c.l.b16 %v419
  %v442 = vunpack.c.h.b16 %v419
  %v443 = vunpack.c.l.b16 %v420
  %v444 = vunpack.c.h.b16 %v420
  %v445 = vunpack.c.l.b16 %v421
  %v446 = vunpack.c.h.b16 %v421
  %v447 = vunpack.c.l.b16 %v422
  %v448 = vunpack.c.h.b16 %v422
  %v449 = vunpack.c.l.b16 %v423
  %v450 = vunpack.c.h.b16 %v423
  %v451 = vunpack.c.l.b16 %v424
  %v452 = vunpack.c.h.b16 %v424
  %v453 = vunpack.c.l.b16 %v425
  %v454 = vunpack.c.h.b16 %v425
  %v455 = vunpack.c.l.b16 %v426
  %v456 = vunpack.c.h.b16 %v426
  %v457 = vunpack.c.l.b16 %v427
  %v458 = vunpack.c.h.b16 %v427
  %v459 = vunpack.c.l.b16 %v428
  %v460 = vunpack.c.h.b16 %v428
  %v461 = vunpack.c.l.b16 %v429
  %v462 = vpack.c.b16 %v441, %v441
  %v463 = vpack.c.b16 %v442, %v442
  %v464 = vpack.c.b16 %v443, %v443
  %v465 = vpack.c.b16 %v444, %v444
  %v466 = vpack.c.b16 %v445, %v445
  %v467 = vpack.c.b16 %v446, %v446
  %v468 = vpack.c.b16 %v447, %v447
  %v469 = vpack.c.b16 %v448, %v448
  %v470 = vpack.c.b16 %v449, %v449
  %v471 = vpack.c.b16 %v450, %v450
  %v472 = vpack.c.b16 %v451, %v451
  %v473 = vpack.c.b16 %v452, %v452
  %v474 = vpack.c.b16 %v453, %v453
  %v475 = vpack.c.b16 %v454, %v454
  %v476 = vpack.c.b16 %v455, %v455
  %v477 = vpack.c.b16 %v456, %v456
  %v478 = vpack.c.b16 %v457, %v457
  %v479 = vpack.c.b16 %v458, %v458
  %v480 = vpack.c.b16 %v459, %v459
  %v481 = vpack.c.b16 %v460, %v460
  %v482 = vpack.c.b16 %v461, %v461
  %504 = vst [vmem:[%s3] sm:$0xf] %v462
  %505 = vst [vmem:[%s3 + $0x4] sm:$0xf] %v463
  %506 = vst [vmem:[%s3 + $0x8] sm:$0xf] %v464
  %507 = vst [vmem:[%s3 + $0xc] sm:$0xf] %v465
  %508 = vst [vmem:[%s3 + $0x10] sm:$0xf] %v466
  %509 = vst [vmem:[%s3 + $0x14] sm:$0xf] %v467
  %510 = vst [vmem:[%s3 + $0x18] sm:$0xf] %v468
  %511 = vst [vmem:[%s3 + $0x1c] sm:$0xf] %v469
  %512 = vst [vmem:[%s3 + $0x20] sm:$0xf] %v470
  %513 = vst [vmem:[%s3 + $0x24] sm:$0xf] %v471
  %514 = vst [vmem:[%s3 + $0x28] sm:$0xf] %v472
  %515 = vst [vmem:[%s3 + $0x2c] sm:$0xf] %v473
  %516 = vst [vmem:[%s3 + $0x30] sm:$0xf] %v474
  %517 = vst [vmem:[%s3 + $0x34] sm:$0xf] %v475
  %518 = vst [vmem:[%s3 + $0x38] sm:$0xf] %v476
  %519 = vst [vmem:[%s3 + $0x3c] sm:$0xf] %v477
  %520 = vst [vmem:[%s3 + $0x40] sm:$0xf] %v478
  %521 = vst [vmem:[%s3 + $0x44] sm:$0xf] %v479
  %522 = vst [vmem:[%s3 + $0x48] sm:$0xf] %v480
  %523 = vst [vmem:[%s3 + $0x4c] sm:$0xf] %v481
  %524 = vst [vmem:[%s3 + $0x50] sm:$0x1] %v482
  // Predicated region
  $region14: #{dqn_forward.4} parent=0 // pred_check
    _
  $region15: #{dqn_forward.4} parent=0 // pred_check_branch
    %526 = sbr.rel (0) target = $region17
  $region16: #{dqn_forward.4} parent=0 // pred_region
    _
  $region17: #{dqn_forward.4} parent=0 // pred_fallthru
    _
  // Predicated region
  $region18: #{dqn_forward.4} parent=0 // pred_check
    _
  $region19: #{dqn_forward.4} parent=0 // pred_check_branch
    %528 = sbr.rel (0) target = $region21
  $region20: #{dqn_forward.4} parent=0 // pred_region
    _
  $region21: #{dqn_forward.4} parent=0 // pred_fallthru
    _

// kernel: dqn_forward.5
$region0: #{dqn_forward.5}
  #allocation0 [shape = 'u32[]', space=smem, size = 0x4, offset = 0x4, fixed_abs, tag = 'smem constant byte address 0x4 - core index']
  #allocation1 [shape = 'u32[144,128]{1,0:T(1,128)}', space=vmem, size = 0x12000, scoped, tag = 'internal scratch']
  %s0 = inlined_call_operand.vmem [shape: bf16[2,2592], index: 0, kind: input, shape index: {}]
  %s1 = inlined_call_operand.vmem [shape: bf16[2592,256], index: 1, kind: input, shape index: {}]
  %s2 = inlined_call_operand.vmem [shape: f32[1,256], index: 2, kind: input, shape index: {}]
  %s3 = inlined_call_operand.vmem [shape: bf16[256,128], index: 3, kind: input, shape index: {}]
  %s4 = inlined_call_operand.vmem [shape: f32[1,128], index: 4, kind: input, shape index: {}]
  %s5 = inlined_call_operand.hbm [shape: f32[2,128], index: 5, kind: output, shape index: {}]
  %s6 = sld [smem:[#allocation0]]
  $region30: #{dqn_forward.5} parent=0
    _
  %s8 = ssub.s32 1, %s6
  %s9 = scalar_select 0, %s8, %s6
  $region1: #{dqn_forward.5} parent=0
    #allocation2 [shape = 'u8[1024]{0}', space=vmem, size = 0x400, scoped, tag = 'output window, operand 0, single buffered']
    #allocation3 [shape = 's32[1]{0}', space=sflag, size = 0x4, scoped, tag = 'scoped memory for dqn_forward.5']
    %10 = vsyncpa [#allocation3], 0
    // Predicated region
    $region2: #{dqn_forward.5} parent=1 // pred_check
      _
    $region3: #{dqn_forward.5} parent=1 // pred_check_branch
      %12 = sbr.rel (0) target = $region5
    $region4: #{dqn_forward.5} parent=1 // pred_region
      _
    $region5: #{dqn_forward.5} parent=1 // pred_fallthru
      _
    // Predicated region
    $region6: #{dqn_forward.5} parent=1 // pred_check
      _
    $region7: #{dqn_forward.5} parent=1 // pred_check_branch
      %14 = sbr.rel (0) target = $region9
    $region8: #{dqn_forward.5} parent=1 // pred_region
      _
    $region9: #{dqn_forward.5} parent=1 // pred_fallthru
      _
    // Predicated region
    $region10: #{dqn_forward.5} parent=1 // pred_check
      _
    $region11: #{dqn_forward.5} parent=1 // pred_check_branch
      %16 = sbr.rel (0) target = $region13
    $region12: #{dqn_forward.5} parent=1 // pred_region
      _
    $region13: #{dqn_forward.5} parent=1 // pred_fallthru
      _
    // Predicated region
    $region14: #{dqn_forward.5} parent=1 // pred_check
      _
    $region15: #{dqn_forward.5} parent=1 // pred_check_branch
      %18 = sbr.rel (0) target = $region17
    $region16: #{dqn_forward.5} parent=1 // pred_region
      _
    $region17: #{dqn_forward.5} parent=1 // pred_fallthru
      _
    // Predicated region
    $region18: #{dqn_forward.5} parent=1 // pred_check
      _
    $region19: #{dqn_forward.5} parent=1 // pred_check_branch
      %20 = sbr.rel (0) target = $region21
    $region20: #{dqn_forward.5} parent=1 // pred_region
      _
    $region21: #{dqn_forward.5} parent=1 // pred_fallthru
      _
    %v22 = vld [vmem:[%s0] sm:$0xff]
    %v23 = vld [vmem:[%s0 + $0x8] sm:$0xff]
    %v24 = vld [vmem:[%s0 + $0x10] sm:$0x1f]
    %v25 = vld [vmem:[%s1] sm:$0xff]
    %v26 = vld [vmem:[%s1 + $0x8] sm:$0xff]
    %v27 = vld [vmem:[%s1 + $0x10] sm:$0xff]
    %v28 = vld [vmem:[%s1 + $0x18] sm:$0xff]
    %v29 = vld [vmem:[%s1 + $0x20] sm:$0xff]
    %v30 = vld [vmem:[%s1 + $0x28] sm:$0xff]
    %v31 = vld [vmem:[%s1 + $0x30] sm:$0xff]
    %v32 = vld [vmem:[%s1 + $0x38] sm:$0xff]
    %v33 = vld [vmem:[%s1 + $0x40] sm:$0xff]
    %v34 = vld [vmem:[%s1 + $0x48] sm:$0xff]
    %v35 = vld [vmem:[%s1 + $0x50] sm:$0xff]
    %v36 = vld [vmem:[%s1 + $0x58] sm:$0xff]
    %v37 = vld [vmem:[%s1 + $0x60] sm:$0xff]
    %v38 = vld [vmem:[%s1 + $0x68] sm:$0xff]
    %v39 = vld [vmem:[%s1 + $0x70] sm:$0xff]
    %v40 = vld [vmem:[%s1 + $0x78] sm:$0xff]
    %v41 = vld [vmem:[%s1 + $0x80] sm:$0xff]
    %v42 = vld [vmem:[%s1 + $0x88] sm:$0xff]
    %v43 = vld [vmem:[%s1 + $0x90] sm:$0xff]
    %v44 = vld [vmem:[%s1 + $0x98] sm:$0xff]
    %v45 = vld [vmem:[%s1 + $0xa0] sm:$0xff]
    %v46 = vld [vmem:[%s1 + $0xa8] sm:$0xff]
    %v47 = vld [vmem:[%s1 + $0xb0] sm:$0xff]
    %v48 = vld [vmem:[%s1 + $0xb8] sm:$0xff]
    %v49 = vld [vmem:[%s1 + $0xc0] sm:$0xff]
    %v50 = vld [vmem:[%s1 + $0xc8] sm:$0xff]
    %v51 = vld [vmem:[%s1 + $0xd0] sm:$0xff]
    %v52 = vld [vmem:[%s1 + $0xd8] sm:$0xff]
    %v53 = vld [vmem:[%s1 + $0xe0] sm:$0xff]
    %v54 = vld [vmem:[%s1 + $0xe8] sm:$0xff]
    %v55 = vld [vmem:[%s1 + $0xf0] sm:$0xff]
    %v56 = vld [vmem:[%s1 + $0xf8] sm:$0xff]
    %v57 = vld [vmem:[%s1 + $0x100] sm:$0xff]
    %v58 = vld [vmem:[%s1 + $0x108] sm:$0xff]
    %v59 = vld [vmem:[%s1 + $0x110] sm:$0xff]
    %v60 = vld [vmem:[%s1 + $0x118] sm:$0xff]
    %v61 = vld [vmem:[%s1 + $0x120] sm:$0xff]
    %v62 = vld [vmem:[%s1 + $0x128] sm:$0xff]
    %v63 = vld [vmem:[%s1 + $0x130] sm:$0xff]
    %v64 = vld [vmem:[%s1 + $0x138] sm:$0xff]
    %v65 = vld [vmem:[%s1 + $0x140] sm:$0xff]
    %v66 = vld [vmem:[%s1 + $0x148] sm:$0xff]
    %v67 = vld [vmem:[%s1 + $0x150] sm:$0xff]
    %v68 = vld [vmem:[%s1 + $0x158] sm:$0xff]
    %v69 = vld [vmem:[%s1 + $0x160] sm:$0xff]
    %v70 = vld [vmem:[%s1 + $0x168] sm:$0xff]
    %v71 = vld [vmem:[%s1 + $0x170] sm:$0xff]
    %v72 = vld [vmem:[%s1 + $0x178] sm:$0xff]
    %v73 = vld [vmem:[%s1 + $0x180] sm:$0xff]
    %v74 = vld [vmem:[%s1 + $0x188] sm:$0xff]
    %v75 = vld [vmem:[%s1 + $0x190] sm:$0xff]
    %v76 = vld [vmem:[%s1 + $0x198] sm:$0xff]
    %v77 = vld [vmem:[%s1 + $0x1a0] sm:$0xff]
    %v78 = vld [vmem:[%s1 + $0x1a8] sm:$0xff]
    %v79 = vld [vmem:[%s1 + $0x1b0] sm:$0xff]
    %v80 = vld [vmem:[%s1 + $0x1b8] sm:$0xff]
    %v81 = vld [vmem:[%s1 + $0x1c0] sm:$0xff]
    %v82 = vld [vmem:[%s1 + $0x1c8] sm:$0xff]
    %v83 = vld [vmem:[%s1 + $0x1d0] sm:$0xff]
    %v84 = vld [vmem:[%s1 + $0x1d8] sm:$0xff]
    %v85 = vld [vmem:[%s1 + $0x1e0] sm:$0xff]
    %v86 = vld [vmem:[%s1 + $0x1e8] sm:$0xff]
    %v87 = vld [vmem:[%s1 + $0x1f0] sm:$0xff]
    %v88 = vld [vmem:[%s1 + $0x1f8] sm:$0xff]
    %v89 = vld [vmem:[%s1 + $0x200] sm:$0xff]
    %v90 = vld [vmem:[%s1 + $0x208] sm:$0xff]
    %v91 = vld [vmem:[%s1 + $0x210] sm:$0xff]
    %v92 = vld [vmem:[%s1 + $0x218] sm:$0xff]
    %v93 = vld [vmem:[%s1 + $0x220] sm:$0xff]
    %v94 = vld [vmem:[%s1 + $0x228] sm:$0xff]
    %v95 = vld [vmem:[%s1 + $0x230] sm:$0xff]
    %v96 = vld [vmem:[%s1 + $0x238] sm:$0xff]
    %v97 = vld [vmem:[%s1 + $0x240] sm:$0xff]
    %v98 = vld [vmem:[%s1 + $0x248] sm:$0xff]
    %v99 = vld [vmem:[%s1 + $0x250] sm:$0xff]
    %v100 = vld [vmem:[%s1 + $0x258] sm:$0xff]
    %v101 = vld [vmem:[%s1 + $0x260] sm:$0xff]
    %v102 = vld [vmem:[%s1 + $0x268] sm:$0xff]
    %v103 = vld [vmem:[%s1 + $0x270] sm:$0xff]
    %v104 = vld [vmem:[%s1 + $0x278] sm:$0xff]
    %v105 = vld [vmem:[%s1 + $0x280] sm:$0xff]
    %v106 = vld [vmem:[%s1 + $0x288] sm:$0xff]
    %v107 = vld [vmem:[%s1 + $0x290] sm:$0xff]
    %v108 = vld [vmem:[%s1 + $0x298] sm:$0xff]
    %v109 = vld [vmem:[%s1 + $0x2a0] sm:$0xff]
    %v110 = vld [vmem:[%s1 + $0x2a8] sm:$0xff]
    %v111 = vld [vmem:[%s1 + $0x2b0] sm:$0xff]
    %v112 = vld [vmem:[%s1 + $0x2b8] sm:$0xff]
    %v113 = vld [vmem:[%s1 + $0x2c0] sm:$0xff]
    %v114 = vld [vmem:[%s1 + $0x2c8] sm:$0xff]
    %v115 = vld [vmem:[%s1 + $0x2d0] sm:$0xff]
    %v116 = vld [vmem:[%s1 + $0x2d8] sm:$0xff]
    %v117 = vld [vmem:[%s1 + $0x2e0] sm:$0xff]
    %v118 = vld [vmem:[%s1 + $0x2e8] sm:$0xff]
    %v119 = vld [vmem:[%s1 + $0x2f0] sm:$0xff]
    %v120 = vld [vmem:[%s1 + $0x2f8] sm:$0xff]
    %v121 = vld [vmem:[%s1 + $0x300] sm:$0xff]
    %v122 = vld [vmem:[%s1 + $0x308] sm:$0xff]
    %v123 = vld [vmem:[%s1 + $0x310] sm:$0xff]
    %v124 = vld [vmem:[%s1 + $0x318] sm:$0xff]
    %v125 = vld [vmem:[%s1 + $0x320] sm:$0xff]
    %v126 = vld [vmem:[%s1 + $0x328] sm:$0xff]
    %v127 = vld [vmem:[%s1 + $0x330] sm:$0xff]
    %v128 = vld [vmem:[%s1 + $0x338] sm:$0xff]
    %v129 = vld [vmem:[%s1 + $0x340] sm:$0xff]
    %v130 = vld [vmem:[%s1 + $0x348] sm:$0xff]
    %v131 = vld [vmem:[%s1 + $0x350] sm:$0xff]
    %v132 = vld [vmem:[%s1 + $0x358] sm:$0xff]
    %v133 = vld [vmem:[%s1 + $0x360] sm:$0xff]
    %v134 = vld [vmem:[%s1 + $0x368] sm:$0xff]
    %v135 = vld [vmem:[%s1 + $0x370] sm:$0xff]
    %v136 = vld [vmem:[%s1 + $0x378] sm:$0xff]
    %v137 = vld [vmem:[%s1 + $0x380] sm:$0xff]
    %v138 = vld [vmem:[%s1 + $0x388] sm:$0xff]
    %v139 = vld [vmem:[%s1 + $0x390] sm:$0xff]
    %v140 = vld [vmem:[%s1 + $0x398] sm:$0xff]
    %v141 = vld [vmem:[%s1 + $0x3a0] sm:$0xff]
    %v142 = vld [vmem:[%s1 + $0x3a8] sm:$0xff]
    %v143 = vld [vmem:[%s1 + $0x3b0] sm:$0xff]
    %v144 = vld [vmem:[%s1 + $0x3b8] sm:$0xff]
    %v145 = vld [vmem:[%s1 + $0x3c0] sm:$0xff]
    %v146 = vld [vmem:[%s1 + $0x3c8] sm:$0xff]
    %v147 = vld [vmem:[%s1 + $0x3d0] sm:$0xff]
    %v148 = vld [vmem:[%s1 + $0x3d8] sm:$0xff]
    %v149 = vld [vmem:[%s1 + $0x3e0] sm:$0xff]
    %v150 = vld [vmem:[%s1 + $0x3e8] sm:$0xff]
    %v151 = vld [vmem:[%s1 + $0x3f0] sm:$0xff]
    %v152 = vld [vmem:[%s1 + $0x3f8] sm:$0xff]
    %v153 = vld [vmem:[%s1 + $0x400] sm:$0xff]
    %v154 = vld [vmem:[%s1 + $0x408] sm:$0xff]
    %v155 = vld [vmem:[%s1 + $0x410] sm:$0xff]
    %v156 = vld [vmem:[%s1 + $0x418] sm:$0xff]
    %v157 = vld [vmem:[%s1 + $0x420] sm:$0xff]
    %v158 = vld [vmem:[%s1 + $0x428] sm:$0xff]
    %v159 = vld [vmem:[%s1 + $0x430] sm:$0xff]
    %v160 = vld [vmem:[%s1 + $0x438] sm:$0xff]
    %v161 = vld [vmem:[%s1 + $0x440] sm:$0xff]
    %v162 = vld [vmem:[%s1 + $0x448] sm:$0xff]
    %v163 = vld [vmem:[%s1 + $0x450] sm:$0xff]
    %v164 = vld [vmem:[%s1 + $0x458] sm:$0xff]
    %v165 = vld [vmem:[%s1 + $0x460] sm:$0xff]
    %v166 = vld [vmem:[%s1 + $0x468] sm:$0xff]
    %v167 = vld [vmem:[%s1 + $0x470] sm:$0xff]
    %v168 = vld [vmem:[%s1 + $0x478] sm:$0xff]
    %v169 = vld [vmem:[%s1 + $0x480] sm:$0xff]
    %v170 = vld [vmem:[%s1 + $0x488] sm:$0xff]
    %v171 = vld [vmem:[%s1 + $0x490] sm:$0xff]
    %v172 = vld [vmem:[%s1 + $0x498] sm:$0xff]
    %v173 = vld [vmem:[%s1 + $0x4a0] sm:$0xff]
    %v174 = vld [vmem:[%s1 + $0x4a8] sm:$0xff]
    %v175 = vld [vmem:[%s1 + $0x4b0] sm:$0xff]
    %v176 = vld [vmem:[%s1 + $0x4b8] sm:$0xff]
    %v177 = vld [vmem:[%s1 + $0x4c0] sm:$0xff]
    %v178 = vld [vmem:[%s1 + $0x4c8] sm:$0xff]
    %v179 = vld [vmem:[%s1 + $0x4d0] sm:$0xff]
    %v180 = vld [vmem:[%s1 + $0x4d8] sm:$0xff]
    %v181 = vld [vmem:[%s1 + $0x4e0] sm:$0xff]
    %v182 = vld [vmem:[%s1 + $0x4e8] sm:$0xff]
    %v183 = vld [vmem:[%s1 + $0x4f0] sm:$0xff]
    %v184 = vld [vmem:[%s1 + $0x4f8] sm:$0xff]
    %v185 = vld [vmem:[%s1 + $0x500] sm:$0xff]
    %v186 = vld [vmem:[%s1 + $0x508] sm:$0xff]
    %v187 = vld [vmem:[%s1 + $0x510] sm:$0xff]
    %v188 = vld [vmem:[%s1 + $0x518] sm:$0xff]
    %v189 = vld [vmem:[%s1 + $0x520] sm:$0xff]
    %v190 = vld [vmem:[%s1 + $0x528] sm:$0xff]
    %v191 = vld [vmem:[%s1 + $0x530] sm:$0xff]
    %v192 = vld [vmem:[%s1 + $0x538] sm:$0xff]
    %v193 = vld [vmem:[%s1 + $0x540] sm:$0xff]
    %v194 = vld [vmem:[%s1 + $0x548] sm:$0xff]
    %v195 = vld [vmem:[%s1 + $0x550] sm:$0xff]
    %v196 = vld [vmem:[%s1 + $0x558] sm:$0xff]
    %v197 = vld [vmem:[%s1 + $0x560] sm:$0xff]
    %v198 = vld [vmem:[%s1 + $0x568] sm:$0xff]
    %v199 = vld [vmem:[%s1 + $0x570] sm:$0xff]
    %v200 = vld [vmem:[%s1 + $0x578] sm:$0xff]
    %v201 = vld [vmem:[%s1 + $0x580] sm:$0xff]
    %v202 = vld [vmem:[%s1 + $0x588] sm:$0xff]
    %v203 = vld [vmem:[%s1 + $0x590] sm:$0xff]
    %v204 = vld [vmem:[%s1 + $0x598] sm:$0xff]
    %v205 = vld [vmem:[%s1 + $0x5a0] sm:$0xff]
    %v206 = vld [vmem:[%s1 + $0x5a8] sm:$0xff]
    %v207 = vld [vmem:[%s1 + $0x5b0] sm:$0xff]
    %v208 = vld [vmem:[%s1 + $0x5b8] sm:$0xff]
    %v209 = vld [vmem:[%s1 + $0x5c0] sm:$0xff]
    %v210 = vld [vmem:[%s1 + $0x5c8] sm:$0xff]
    %v211 = vld [vmem:[%s1 + $0x5d0] sm:$0xff]
    %v212 = vld [vmem:[%s1 + $0x5d8] sm:$0xff]
    %v213 = vld [vmem:[%s1 + $0x5e0] sm:$0xff]
    %v214 = vld [vmem:[%s1 + $0x5e8] sm:$0xff]
    %v215 = vld [vmem:[%s1 + $0x5f0] sm:$0xff]
    %v216 = vld [vmem:[%s1 + $0x5f8] sm:$0xff]
    %v217 = vld [vmem:[%s1 + $0x600] sm:$0xff]
    %v218 = vld [vmem:[%s1 + $0x608] sm:$0xff]
    %v219 = vld [vmem:[%s1 + $0x610] sm:$0xff]
    %v220 = vld [vmem:[%s1 + $0x618] sm:$0xff]
    %v221 = vld [vmem:[%s1 + $0x620] sm:$0xff]
    %v222 = vld [vmem:[%s1 + $0x628] sm:$0xff]
    %v223 = vld [vmem:[%s1 + $0x630] sm:$0xff]
    %v224 = vld [vmem:[%s1 + $0x638] sm:$0xff]
    %v225 = vld [vmem:[%s1 + $0x640] sm:$0xff]
    %v226 = vld [vmem:[%s1 + $0x648] sm:$0xff]
    %v227 = vld [vmem:[%s1 + $0x650] sm:$0xff]
    %v228 = vld [vmem:[%s1 + $0x658] sm:$0xff]
    %v229 = vld [vmem:[%s1 + $0x660] sm:$0xff]
    %v230 = vld [vmem:[%s1 + $0x668] sm:$0xff]
    %v231 = vld [vmem:[%s1 + $0x670] sm:$0xff]
    %v232 = vld [vmem:[%s1 + $0x678] sm:$0xff]
    %v233 = vld [vmem:[%s1 + $0x680] sm:$0xff]
    %v234 = vld [vmem:[%s1 + $0x688] sm:$0xff]
    %v235 = vld [vmem:[%s1 + $0x690] sm:$0xff]
    %v236 = vld [vmem:[%s1 + $0x698] sm:$0xff]
    %v237 = vld [vmem:[%s1 + $0x6a0] sm:$0xff]
    %v238 = vld [vmem:[%s1 + $0x6a8] sm:$0xff]
    %v239 = vld [vmem:[%s1 + $0x6b0] sm:$0xff]
    %v240 = vld [vmem:[%s1 + $0x6b8] sm:$0xff]
    %v241 = vld [vmem:[%s1 + $0x6c0] sm:$0xff]
    %v242 = vld [vmem:[%s1 + $0x6c8] sm:$0xff]
    %v243 = vld [vmem:[%s1 + $0x6d0] sm:$0xff]
    %v244 = vld [vmem:[%s1 + $0x6d8] sm:$0xff]
    %v245 = vld [vmem:[%s1 + $0x6e0] sm:$0xff]
    %v246 = vld [vmem:[%s1 + $0x6e8] sm:$0xff]
    %v247 = vld [vmem:[%s1 + $0x6f0] sm:$0xff]
    %v248 = vld [vmem:[%s1 + $0x6f8] sm:$0xff]
    %v249 = vld [vmem:[%s1 + $0x700] sm:$0xff]
    %v250 = vld [vmem:[%s1 + $0x708] sm:$0xff]
    %v251 = vld [vmem:[%s1 + $0x710] sm:$0xff]
    %v252 = vld [vmem:[%s1 + $0x718] sm:$0xff]
    %v253 = vld [vmem:[%s1 + $0x720] sm:$0xff]
    %v254 = vld [vmem:[%s1 + $0x728] sm:$0xff]
    %v255 = vld [vmem:[%s1 + $0x730] sm:$0xff]
    %v256 = vld [vmem:[%s1 + $0x738] sm:$0xff]
    %v257 = vld [vmem:[%s1 + $0x740] sm:$0xff]
    %v258 = vld [vmem:[%s1 + $0x748] sm:$0xff]
    %v259 = vld [vmem:[%s1 + $0x750] sm:$0xff]
    %v260 = vld [vmem:[%s1 + $0x758] sm:$0xff]
    %v261 = vld [vmem:[%s1 + $0x760] sm:$0xff]
    %v262 = vld [vmem:[%s1 + $0x768] sm:$0xff]
    %v263 = vld [vmem:[%s1 + $0x770] sm:$0xff]
    %v264 = vld [vmem:[%s1 + $0x778] sm:$0xff]
    %v265 = vld [vmem:[%s1 + $0x780] sm:$0xff]
    %v266 = vld [vmem:[%s1 + $0x788] sm:$0xff]
    %v267 = vld [vmem:[%s1 + $0x790] sm:$0xff]
    %v268 = vld [vmem:[%s1 + $0x798] sm:$0xff]
    %v269 = vld [vmem:[%s1 + $0x7a0] sm:$0xff]
    %v270 = vld [vmem:[%s1 + $0x7a8] sm:$0xff]
    %v271 = vld [vmem:[%s1 + $0x7b0] sm:$0xff]
    %v272 = vld [vmem:[%s1 + $0x7b8] sm:$0xff]
    %v273 = vld [vmem:[%s1 + $0x7c0] sm:$0xff]
    %v274 = vld [vmem:[%s1 + $0x7c8] sm:$0xff]
    %v275 = vld [vmem:[%s1 + $0x7d0] sm:$0xff]
    %v276 = vld [vmem:[%s1 + $0x7d8] sm:$0xff]
    %v277 = vld [vmem:[%s1 + $0x7e0] sm:$0xff]
    %v278 = vld [vmem:[%s1 + $0x7e8] sm:$0xff]
    %v279 = vld [vmem:[%s1 + $0x7f0] sm:$0xff]
    %v280 = vld [vmem:[%s1 + $0x7f8] sm:$0xff]
    %v281 = vld [vmem:[%s1 + $0x800] sm:$0xff]
    %v282 = vld [vmem:[%s1 + $0x808] sm:$0xff]
    %v283 = vld [vmem:[%s1 + $0x810] sm:$0xff]
    %v284 = vld [vmem:[%s1 + $0x818] sm:$0xff]
    %v285 = vld [vmem:[%s1 + $0x820] sm:$0xff]
    %v286 = vld [vmem:[%s1 + $0x828] sm:$0xff]
    %v287 = vld [vmem:[%s1 + $0x830] sm:$0xff]
    %v288 = vld [vmem:[%s1 + $0x838] sm:$0xff]
    %v289 = vld [vmem:[%s1 + $0x840] sm:$0xff]
    %v290 = vld [vmem:[%s1 + $0x848] sm:$0xff]
    %v291 = vld [vmem:[%s1 + $0x850] sm:$0xff]
    %v292 = vld [vmem:[%s1 + $0x858] sm:$0xff]
    %v293 = vld [vmem:[%s1 + $0x860] sm:$0xff]
    %v294 = vld [vmem:[%s1 + $0x868] sm:$0xff]
    %v295 = vld [vmem:[%s1 + $0x870] sm:$0xff]
    %v296 = vld [vmem:[%s1 + $0x878] sm:$0xff]
    %v297 = vld [vmem:[%s1 + $0x880] sm:$0xff]
    %v298 = vld [vmem:[%s1 + $0x888] sm:$0xff]
    %v299 = vld [vmem:[%s1 + $0x890] sm:$0xff]
    %v300 = vld [vmem:[%s1 + $0x898] sm:$0xff]
    %v301 = vld [vmem:[%s1 + $0x8a0] sm:$0xff]
    %v302 = vld [vmem:[%s1 + $0x8a8] sm:$0xff]
    %v303 = vld [vmem:[%s1 + $0x8b0] sm:$0xff]
    %v304 = vld [vmem:[%s1 + $0x8b8] sm:$0xff]
    %v305 = vld [vmem:[%s1 + $0x8c0] sm:$0xff]
    %v306 = vld [vmem:[%s1 + $0x8c8] sm:$0xff]
    %v307 = vld [vmem:[%s1 + $0x8d0] sm:$0xff]
    %v308 = vld [vmem:[%s1 + $0x8d8] sm:$0xff]
    %v309 = vld [vmem:[%s1 + $0x8e0] sm:$0xff]
    %v310 = vld [vmem:[%s1 + $0x8e8] sm:$0xff]
    %v311 = vld [vmem:[%s1 + $0x8f0] sm:$0xff]
    %v312 = vld [vmem:[%s1 + $0x8f8] sm:$0xff]
    %v313 = vld [vmem:[%s1 + $0x900] sm:$0xff]
    %v314 = vld [vmem:[%s1 + $0x908] sm:$0xff]
    %v315 = vld [vmem:[%s1 + $0x910] sm:$0xff]
    %v316 = vld [vmem:[%s1 + $0x918] sm:$0xff]
    %v317 = vld [vmem:[%s1 + $0x920] sm:$0xff]
    %v318 = vld [vmem:[%s1 + $0x928] sm:$0xff]
    %v319 = vld [vmem:[%s1 + $0x930] sm:$0xff]
    %v320 = vld [vmem:[%s1 + $0x938] sm:$0xff]
    %v321 = vld [vmem:[%s1 + $0x940] sm:$0xff]
    %v322 = vld [vmem:[%s1 + $0x948] sm:$0xff]
    %v323 = vld [vmem:[%s1 + $0x950] sm:$0xff]
    %v324 = vld [vmem:[%s1 + $0x958] sm:$0xff]
    %v325 = vld [vmem:[%s1 + $0x960] sm:$0xff]
    %v326 = vld [vmem:[%s1 + $0x968] sm:$0xff]
    %v327 = vld [vmem:[%s1 + $0x970] sm:$0xff]
    %v328 = vld [vmem:[%s1 + $0x978] sm:$0xff]
    %v329 = vld [vmem:[%s1 + $0x980] sm:$0xff]
    %v330 = vld [vmem:[%s1 + $0x988] sm:$0xff]
    %v331 = vld [vmem:[%s1 + $0x990] sm:$0xff]
    %v332 = vld [vmem:[%s1 + $0x998] sm:$0xff]
    %v333 = vld [vmem:[%s1 + $0x9a0] sm:$0xff]
    %v334 = vld [vmem:[%s1 + $0x9a8] sm:$0xff]
    %v335 = vld [vmem:[%s1 + $0x9b0] sm:$0xff]
    %v336 = vld [vmem:[%s1 + $0x9b8] sm:$0xff]
    %v337 = vld [vmem:[%s1 + $0x9c0] sm:$0xff]
    %v338 = vld [vmem:[%s1 + $0x9c8] sm:$0xff]
    %v339 = vld [vmem:[%s1 + $0x9d0] sm:$0xff]
    %v340 = vld [vmem:[%s1 + $0x9d8] sm:$0xff]
    %v341 = vld [vmem:[%s1 + $0x9e0] sm:$0xff]
    %v342 = vld [vmem:[%s1 + $0x9e8] sm:$0xff]
    %v343 = vld [vmem:[%s1 + $0x9f0] sm:$0xff]
    %v344 = vld [vmem:[%s1 + $0x9f8] sm:$0xff]
    %v345 = vld [vmem:[%s1 + $0xa00] sm:$0xff]
    %v346 = vld [vmem:[%s1 + $0xa08] sm:$0xff]
    %v347 = vld [vmem:[%s1 + $0xa10] sm:$0xff]
    %v348 = vld [vmem:[%s1 + $0xa18] sm:$0xff]
    %v349 = vld [vmem:[%s2] sm:$0x3]
    %v351 = vlaneseq
    %v352 = vshrl.u32 %v351, 7
    %v353 = vsub.s32 0, %v352
    %v354 = vrot.slane %v349, %v353
    %v355 = vlaneseq
    %v356 = vshrl.u32 %v355, 7
    %v357 = vsub.s32 1, %v356
    %v358 = vrot.slane %v349, %v357
    %v364 = vcombine.high %v22, %v22
    %v366 = vunpack.c.l.s4 1966171168
    %v367 = vunpack.c.0.s8 %v366
    %v368 = vlaneseq
    %v369 = vshrl.u32 %v368, 7
    %v370 = vsub.s32 %v367, %v369
    %v371 = vrot.slane %v22, %v370
    %v373 = vunpack.c.l.s4 1966171168
    %v374 = vunpack.c.0.s8 %v373
    %v375 = vlaneseq
    %v376 = vshrl.u32 %v375, 7
    %v377 = vsub.s32 %v374, %v376
    %v378 = vrot.slane %v364, %v377
    %v379 = vcombine.high %v371, %v371
    %v380 = vcombine.high %v378, %v378
    %v382 = vunpack.c.l.s4 1966171168
    %v383 = vunpack.c.0.s8 %v382
    %v384 = vlaneseq
    %v385 = vshrl.u32 %v384, 7
    %v386 = vsub.s32 %v383, %v385
    %v387 = vrot.slane %v371, %v386
    %v389 = vunpack.c.l.s4 1966171168
    %v390 = vunpack.c.0.s8 %v389
    %v391 = vlaneseq
    %v392 = vshrl.u32 %v391, 7
    %v393 = vsub.s32 %v390, %v392
    %v394 = vrot.slane %v378, %v393
    %v396 = vunpack.c.l.s4 1966171168
    %v397 = vunpack.c.0.s8 %v396
    %v398 = vlaneseq
    %v399 = vshrl.u32 %v398, 7
    %v400 = vsub.s32 %v397, %v399
    %v401 = vrot.slane %v379, %v400
    %v403 = vunpack.c.l.s4 1966171168
    %v404 = vunpack.c.0.s8 %v403
    %v405 = vlaneseq
    %v406 = vshrl.u32 %v405, 7
    %v407 = vsub.s32 %v404, %v406
    %v408 = vrot.slane %v380, %v407
    %v409 = vcombine.high %v387, %v387
    %v410 = vcombine.high %v394, %v394
    %v411 = vcombine.high %v401, %v401
    %v412 = vcombine.high %v408, %v408
    %v413 = vcombine.high %v23, %v23
    %v415 = vunpack.c.l.s4 1966171168
    %v416 = vunpack.c.0.s8 %v415
    %v417 = vlaneseq
    %v418 = vshrl.u32 %v417, 7
    %v419 = vsub.s32 %v416, %v418
    %v420 = vrot.slane %v23, %v419
    %v422 = vunpack.c.l.s4 1966171168
    %v423 = vunpack.c.0.s8 %v422
    %v424 = vlaneseq
    %v425 = vshrl.u32 %v424, 7
    %v426 = vsub.s32 %v423, %v425
    %v427 = vrot.slane %v413, %v426
    %v428 = vcombine.high %v420, %v420
    %v429 = vcombine.high %v427, %v427
    %v431 = vunpack.c.l.s4 1966171168
    %v432 = vunpack.c.0.s8 %v431
    %v433 = vlaneseq
    %v434 = vshrl.u32 %v433, 7
    %v435 = vsub.s32 %v432, %v434
    %v436 = vrot.slane %v420, %v435
    %v438 = vunpack.c.l.s4 1966171168
    %v439 = vunpack.c.0.s8 %v438
    %v440 = vlaneseq
    %v441 = vshrl.u32 %v440, 7
    %v442 = vsub.s32 %v439, %v441
    %v443 = vrot.slane %v427, %v442
    %v445 = vunpack.c.l.s4 1966171168
    %v446 = vunpack.c.0.s8 %v445
    %v447 = vlaneseq
    %v448 = vshrl.u32 %v447, 7
    %v449 = vsub.s32 %v446, %v448
    %v450 = vrot.slane %v428, %v449
    %v452 = vunpack.c.l.s4 1966171168
    %v453 = vunpack.c.0.s8 %v452
    %v454 = vlaneseq
    %v455 = vshrl.u32 %v454, 7
    %v456 = vsub.s32 %v453, %v455
    %v457 = vrot.slane %v429, %v456
    %v458 = vcombine.high %v436, %v436
    %v459 = vcombine.high %v443, %v443
    %v460 = vcombine.high %v450, %v450
    %v461 = vcombine.high %v457, %v457
    %v462 = vcombine.high %v24, %v24
    %v464 = vunpack.c.l.s4 1966171168
    %v465 = vunpack.c.0.s8 %v464
    %v466 = vlaneseq
    %v467 = vshrl.u32 %v466, 7
    %v468 = vsub.s32 %v465, %v467
    %v469 = vrot.slane %v24, %v468
    %v471 = vunpack.c.l.s4 1966171168
    %v472 = vunpack.c.0.s8 %v471
    %v473 = vlaneseq
    %v474 = vshrl.u32 %v473, 7
    %v475 = vsub.s32 %v472, %v474
    %v476 = vrot.slane %v462, %v475
    %v477 = vcombine.high %v469, %v469
    %v479 = vunpack.c.l.s4 1966171168
    %v480 = vunpack.c.0.s8 %v479
    %v481 = vlaneseq
    %v482 = vshrl.u32 %v481, 7
    %v483 = vsub.s32 %v480, %v482
    %v484 = vrot.slane %v469, %v483
    %v486 = vunpack.c.l.s4 1966171168
    %v487 = vunpack.c.0.s8 %v486
    %v488 = vlaneseq
    %v489 = vshrl.u32 %v488, 7
    %v490 = vsub.s32 %v487, %v489
    %v491 = vrot.slane %v476, %v490
    %v493 = vunpack.c.l.s4 1966171168
    %v494 = vunpack.c.0.s8 %v493
    %v495 = vlaneseq
    %v496 = vshrl.u32 %v495, 7
    %v497 = vsub.s32 %v494, %v496
    %v498 = vrot.slane %v477, %v497
    %v499 = vcombine.high %v484, %v484
    %v500 = vcombine.high %v498, %v498
    %v845 = vunpack.c.l.b16 %v25
    %v846 = vunpack.c.h.b16 %v25
    %v847 = vunpack.c.l.b16 %v26
    %v848 = vunpack.c.h.b16 %v26
    %v849 = vunpack.c.l.b16 %v27
    %v850 = vunpack.c.h.b16 %v27
    %v851 = vunpack.c.l.b16 %v28
    %v852 = vunpack.c.h.b16 %v28
    %v853 = vunpack.c.l.b16 %v29
    %v854 = vunpack.c.h.b16 %v29
    %v855 = vunpack.c.l.b16 %v30
    %v856 = vunpack.c.h.b16 %v30
    %v857 = vunpack.c.l.b16 %v31
    %v858 = vunpack.c.h.b16 %v31
    %v859 = vunpack.c.l.b16 %v32
    %v860 = vunpack.c.h.b16 %v32
    %v861 = vunpack.c.l.b16 %v33
    %v862 = vunpack.c.h.b16 %v33
    %v863 = vunpack.c.l.b16 %v34
    %v864 = vunpack.c.h.b16 %v34
    %v865 = vunpack.c.l.b16 %v35
    %v866 = vunpack.c.h.b16 %v35
    %v867 = vunpack.c.l.b16 %v36
    %v868 = vunpack.c.h.b16 %v36
    %v869 = vunpack.c.l.b16 %v37
    %v870 = vunpack.c.h.b16 %v37
    %v871 = vunpack.c.l.b16 %v38
    %v872 = vunpack.c.h.b16 %v38
    %v873 = vunpack.c.l.b16 %v39
    %v874 = vunpack.c.h.b16 %v39
    %v875 = vunpack.c.l.b16 %v40
    %v876 = vunpack.c.h.b16 %v40
    %v877 = vunpack.c.l.b16 %v41
    %v878 = vunpack.c.h.b16 %v41
    %v879 = vunpack.c.l.b16 %v42
    %v880 = vunpack.c.h.b16 %v42
    %v881 = vunpack.c.l.b16 %v43
    %v882 = vunpack.c.h.b16 %v43
    %v883 = vunpack.c.l.b16 %v44
    %v884 = vunpack.c.h.b16 %v44
    %v885 = vunpack.c.l.b16 %v45
    %v886 = vunpack.c.h.b16 %v45
    %v887 = vunpack.c.l.b16 %v46
    %v888 = vunpack.c.h.b16 %v46
    %v889 = vunpack.c.l.b16 %v47
    %v890 = vunpack.c.h.b16 %v47
    %v891 = vunpack.c.l.b16 %v48
    %v892 = vunpack.c.h.b16 %v48
    %v893 = vunpack.c.l.b16 %v49
    %v894 = vunpack.c.h.b16 %v49
    %v895 = vunpack.c.l.b16 %v50
    %v896 = vunpack.c.h.b16 %v50
    %v897 = vunpack.c.l.b16 %v51
    %v898 = vunpack.c.h.b16 %v51
    %v899 = vunpack.c.l.b16 %v52
    %v900 = vunpack.c.h.b16 %v52
    %v901 = vunpack.c.l.b16 %v53
    %v902 = vunpack.c.h.b16 %v53
    %v903 = vunpack.c.l.b16 %v54
    %v904 = vunpack.c.h.b16 %v54
    %v905 = vunpack.c.l.b16 %v55
    %v906 = vunpack.c.h.b16 %v55
    %v907 = vunpack.c.l.b16 %v56
    %v908 = vunpack.c.h.b16 %v56
    %v909 = vunpack.c.l.b16 %v57
    %v910 = vunpack.c.h.b16 %v57
    %v911 = vunpack.c.l.b16 %v58
    %v912 = vunpack.c.h.b16 %v58
    %v913 = vunpack.c.l.b16 %v59
    %v914 = vunpack.c.h.b16 %v59
    %v915 = vunpack.c.l.b16 %v60
    %v916 = vunpack.c.h.b16 %v60
    %v917 = vunpack.c.l.b16 %v61
    %v918 = vunpack.c.h.b16 %v61
    %v919 = vunpack.c.l.b16 %v62
    %v920 = vunpack.c.h.b16 %v62
    %v921 = vunpack.c.l.b16 %v63
    %v922 = vunpack.c.h.b16 %v63
    %v923 = vunpack.c.l.b16 %v64
    %v924 = vunpack.c.h.b16 %v64
    %v925 = vunpack.c.l.b16 %v65
    %v926 = vunpack.c.h.b16 %v65
    %v927 = vunpack.c.l.b16 %v66
    %v928 = vunpack.c.h.b16 %v66
    %v929 = vunpack.c.l.b16 %v67
    %v930 = vunpack.c.h.b16 %v67
    %v931 = vunpack.c.l.b16 %v68
    %v932 = vunpack.c.h.b16 %v68
    %v933 = vunpack.c.l.b16 %v69
    %v934 = vunpack.c.h.b16 %v69
    %v935 = vunpack.c.l.b16 %v70
    %v936 = vunpack.c.h.b16 %v70
    %v937 = vunpack.c.l.b16 %v71
    %v938 = vunpack.c.h.b16 %v71
    %v939 = vunpack.c.l.b16 %v72
    %v940 = vunpack.c.h.b16 %v72
    %v941 = vunpack.c.l.b16 %v73
    %v942 = vunpack.c.h.b16 %v73
    %v943 = vunpack.c.l.b16 %v74
    %v944 = vunpack.c.h.b16 %v74
    %v945 = vunpack.c.l.b16 %v75
    %v946 = vunpack.c.h.b16 %v75
    %v947 = vunpack.c.l.b16 %v76
    %v948 = vunpack.c.h.b16 %v76
    %v949 = vunpack.c.l.b16 %v77
    %v950 = vunpack.c.h.b16 %v77
    %v951 = vunpack.c.l.b16 %v78
    %v952 = vunpack.c.h.b16 %v78
    %v953 = vunpack.c.l.b16 %v79
    %v954 = vunpack.c.h.b16 %v79
    %v955 = vunpack.c.l.b16 %v80
    %v956 = vunpack.c.h.b16 %v80
    %v957 = vunpack.c.l.b16 %v81
    %v958 = vunpack.c.h.b16 %v81
    %v959 = vunpack.c.l.b16 %v82
    %v960 = vunpack.c.h.b16 %v82
    %v961 = vunpack.c.l.b16 %v83
    %v962 = vunpack.c.h.b16 %v83
    %v963 = vunpack.c.l.b16 %v84
    %v964 = vunpack.c.h.b16 %v84
    %v965 = vunpack.c.l.b16 %v85
    %v966 = vunpack.c.h.b16 %v85
    %v967 = vunpack.c.l.b16 %v86
    %v968 = vunpack.c.h.b16 %v86
    %v969 = vunpack.c.l.b16 %v87
    %v970 = vunpack.c.h.b16 %v87
    %v971 = vunpack.c.l.b16 %v88
    %v972 = vunpack.c.h.b16 %v88
    %v973 = vunpack.c.l.b16 %v89
    %v974 = vunpack.c.h.b16 %v89
    %v975 = vunpack.c.l.b16 %v90
    %v976 = vunpack.c.h.b16 %v90
    %v977 = vunpack.c.l.b16 %v91
    %v978 = vunpack.c.h.b16 %v91
    %v979 = vunpack.c.l.b16 %v92
    %v980 = vunpack.c.h.b16 %v92
    %v981 = vunpack.c.l.b16 %v93
    %v982 = vunpack.c.h.b16 %v93
    %v983 = vunpack.c.l.b16 %v94
    %v984 = vunpack.c.h.b16 %v94
    %v985 = vunpack.c.l.b16 %v95
    %v986 = vunpack.c.h.b16 %v95
    %v987 = vunpack.c.l.b16 %v96
    %v988 = vunpack.c.h.b16 %v96
    %v989 = vunpack.c.l.b16 %v97
    %v990 = vunpack.c.h.b16 %v97
    %v991 = vunpack.c.l.b16 %v98
    %v992 = vunpack.c.h.b16 %v98
    %v993 = vunpack.c.l.b16 %v99
    %v994 = vunpack.c.h.b16 %v99
    %v995 = vunpack.c.l.b16 %v100
    %v996 = vunpack.c.h.b16 %v100
    %v997 = vunpack.c.l.b16 %v101
    %v998 = vunpack.c.h.b16 %v101
    %v999 = vunpack.c.l.b16 %v102
    %v1000 = vunpack.c.h.b16 %v102
    %v1001 = vunpack.c.l.b16 %v103
    %v1002 = vunpack.c.h.b16 %v103
    %v1003 = vunpack.c.l.b16 %v104
    %v1004 = vunpack.c.h.b16 %v104
    %v1005 = vunpack.c.l.b16 %v105
    %v1006 = vunpack.c.h.b16 %v105
    %v1007 = vunpack.c.l.b16 %v106
    %v1008 = vunpack.c.h.b16 %v106
    %v1009 = vunpack.c.l.b16 %v107
    %v1010 = vunpack.c.h.b16 %v107
    %v1011 = vunpack.c.l.b16 %v108
    %v1012 = vunpack.c.h.b16 %v108
    %v1013 = vunpack.c.l.b16 %v109
    %v1014 = vunpack.c.h.b16 %v109
    %v1015 = vunpack.c.l.b16 %v110
    %v1016 = vunpack.c.h.b16 %v110
    %v1017 = vunpack.c.l.b16 %v111
    %v1018 = vunpack.c.h.b16 %v111
    %v1019 = vunpack.c.l.b16 %v112
    %v1020 = vunpack.c.h.b16 %v112
    %v1021 = vunpack.c.l.b16 %v113
    %v1022 = vunpack.c.h.b16 %v113
    %v1023 = vunpack.c.l.b16 %v114
    %v1024 = vunpack.c.h.b16 %v114
    %v1025 = vunpack.c.l.b16 %v115
    %v1026 = vunpack.c.h.b16 %v115
    %v1027 = vunpack.c.l.b16 %v116
    %v1028 = vunpack.c.h.b16 %v116
    %v1029 = vunpack.c.l.b16 %v117
    %v1030 = vunpack.c.h.b16 %v117
    %v1031 = vunpack.c.l.b16 %v118
    %v1032 = vunpack.c.h.b16 %v118
    %v1033 = vunpack.c.l.b16 %v119
    %v1034 = vunpack.c.h.b16 %v119
    %v1035 = vunpack.c.l.b16 %v120
    %v1036 = vunpack.c.h.b16 %v120
    %v1037 = vunpack.c.l.b16 %v121
    %v1038 = vunpack.c.h.b16 %v121
    %v1039 = vunpack.c.l.b16 %v122
    %v1040 = vunpack.c.h.b16 %v122
    %v1041 = vunpack.c.l.b16 %v123
    %v1042 = vunpack.c.h.b16 %v123
    %v1043 = vunpack.c.l.b16 %v124
    %v1044 = vunpack.c.h.b16 %v124
    %v1045 = vunpack.c.l.b16 %v125
    %v1046 = vunpack.c.h.b16 %v125
    %v1047 = vunpack.c.l.b16 %v126
    %v1048 = vunpack.c.h.b16 %v126
    %v1049 = vunpack.c.l.b16 %v127
    %v1050 = vunpack.c.h.b16 %v127
    %v1051 = vunpack.c.l.b16 %v128
    %v1052 = vunpack.c.h.b16 %v128
    %v1053 = vunpack.c.l.b16 %v129
    %v1054 = vunpack.c.h.b16 %v129
    %v1055 = vunpack.c.l.b16 %v130
    %v1056 = vunpack.c.h.b16 %v130
    %v1057 = vunpack.c.l.b16 %v131
    %v1058 = vunpack.c.h.b16 %v131
    %v1059 = vunpack.c.l.b16 %v132
    %v1060 = vunpack.c.h.b16 %v132
    %v1061 = vunpack.c.l.b16 %v133
    %v1062 = vunpack.c.h.b16 %v133
    %v1063 = vunpack.c.l.b16 %v134
    %v1064 = vunpack.c.h.b16 %v134
    %v1065 = vunpack.c.l.b16 %v135
    %v1066 = vunpack.c.h.b16 %v135
    %v1067 = vunpack.c.l.b16 %v136
    %v1068 = vunpack.c.h.b16 %v136
    %v1069 = vunpack.c.l.b16 %v137
    %v1070 = vunpack.c.h.b16 %v137
    %v1071 = vunpack.c.l.b16 %v138
    %v1072 = vunpack.c.h.b16 %v138
    %v1073 = vunpack.c.l.b16 %v139
    %v1074 = vunpack.c.h.b16 %v139
    %v1075 = vunpack.c.l.b16 %v140
    %v1076 = vunpack.c.h.b16 %v140
    %v1077 = vunpack.c.l.b16 %v141
    %v1078 = vunpack.c.h.b16 %v141
    %v1079 = vunpack.c.l.b16 %v142
    %v1080 = vunpack.c.h.b16 %v142
    %v1081 = vunpack.c.l.b16 %v143
    %v1082 = vunpack.c.h.b16 %v143
    %v1083 = vunpack.c.l.b16 %v144
    %v1084 = vunpack.c.h.b16 %v144
    %v1085 = vunpack.c.l.b16 %v145
    %v1086 = vunpack.c.h.b16 %v145
    %v1087 = vunpack.c.l.b16 %v146
    %v1088 = vunpack.c.h.b16 %v146
    %v1089 = vunpack.c.l.b16 %v147
    %v1090 = vunpack.c.h.b16 %v147
    %v1091 = vunpack.c.l.b16 %v148
    %v1092 = vunpack.c.h.b16 %v148
    %v1093 = vunpack.c.l.b16 %v149
    %v1094 = vunpack.c.h.b16 %v149
    %v1095 = vunpack.c.l.b16 %v150
    %v1096 = vunpack.c.h.b16 %v150
    %v1097 = vunpack.c.l.b16 %v151
    %v1098 = vunpack.c.h.b16 %v151
    %v1099 = vunpack.c.l.b16 %v152
    %v1100 = vunpack.c.h.b16 %v152
    %v1101 = vunpack.c.l.b16 %v153
    %v1102 = vunpack.c.h.b16 %v153
    %v1103 = vunpack.c.l.b16 %v154
    %v1104 = vunpack.c.h.b16 %v154
    %v1105 = vunpack.c.l.b16 %v155
    %v1106 = vunpack.c.h.b16 %v155
    %v1107 = vunpack.c.l.b16 %v156
    %v1108 = vunpack.c.h.b16 %v156
    %v1109 = vunpack.c.l.b16 %v157
    %v1110 = vunpack.c.h.b16 %v157
    %v1111 = vunpack.c.l.b16 %v158
    %v1112 = vunpack.c.h.b16 %v158
    %v1113 = vunpack.c.l.b16 %v159
    %v1114 = vunpack.c.h.b16 %v159
    %v1115 = vunpack.c.l.b16 %v160
    %v1116 = vunpack.c.h.b16 %v160
    %v1117 = vunpack.c.l.b16 %v161
    %v1118 = vunpack.c.h.b16 %v161
    %v1119 = vunpack.c.l.b16 %v162
    %v1120 = vunpack.c.h.b16 %v162
    %v1121 = vunpack.c.l.b16 %v163
    %v1122 = vunpack.c.h.b16 %v163
    %v1123 = vunpack.c.l.b16 %v164
    %v1124 = vunpack.c.h.b16 %v164
    %v1125 = vunpack.c.l.b16 %v165
    %v1126 = vunpack.c.h.b16 %v165
    %v1127 = vunpack.c.l.b16 %v166
    %v1128 = vunpack.c.h.b16 %v166
    %v1129 = vunpack.c.l.b16 %v167
    %v1130 = vunpack.c.h.b16 %v167
    %v1131 = vunpack.c.l.b16 %v168
    %v1132 = vunpack.c.h.b16 %v168
    %v1133 = vunpack.c.l.b16 %v169
    %v1134 = vunpack.c.h.b16 %v169
    %v1135 = vunpack.c.l.b16 %v170
    %v1136 = vunpack.c.h.b16 %v170
    %v1137 = vunpack.c.l.b16 %v171
    %v1138 = vunpack.c.h.b16 %v171
    %v1139 = vunpack.c.l.b16 %v172
    %v1140 = vunpack.c.h.b16 %v172
    %v1141 = vunpack.c.l.b16 %v173
    %v1142 = vunpack.c.h.b16 %v173
    %v1143 = vunpack.c.l.b16 %v174
    %v1144 = vunpack.c.h.b16 %v174
    %v1145 = vunpack.c.l.b16 %v175
    %v1146 = vunpack.c.h.b16 %v175
    %v1147 = vunpack.c.l.b16 %v176
    %v1148 = vunpack.c.h.b16 %v176
    %v1149 = vunpack.c.l.b16 %v177
    %v1150 = vunpack.c.h.b16 %v177
    %v1151 = vunpack.c.l.b16 %v178
    %v1152 = vunpack.c.h.b16 %v178
    %v1153 = vunpack.c.l.b16 %v179
    %v1154 = vunpack.c.h.b16 %v179
    %v1155 = vunpack.c.l.b16 %v180
    %v1156 = vunpack.c.h.b16 %v180
    %v1157 = vunpack.c.l.b16 %v181
    %v1158 = vunpack.c.h.b16 %v181
    %v1159 = vunpack.c.l.b16 %v182
    %v1160 = vunpack.c.h.b16 %v182
    %v1161 = vunpack.c.l.b16 %v183
    %v1162 = vunpack.c.h.b16 %v183
    %v1163 = vunpack.c.l.b16 %v184
    %v1164 = vunpack.c.h.b16 %v184
    %v1165 = vunpack.c.l.b16 %v185
    %v1166 = vunpack.c.h.b16 %v185
    %v1167 = vunpack.c.l.b16 %v186
    %v1168 = vunpack.c.h.b16 %v186
    %v1169 = vunpack.c.l.b16 %v187
    %v1170 = vunpack.c.h.b16 %v187
    %v1171 = vunpack.c.l.b16 %v188
    %v1172 = vunpack.c.h.b16 %v188
    %v1173 = vunpack.c.l.b16 %v189
    %v1174 = vunpack.c.h.b16 %v189
    %v1175 = vunpack.c.l.b16 %v190
    %v1176 = vunpack.c.h.b16 %v190
    %v1177 = vunpack.c.l.b16 %v191
    %v1178 = vunpack.c.h.b16 %v191
    %v1179 = vunpack.c.l.b16 %v192
    %v1180 = vunpack.c.h.b16 %v192
    %v1181 = vunpack.c.l.b16 %v193
    %v1182 = vunpack.c.h.b16 %v193
    %v1183 = vunpack.c.l.b16 %v194
    %v1184 = vunpack.c.h.b16 %v194
    %v1185 = vunpack.c.l.b16 %v195
    %v1186 = vunpack.c.h.b16 %v195
    %v1187 = vunpack.c.l.b16 %v196
    %v1188 = vunpack.c.h.b16 %v196
    %v1189 = vunpack.c.l.b16 %v197
    %v1190 = vunpack.c.h.b16 %v197
    %v1191 = vunpack.c.l.b16 %v198
    %v1192 = vunpack.c.h.b16 %v198
    %v1193 = vunpack.c.l.b16 %v199
    %v1194 = vunpack.c.h.b16 %v199
    %v1195 = vunpack.c.l.b16 %v200
    %v1196 = vunpack.c.h.b16 %v200
    %v1197 = vunpack.c.l.b16 %v201
    %v1198 = vunpack.c.h.b16 %v201
    %v1199 = vunpack.c.l.b16 %v202
    %v1200 = vunpack.c.h.b16 %v202
    %v1201 = vunpack.c.l.b16 %v203
    %v1202 = vunpack.c.h.b16 %v203
    %v1203 = vunpack.c.l.b16 %v204
    %v1204 = vunpack.c.h.b16 %v204
    %v1205 = vunpack.c.l.b16 %v205
    %v1206 = vunpack.c.h.b16 %v205
    %v1207 = vunpack.c.l.b16 %v206
    %v1208 = vunpack.c.h.b16 %v206
    %v1209 = vunpack.c.l.b16 %v207
    %v1210 = vunpack.c.h.b16 %v207
    %v1211 = vunpack.c.l.b16 %v208
    %v1212 = vunpack.c.h.b16 %v208
    %v1213 = vunpack.c.l.b16 %v209
    %v1214 = vunpack.c.h.b16 %v209
    %v1215 = vunpack.c.l.b16 %v210
    %v1216 = vunpack.c.h.b16 %v210
    %v1217 = vunpack.c.l.b16 %v211
    %v1218 = vunpack.c.h.b16 %v211
    %v1219 = vunpack.c.l.b16 %v212
    %v1220 = vunpack.c.h.b16 %v212
    %v1221 = vunpack.c.l.b16 %v213
    %v1222 = vunpack.c.h.b16 %v213
    %v1223 = vunpack.c.l.b16 %v214
    %v1224 = vunpack.c.h.b16 %v214
    %v1225 = vunpack.c.l.b16 %v215
    %v1226 = vunpack.c.h.b16 %v215
    %v1227 = vunpack.c.l.b16 %v216
    %v1228 = vunpack.c.h.b16 %v216
    %v1229 = vunpack.c.l.b16 %v217
    %v1230 = vunpack.c.h.b16 %v217
    %v1231 = vunpack.c.l.b16 %v218
    %v1232 = vunpack.c.h.b16 %v218
    %v1233 = vunpack.c.l.b16 %v219
    %v1234 = vunpack.c.h.b16 %v219
    %v1235 = vunpack.c.l.b16 %v220
    %v1236 = vunpack.c.h.b16 %v220
    %v1237 = vunpack.c.l.b16 %v221
    %v1238 = vunpack.c.h.b16 %v221
    %v1239 = vunpack.c.l.b16 %v222
    %v1240 = vunpack.c.h.b16 %v222
    %v1241 = vunpack.c.l.b16 %v223
    %v1242 = vunpack.c.h.b16 %v223
    %v1243 = vunpack.c.l.b16 %v224
    %v1244 = vunpack.c.h.b16 %v224
    %v1245 = vunpack.c.l.b16 %v225
    %v1246 = vunpack.c.h.b16 %v225
    %v1247 = vunpack.c.l.b16 %v226
    %v1248 = vunpack.c.h.b16 %v226
    %v1249 = vunpack.c.l.b16 %v227
    %v1250 = vunpack.c.h.b16 %v227
    %v1251 = vunpack.c.l.b16 %v228
    %v1252 = vunpack.c.h.b16 %v228
    %v1253 = vunpack.c.l.b16 %v229
    %v1254 = vunpack.c.h.b16 %v229
    %v1255 = vunpack.c.l.b16 %v230
    %v1256 = vunpack.c.h.b16 %v230
    %v1257 = vunpack.c.l.b16 %v231
    %v1258 = vunpack.c.h.b16 %v231
    %v1259 = vunpack.c.l.b16 %v232
    %v1260 = vunpack.c.h.b16 %v232
    %v1261 = vunpack.c.l.b16 %v233
    %v1262 = vunpack.c.h.b16 %v233
    %v1263 = vunpack.c.l.b16 %v234
    %v1264 = vunpack.c.h.b16 %v234
    %v1265 = vunpack.c.l.b16 %v235
    %v1266 = vunpack.c.h.b16 %v235
    %v1267 = vunpack.c.l.b16 %v236
    %v1268 = vunpack.c.h.b16 %v236
    %v1269 = vunpack.c.l.b16 %v237
    %v1270 = vunpack.c.h.b16 %v237
    %v1271 = vunpack.c.l.b16 %v238
    %v1272 = vunpack.c.h.b16 %v238
    %v1273 = vunpack.c.l.b16 %v239
    %v1274 = vunpack.c.h.b16 %v239
    %v1275 = vunpack.c.l.b16 %v240
    %v1276 = vunpack.c.h.b16 %v240
    %v1277 = vunpack.c.l.b16 %v241
    %v1278 = vunpack.c.h.b16 %v241
    %v1279 = vunpack.c.l.b16 %v242
    %v1280 = vunpack.c.h.b16 %v242
    %v1281 = vunpack.c.l.b16 %v243
    %v1282 = vunpack.c.h.b16 %v243
    %v1283 = vunpack.c.l.b16 %v244
    %v1284 = vunpack.c.h.b16 %v244
    %v1285 = vunpack.c.l.b16 %v245
    %v1286 = vunpack.c.h.b16 %v245
    %v1287 = vunpack.c.l.b16 %v246
    %v1288 = vunpack.c.h.b16 %v246
    %v1289 = vunpack.c.l.b16 %v247
    %v1290 = vunpack.c.h.b16 %v247
    %v1291 = vunpack.c.l.b16 %v248
    %v1292 = vunpack.c.h.b16 %v248
    %v1293 = vunpack.c.l.b16 %v249
    %v1294 = vunpack.c.h.b16 %v249
    %v1295 = vunpack.c.l.b16 %v250
    %v1296 = vunpack.c.h.b16 %v250
    %v1297 = vunpack.c.l.b16 %v251
    %v1298 = vunpack.c.h.b16 %v251
    %v1299 = vunpack.c.l.b16 %v252
    %v1300 = vunpack.c.h.b16 %v252
    %v1301 = vunpack.c.l.b16 %v253
    %v1302 = vunpack.c.h.b16 %v253
    %v1303 = vunpack.c.l.b16 %v254
    %v1304 = vunpack.c.h.b16 %v254
    %v1305 = vunpack.c.l.b16 %v255
    %v1306 = vunpack.c.h.b16 %v255
    %v1307 = vunpack.c.l.b16 %v256
    %v1308 = vunpack.c.h.b16 %v256
    %v1309 = vunpack.c.l.b16 %v257
    %v1310 = vunpack.c.h.b16 %v257
    %v1311 = vunpack.c.l.b16 %v258
    %v1312 = vunpack.c.h.b16 %v258
    %v1313 = vunpack.c.l.b16 %v259
    %v1314 = vunpack.c.h.b16 %v259
    %v1315 = vunpack.c.l.b16 %v260
    %v1316 = vunpack.c.h.b16 %v260
    %v1317 = vunpack.c.l.b16 %v261
    %v1318 = vunpack.c.h.b16 %v261
    %v1319 = vunpack.c.l.b16 %v262
    %v1320 = vunpack.c.h.b16 %v262
    %v1321 = vunpack.c.l.b16 %v263
    %v1322 = vunpack.c.h.b16 %v263
    %v1323 = vunpack.c.l.b16 %v264
    %v1324 = vunpack.c.h.b16 %v264
    %v1325 = vunpack.c.l.b16 %v265
    %v1326 = vunpack.c.h.b16 %v265
    %v1327 = vunpack.c.l.b16 %v266
    %v1328 = vunpack.c.h.b16 %v266
    %v1329 = vunpack.c.l.b16 %v267
    %v1330 = vunpack.c.h.b16 %v267
    %v1331 = vunpack.c.l.b16 %v268
    %v1332 = vunpack.c.h.b16 %v268
    %v1333 = vunpack.c.l.b16 %v269
    %v1334 = vunpack.c.h.b16 %v269
    %v1335 = vunpack.c.l.b16 %v270
    %v1336 = vunpack.c.h.b16 %v270
    %v1337 = vunpack.c.l.b16 %v271
    %v1338 = vunpack.c.h.b16 %v271
    %v1339 = vunpack.c.l.b16 %v272
    %v1340 = vunpack.c.h.b16 %v272
    %v1341 = vunpack.c.l.b16 %v273
    %v1342 = vunpack.c.h.b16 %v273
    %v1343 = vunpack.c.l.b16 %v274
    %v1344 = vunpack.c.h.b16 %v274
    %v1345 = vunpack.c.l.b16 %v275
    %v1346 = vunpack.c.h.b16 %v275
    %v1347 = vunpack.c.l.b16 %v276
    %v1348 = vunpack.c.h.b16 %v276
    %v1349 = vunpack.c.l.b16 %v277
    %v1350 = vunpack.c.h.b16 %v277
    %v1351 = vunpack.c.l.b16 %v278
    %v1352 = vunpack.c.h.b16 %v278
    %v1353 = vunpack.c.l.b16 %v279
    %v1354 = vunpack.c.h.b16 %v279
    %v1355 = vunpack.c.l.b16 %v280
    %v1356 = vunpack.c.h.b16 %v280
    %v1357 = vunpack.c.l.b16 %v281
    %v1358 = vunpack.c.h.b16 %v281
    %v1359 = vunpack.c.l.b16 %v282
    %v1360 = vunpack.c.h.b16 %v282
    %v1361 = vunpack.c.l.b16 %v283
    %v1362 = vunpack.c.h.b16 %v283
    %v1363 = vunpack.c.l.b16 %v284
    %v1364 = vunpack.c.h.b16 %v284
    %v1365 = vunpack.c.l.b16 %v285
    %v1366 = vunpack.c.h.b16 %v285
    %v1367 = vunpack.c.l.b16 %v286
    %v1368 = vunpack.c.h.b16 %v286
    %v1369 = vunpack.c.l.b16 %v287
    %v1370 = vunpack.c.h.b16 %v287
    %v1371 = vunpack.c.l.b16 %v288
    %v1372 = vunpack.c.h.b16 %v288
    %v1373 = vunpack.c.l.b16 %v289
    %v1374 = vunpack.c.h.b16 %v289
    %v1375 = vunpack.c.l.b16 %v290
    %v1376 = vunpack.c.h.b16 %v290
    %v1377 = vunpack.c.l.b16 %v291
    %v1378 = vunpack.c.h.b16 %v291
    %v1379 = vunpack.c.l.b16 %v292
    %v1380 = vunpack.c.h.b16 %v292
    %v1381 = vunpack.c.l.b16 %v293
    %v1382 = vunpack.c.h.b16 %v293
    %v1383 = vunpack.c.l.b16 %v294
    %v1384 = vunpack.c.h.b16 %v294
    %v1385 = vunpack.c.l.b16 %v295
    %v1386 = vunpack.c.h.b16 %v295
    %v1387 = vunpack.c.l.b16 %v296
    %v1388 = vunpack.c.h.b16 %v296
    %v1389 = vunpack.c.l.b16 %v297
    %v1390 = vunpack.c.h.b16 %v297
    %v1391 = vunpack.c.l.b16 %v298
    %v1392 = vunpack.c.h.b16 %v298
    %v1393 = vunpack.c.l.b16 %v299
    %v1394 = vunpack.c.h.b16 %v299
    %v1395 = vunpack.c.l.b16 %v300
    %v1396 = vunpack.c.h.b16 %v300
    %v1397 = vunpack.c.l.b16 %v301
    %v1398 = vunpack.c.h.b16 %v301
    %v1399 = vunpack.c.l.b16 %v302
    %v1400 = vunpack.c.h.b16 %v302
    %v1401 = vunpack.c.l.b16 %v303
    %v1402 = vunpack.c.h.b16 %v303
    %v1403 = vunpack.c.l.b16 %v304
    %v1404 = vunpack.c.h.b16 %v304
    %v1405 = vunpack.c.l.b16 %v305
    %v1406 = vunpack.c.h.b16 %v305
    %v1407 = vunpack.c.l.b16 %v306
    %v1408 = vunpack.c.h.b16 %v306
    %v1409 = vunpack.c.l.b16 %v307
    %v1410 = vunpack.c.h.b16 %v307
    %v1411 = vunpack.c.l.b16 %v308
    %v1412 = vunpack.c.h.b16 %v308
    %v1413 = vunpack.c.l.b16 %v309
    %v1414 = vunpack.c.h.b16 %v309
    %v1415 = vunpack.c.l.b16 %v310
    %v1416 = vunpack.c.h.b16 %v310
    %v1417 = vunpack.c.l.b16 %v311
    %v1418 = vunpack.c.h.b16 %v311
    %v1419 = vunpack.c.l.b16 %v312
    %v1420 = vunpack.c.h.b16 %v312
    %v1421 = vunpack.c.l.b16 %v313
    %v1422 = vunpack.c.h.b16 %v313
    %v1423 = vunpack.c.l.b16 %v314
    %v1424 = vunpack.c.h.b16 %v314
    %v1425 = vunpack.c.l.b16 %v315
    %v1426 = vunpack.c.h.b16 %v315
    %v1427 = vunpack.c.l.b16 %v316
    %v1428 = vunpack.c.h.b16 %v316
    %v1429 = vunpack.c.l.b16 %v317
    %v1430 = vunpack.c.h.b16 %v317
    %v1431 = vunpack.c.l.b16 %v318
    %v1432 = vunpack.c.h.b16 %v318
    %v1433 = vunpack.c.l.b16 %v319
    %v1434 = vunpack.c.h.b16 %v319
    %v1435 = vunpack.c.l.b16 %v320
    %v1436 = vunpack.c.h.b16 %v320
    %v1437 = vunpack.c.l.b16 %v321
    %v1438 = vunpack.c.h.b16 %v321
    %v1439 = vunpack.c.l.b16 %v322
    %v1440 = vunpack.c.h.b16 %v322
    %v1441 = vunpack.c.l.b16 %v323
    %v1442 = vunpack.c.h.b16 %v323
    %v1443 = vunpack.c.l.b16 %v324
    %v1444 = vunpack.c.h.b16 %v324
    %v1445 = vunpack.c.l.b16 %v325
    %v1446 = vunpack.c.h.b16 %v325
    %v1447 = vunpack.c.l.b16 %v326
    %v1448 = vunpack.c.h.b16 %v326
    %v1449 = vunpack.c.l.b16 %v327
    %v1450 = vunpack.c.h.b16 %v327
    %v1451 = vunpack.c.l.b16 %v328
    %v1452 = vunpack.c.h.b16 %v328
    %v1453 = vunpack.c.l.b16 %v329
    %v1454 = vunpack.c.h.b16 %v329
    %v1455 = vunpack.c.l.b16 %v330
    %v1456 = vunpack.c.h.b16 %v330
    %v1457 = vunpack.c.l.b16 %v331
    %v1458 = vunpack.c.h.b16 %v331
    %v1459 = vunpack.c.l.b16 %v332
    %v1460 = vunpack.c.h.b16 %v332
    %v1461 = vunpack.c.l.b16 %v333
    %v1462 = vunpack.c.h.b16 %v333
    %v1463 = vunpack.c.l.b16 %v334
    %v1464 = vunpack.c.h.b16 %v334
    %v1465 = vunpack.c.l.b16 %v335
    %v1466 = vunpack.c.h.b16 %v335
    %v1467 = vunpack.c.l.b16 %v336
    %v1468 = vunpack.c.h.b16 %v336
    %v1469 = vunpack.c.l.b16 %v337
    %v1470 = vunpack.c.h.b16 %v337
    %v1471 = vunpack.c.l.b16 %v338
    %v1472 = vunpack.c.h.b16 %v338
    %v1473 = vunpack.c.l.b16 %v339
    %v1474 = vunpack.c.h.b16 %v339
    %v1475 = vunpack.c.l.b16 %v340
    %v1476 = vunpack.c.h.b16 %v340
    %v1477 = vunpack.c.l.b16 %v341
    %v1478 = vunpack.c.h.b16 %v341
    %v1479 = vunpack.c.l.b16 %v342
    %v1480 = vunpack.c.h.b16 %v342
    %v1481 = vunpack.c.l.b16 %v343
    %v1482 = vunpack.c.h.b16 %v343
    %v1483 = vunpack.c.l.b16 %v344
    %v1484 = vunpack.c.h.b16 %v344
    %v1485 = vunpack.c.l.b16 %v345
    %v1486 = vunpack.c.h.b16 %v345
    %v1487 = vunpack.c.l.b16 %v346
    %v1488 = vunpack.c.h.b16 %v346
    %v1489 = vunpack.c.l.b16 %v347
    %v1490 = vunpack.c.h.b16 %v347
    %v1491 = vunpack.c.l.b16 %v348
    %v1492 = vunpack.c.h.b16 %v348
    %v1493 = vpack.c.b16 %v847, %v845
    %v1494 = vpack.c.b16 %v848, %v846
    %v1495 = vpack.c.b16 %v851, %v849
    %v1496 = vpack.c.b16 %v852, %v850
    %v1497 = vpack.c.b16 %v855, %v853
    %v1498 = vpack.c.b16 %v856, %v854
    %v1499 = vpack.c.b16 %v859, %v857
    %v1500 = vpack.c.b16 %v860, %v858
    %v1501 = vpack.c.b16 %v863, %v861
    %v1502 = vpack.c.b16 %v864, %v862
    %v1503 = vpack.c.b16 %v867, %v865
    %v1504 = vpack.c.b16 %v868, %v866
    %v1505 = vpack.c.b16 %v871, %v869
    %v1506 = vpack.c.b16 %v872, %v870
    %v1507 = vpack.c.b16 %v875, %v873
    %v1508 = vpack.c.b16 %v876, %v874
    %v1509 = vpack.c.b16 %v879, %v877
    %v1510 = vpack.c.b16 %v880, %v878
    %v1511 = vpack.c.b16 %v883, %v881
    %v1512 = vpack.c.b16 %v884, %v882
    %v1513 = vpack.c.b16 %v887, %v885
    %v1514 = vpack.c.b16 %v888, %v886
    %v1515 = vpack.c.b16 %v891, %v889
    %v1516 = vpack.c.b16 %v892, %v890
    %v1517 = vpack.c.b16 %v895, %v893
    %v1518 = vpack.c.b16 %v896, %v894
    %v1519 = vpack.c.b16 %v899, %v897
    %v1520 = vpack.c.b16 %v900, %v898
    %v1521 = vpack.c.b16 %v903, %v901
    %v1522 = vpack.c.b16 %v904, %v902
    %v1523 = vpack.c.b16 %v907, %v905
    %v1524 = vpack.c.b16 %v908, %v906
    %v1525 = vpack.c.b16 %v911, %v909
    %v1526 = vpack.c.b16 %v912, %v910
    %v1527 = vpack.c.b16 %v915, %v913
    %v1528 = vpack.c.b16 %v916, %v914
    %v1529 = vpack.c.b16 %v919, %v917
    %v1530 = vpack.c.b16 %v920, %v918
    %v1531 = vpack.c.b16 %v923, %v921
    %v1532 = vpack.c.b16 %v924, %v922
    %v1533 = vpack.c.b16 %v927, %v925
    %v1534 = vpack.c.b16 %v928, %v926
    %v1535 = vpack.c.b16 %v931, %v929
    %v1536 = vpack.c.b16 %v932, %v930
    %v1537 = vpack.c.b16 %v935, %v933
    %v1538 = vpack.c.b16 %v936, %v934
    %v1539 = vpack.c.b16 %v939, %v937
    %v1540 = vpack.c.b16 %v940, %v938
    %v1541 = vpack.c.b16 %v943, %v941
    %v1542 = vpack.c.b16 %v944, %v942
    %v1543 = vpack.c.b16 %v947, %v945
    %v1544 = vpack.c.b16 %v948, %v946
    %v1545 = vpack.c.b16 %v951, %v949
    %v1546 = vpack.c.b16 %v952, %v950
    %v1547 = vpack.c.b16 %v955, %v953
    %v1548 = vpack.c.b16 %v956, %v954
    %v1549 = vpack.c.b16 %v959, %v957
    %v1550 = vpack.c.b16 %v960, %v958
    %v1551 = vpack.c.b16 %v963, %v961
    %v1552 = vpack.c.b16 %v964, %v962
    %v1553 = vpack.c.b16 %v967, %v965
    %v1554 = vpack.c.b16 %v968, %v966
    %v1555 = vpack.c.b16 %v971, %v969
    %v1556 = vpack.c.b16 %v972, %v970
    %v1557 = vpack.c.b16 %v975, %v973
    %v1558 = vpack.c.b16 %v976, %v974
    %v1559 = vpack.c.b16 %v979, %v977
    %v1560 = vpack.c.b16 %v980, %v978
    %v1561 = vpack.c.b16 %v983, %v981
    %v1562 = vpack.c.b16 %v984, %v982
    %v1563 = vpack.c.b16 %v987, %v985
    %v1564 = vpack.c.b16 %v988, %v986
    %v1565 = vpack.c.b16 %v991, %v989
    %v1566 = vpack.c.b16 %v992, %v990
    %v1567 = vpack.c.b16 %v995, %v993
    %v1568 = vpack.c.b16 %v996, %v994
    %v1569 = vpack.c.b16 %v999, %v997
    %v1570 = vpack.c.b16 %v1000, %v998
    %v1571 = vpack.c.b16 %v1003, %v1001
    %v1572 = vpack.c.b16 %v1004, %v1002
    %v1573 = vpack.c.b16 %v1007, %v1005
    %v1574 = vpack.c.b16 %v1008, %v1006
    %v1575 = vpack.c.b16 %v1011, %v1009
    %v1576 = vpack.c.b16 %v1012, %v1010
    %v1577 = vpack.c.b16 %v1015, %v1013
    %v1578 = vpack.c.b16 %v1016, %v1014
    %v1579 = vpack.c.b16 %v1019, %v1017
    %v1580 = vpack.c.b16 %v1020, %v1018
    %v1581 = vpack.c.b16 %v1023, %v1021
    %v1582 = vpack.c.b16 %v1024, %v1022
    %v1583 = vpack.c.b16 %v1027, %v1025
    %v1584 = vpack.c.b16 %v1028, %v1026
    %v1585 = vpack.c.b16 %v1031, %v1029
    %v1586 = vpack.c.b16 %v1032, %v1030
    %v1587 = vpack.c.b16 %v1035, %v1033
    %v1588 = vpack.c.b16 %v1036, %v1034
    %v1589 = vpack.c.b16 %v1039, %v1037
    %v1590 = vpack.c.b16 %v1040, %v1038
    %v1591 = vpack.c.b16 %v1043, %v1041
    %v1592 = vpack.c.b16 %v1044, %v1042
    %v1593 = vpack.c.b16 %v1047, %v1045
    %v1594 = vpack.c.b16 %v1048, %v1046
    %v1595 = vpack.c.b16 %v1051, %v1049
    %v1596 = vpack.c.b16 %v1052, %v1050
    %v1597 = vpack.c.b16 %v1055, %v1053
    %v1598 = vpack.c.b16 %v1056, %v1054
    %v1599 = vpack.c.b16 %v1059, %v1057
    %v1600 = vpack.c.b16 %v1060, %v1058
    %v1601 = vpack.c.b16 %v1063, %v1061
    %v1602 = vpack.c.b16 %v1064, %v1062
    %v1603 = vpack.c.b16 %v1067, %v1065
    %v1604 = vpack.c.b16 %v1068, %v1066
    %v1605 = vpack.c.b16 %v1071, %v1069
    %v1606 = vpack.c.b16 %v1072, %v1070
    %v1607 = vpack.c.b16 %v1075, %v1073
    %v1608 = vpack.c.b16 %v1076, %v1074
    %v1609 = vpack.c.b16 %v1079, %v1077
    %v1610 = vpack.c.b16 %v1080, %v1078
    %v1611 = vpack.c.b16 %v1083, %v1081
    %v1612 = vpack.c.b16 %v1084, %v1082
    %v1613 = vpack.c.b16 %v1087, %v1085
    %v1614 = vpack.c.b16 %v1088, %v1086
    %v1615 = vpack.c.b16 %v1091, %v1089
    %v1616 = vpack.c.b16 %v1092, %v1090
    %v1617 = vpack.c.b16 %v1095, %v1093
    %v1618 = vpack.c.b16 %v1096, %v1094
    %v1619 = vpack.c.b16 %v1099, %v1097
    %v1620 = vpack.c.b16 %v1100, %v1098
    %v1621 = vpack.c.b16 %v1103, %v1101
    %v1622 = vpack.c.b16 %v1104, %v1102
    %v1623 = vpack.c.b16 %v1107, %v1105
    %v1624 = vpack.c.b16 %v1108, %v1106
    %v1625 = vpack.c.b16 %v1111, %v1109
    %v1626 = vpack.c.b16 %v1112, %v1110
    %v1627 = vpack.c.b16 %v1115, %v1113
    %v1628 = vpack.c.b16 %v1116, %v1114
    %v1629 = vpack.c.b16 %v1119, %v1117
    %v1630 = vpack.c.b16 %v1120, %v1118
    %v1631 = vpack.c.b16 %v1123, %v1121
    %v1632 = vpack.c.b16 %v1124, %v1122
    %v1633 = vpack.c.b16 %v1127, %v1125
    %v1634 = vpack.c.b16 %v1128, %v1126
    %v1635 = vpack.c.b16 %v1131, %v1129
    %v1636 = vpack.c.b16 %v1132, %v1130
    %v1637 = vpack.c.b16 %v1135, %v1133
    %v1638 = vpack.c.b16 %v1136, %v1134
    %v1639 = vpack.c.b16 %v1139, %v1137
    %v1640 = vpack.c.b16 %v1140, %v1138
    %v1641 = vpack.c.b16 %v1143, %v1141
    %v1642 = vpack.c.b16 %v1144, %v1142
    %v1643 = vpack.c.b16 %v1147, %v1145
    %v1644 = vpack.c.b16 %v1148, %v1146
    %v1645 = vpack.c.b16 %v1151, %v1149
    %v1646 = vpack.c.b16 %v1152, %v1150
    %v1647 = vpack.c.b16 %v1155, %v1153
    %v1648 = vpack.c.b16 %v1156, %v1154
    %v1649 = vpack.c.b16 %v1159, %v1157
    %v1650 = vpack.c.b16 %v1160, %v1158
    %v1651 = vpack.c.b16 %v1163, %v1161
    %v1652 = vpack.c.b16 %v1164, %v1162
    %v1653 = vpack.c.b16 %v1167, %v1165
    %v1654 = vpack.c.b16 %v1168, %v1166
    %v1655 = vpack.c.b16 %v1171, %v1169
    %v1656 = vpack.c.b16 %v1172, %v1170
    %v1657 = vpack.c.b16 %v1175, %v1173
    %v1658 = vpack.c.b16 %v1176, %v1174
    %v1659 = vpack.c.b16 %v1179, %v1177
    %v1660 = vpack.c.b16 %v1180, %v1178
    %v1661 = vpack.c.b16 %v1183, %v1181
    %v1662 = vpack.c.b16 %v1184, %v1182
    %v1663 = vpack.c.b16 %v1187, %v1185
    %v1664 = vpack.c.b16 %v1188, %v1186
    %v1665 = vpack.c.b16 %v1191, %v1189
    %v1666 = vpack.c.b16 %v1192, %v1190
    %v1667 = vpack.c.b16 %v1195, %v1193
    %v1668 = vpack.c.b16 %v1196, %v1194
    %v1669 = vpack.c.b16 %v1199, %v1197
    %v1670 = vpack.c.b16 %v1200, %v1198
    %v1671 = vpack.c.b16 %v1203, %v1201
    %v1672 = vpack.c.b16 %v1204, %v1202
    %v1673 = vpack.c.b16 %v1207, %v1205
    %v1674 = vpack.c.b16 %v1208, %v1206
    %v1675 = vpack.c.b16 %v1211, %v1209
    %v1676 = vpack.c.b16 %v1212, %v1210
    %v1677 = vpack.c.b16 %v1215, %v1213
    %v1678 = vpack.c.b16 %v1216, %v1214
    %v1679 = vpack.c.b16 %v1219, %v1217
    %v1680 = vpack.c.b16 %v1220, %v1218
    %v1681 = vpack.c.b16 %v1223, %v1221
    %v1682 = vpack.c.b16 %v1224, %v1222
    %v1683 = vpack.c.b16 %v1227, %v1225
    %v1684 = vpack.c.b16 %v1228, %v1226
    %v1685 = vpack.c.b16 %v1231, %v1229
    %v1686 = vpack.c.b16 %v1232, %v1230
    %v1687 = vpack.c.b16 %v1235, %v1233
    %v1688 = vpack.c.b16 %v1236, %v1234
    %v1689 = vpack.c.b16 %v1239, %v1237
    %v1690 = vpack.c.b16 %v1240, %v1238
    %v1691 = vpack.c.b16 %v1243, %v1241
    %v1692 = vpack.c.b16 %v1244, %v1242
    %v1693 = vpack.c.b16 %v1247, %v1245
    %v1694 = vpack.c.b16 %v1248, %v1246
    %v1695 = vpack.c.b16 %v1251, %v1249
    %v1696 = vpack.c.b16 %v1252, %v1250
    %v1697 = vpack.c.b16 %v1255, %v1253
    %v1698 = vpack.c.b16 %v1256, %v1254
    %v1699 = vpack.c.b16 %v1259, %v1257
    %v1700 = vpack.c.b16 %v1260, %v1258
    %v1701 = vpack.c.b16 %v1263, %v1261
    %v1702 = vpack.c.b16 %v1264, %v1262
    %v1703 = vpack.c.b16 %v1267, %v1265
    %v1704 = vpack.c.b16 %v1268, %v1266
    %v1705 = vpack.c.b16 %v1271, %v1269
    %v1706 = vpack.c.b16 %v1272, %v1270
    %v1707 = vpack.c.b16 %v1275, %v1273
    %v1708 = vpack.c.b16 %v1276, %v1274
    %v1709 = vpack.c.b16 %v1279, %v1277
    %v1710 = vpack.c.b16 %v1280, %v1278
    %v1711 = vpack.c.b16 %v1283, %v1281
    %v1712 = vpack.c.b16 %v1284, %v1282
    %v1713 = vpack.c.b16 %v1287, %v1285
    %v1714 = vpack.c.b16 %v1288, %v1286
    %v1715 = vpack.c.b16 %v1291, %v1289
    %v1716 = vpack.c.b16 %v1292, %v1290
    %v1717 = vpack.c.b16 %v1295, %v1293
    %v1718 = vpack.c.b16 %v1296, %v1294
    %v1719 = vpack.c.b16 %v1299, %v1297
    %v1720 = vpack.c.b16 %v1300, %v1298
    %v1721 = vpack.c.b16 %v1303, %v1301
    %v1722 = vpack.c.b16 %v1304, %v1302
    %v1723 = vpack.c.b16 %v1307, %v1305
    %v1724 = vpack.c.b16 %v1308, %v1306
    %v1725 = vpack.c.b16 %v1311, %v1309
    %v1726 = vpack.c.b16 %v1312, %v1310
    %v1727 = vpack.c.b16 %v1315, %v1313
    %v1728 = vpack.c.b16 %v1316, %v1314
    %v1729 = vpack.c.b16 %v1319, %v1317
    %v1730 = vpack.c.b16 %v1320, %v1318
    %v1731 = vpack.c.b16 %v1323, %v1321
    %v1732 = vpack.c.b16 %v1324, %v1322
    %v1733 = vpack.c.b16 %v1327, %v1325
    %v1734 = vpack.c.b16 %v1328, %v1326
    %v1735 = vpack.c.b16 %v1331, %v1329
    %v1736 = vpack.c.b16 %v1332, %v1330
    %v1737 = vpack.c.b16 %v1335, %v1333
    %v1738 = vpack.c.b16 %v1336, %v1334
    %v1739 = vpack.c.b16 %v1339, %v1337
    %v1740 = vpack.c.b16 %v1340, %v1338
    %v1741 = vpack.c.b16 %v1343, %v1341
    %v1742 = vpack.c.b16 %v1344, %v1342
    %v1743 = vpack.c.b16 %v1347, %v1345
    %v1744 = vpack.c.b16 %v1348, %v1346
    %v1745 = vpack.c.b16 %v1351, %v1349
    %v1746 = vpack.c.b16 %v1352, %v1350
    %v1747 = vpack.c.b16 %v1355, %v1353
    %v1748 = vpack.c.b16 %v1356, %v1354
    %v1749 = vpack.c.b16 %v1359, %v1357
    %v1750 = vpack.c.b16 %v1360, %v1358
    %v1751 = vpack.c.b16 %v1363, %v1361
    %v1752 = vpack.c.b16 %v1364, %v1362
    %v1753 = vpack.c.b16 %v1367, %v1365
    %v1754 = vpack.c.b16 %v1368, %v1366
    %v1755 = vpack.c.b16 %v1371, %v1369
    %v1756 = vpack.c.b16 %v1372, %v1370
    %v1757 = vpack.c.b16 %v1375, %v1373
    %v1758 = vpack.c.b16 %v1376, %v1374
    %v1759 = vpack.c.b16 %v1379, %v1377
    %v1760 = vpack.c.b16 %v1380, %v1378
    %v1761 = vpack.c.b16 %v1383, %v1381
    %v1762 = vpack.c.b16 %v1384, %v1382
    %v1763 = vpack.c.b16 %v1387, %v1385
    %v1764 = vpack.c.b16 %v1388, %v1386
    %v1765 = vpack.c.b16 %v1391, %v1389
    %v1766 = vpack.c.b16 %v1392, %v1390
    %v1767 = vpack.c.b16 %v1395, %v1393
    %v1768 = vpack.c.b16 %v1396, %v1394
    %v1769 = vpack.c.b16 %v1399, %v1397
    %v1770 = vpack.c.b16 %v1400, %v1398
    %v1771 = vpack.c.b16 %v1403, %v1401
    %v1772 = vpack.c.b16 %v1404, %v1402
    %v1773 = vpack.c.b16 %v1407, %v1405
    %v1774 = vpack.c.b16 %v1408, %v1406
    %v1775 = vpack.c.b16 %v1411, %v1409
    %v1776 = vpack.c.b16 %v1412, %v1410
    %v1777 = vpack.c.b16 %v1415, %v1413
    %v1778 = vpack.c.b16 %v1416, %v1414
    %v1779 = vpack.c.b16 %v1419, %v1417
    %v1780 = vpack.c.b16 %v1420, %v1418
    %v1781 = vpack.c.b16 %v1423, %v1421
    %v1782 = vpack.c.b16 %v1424, %v1422
    %v1783 = vpack.c.b16 %v1427, %v1425
    %v1784 = vpack.c.b16 %v1428, %v1426
    %v1785 = vpack.c.b16 %v1431, %v1429
    %v1786 = vpack.c.b16 %v1432, %v1430
    %v1787 = vpack.c.b16 %v1435, %v1433
    %v1788 = vpack.c.b16 %v1436, %v1434
    %v1789 = vpack.c.b16 %v1439, %v1437
    %v1790 = vpack.c.b16 %v1440, %v1438
    %v1791 = vpack.c.b16 %v1443, %v1441
    %v1792 = vpack.c.b16 %v1444, %v1442
    %v1793 = vpack.c.b16 %v1447, %v1445
    %v1794 = vpack.c.b16 %v1448, %v1446
    %v1795 = vpack.c.b16 %v1451, %v1449
    %v1796 = vpack.c.b16 %v1452, %v1450
    %v1797 = vpack.c.b16 %v1455, %v1453
    %v1798 = vpack.c.b16 %v1456, %v1454
    %v1799 = vpack.c.b16 %v1459, %v1457
    %v1800 = vpack.c.b16 %v1460, %v1458
    %v1801 = vpack.c.b16 %v1463, %v1461
    %v1802 = vpack.c.b16 %v1464, %v1462
    %v1803 = vpack.c.b16 %v1467, %v1465
    %v1804 = vpack.c.b16 %v1468, %v1466
    %v1805 = vpack.c.b16 %v1471, %v1469
    %v1806 = vpack.c.b16 %v1472, %v1470
    %v1807 = vpack.c.b16 %v1475, %v1473
    %v1808 = vpack.c.b16 %v1476, %v1474
    %v1809 = vpack.c.b16 %v1479, %v1477
    %v1810 = vpack.c.b16 %v1480, %v1478
    %v1811 = vpack.c.b16 %v1483, %v1481
    %v1812 = vpack.c.b16 %v1484, %v1482
    %v1813 = vpack.c.b16 %v1487, %v1485
    %v1814 = vpack.c.b16 %v1488, %v1486
    %v1815 = vpack.c.b16 %v1491, %v1489
    %v1816 = vpack.c.b16 %v1492, %v1490
    %vm2141 = vcmask 261120
    %v2143 = vsel %vm2141, %v491, 0
    %2145 = vmatprep.subr.bf16.mxu0 %v1494
    %2146 = vmatpush1.bf16.msra.mxu0 %v1493
    %2147 = vmatprep.subr.bf16.mxu0 %v1496
    %2148 = vmatpush1.bf16.msra.mxu0 %v1495
    %2149 = vmatprep.subr.bf16.mxu0 %v1498
    %2150 = vmatpush1.bf16.msra.mxu0 %v1497
    %2151 = vmatprep.subr.bf16.mxu0 %v1500
    %2152 = vmatpush1.bf16.msra.mxu0 %v1499
    %2153 = vmatprep.subr.bf16.mxu0 %v1502
    %2154 = vmatpush1.bf16.msra.mxu0 %v1501
    %2155 = vmatprep.subr.bf16.mxu0 %v1504
    %2156 = vmatpush1.bf16.msra.mxu0 %v1503
    %2157 = vmatprep.subr.bf16.mxu0 %v1506
    %2158 = vmatpush1.bf16.msra.mxu0 %v1505
    %2159 = vmatprep.subr.bf16.mxu0 %v1508
    %2160 = vmatpush1.bf16.msra.mxu0 %v1507
    %2161 = vmatprep.subr.bf16.mxu0 %v1510
    %2162 = vmatpush1.bf16.msra.mxu0 %v1509
    %2163 = vmatprep.subr.bf16.mxu0 %v1512
    %2164 = vmatpush1.bf16.msra.mxu0 %v1511
    %2165 = vmatprep.subr.bf16.mxu0 %v1514
    %2166 = vmatpush1.bf16.msra.mxu0 %v1513
    %2167 = vmatprep.subr.bf16.mxu0 %v1516
    %2168 = vmatpush1.bf16.msra.mxu0 %v1515
    %2169 = vmatprep.subr.bf16.mxu0 %v1518
    %2170 = vmatpush1.bf16.msra.mxu0 %v1517
    %2171 = vmatprep.subr.bf16.mxu0 %v1520
    %2172 = vmatpush1.bf16.msra.mxu0 %v1519
    %2173 = vmatprep.subr.bf16.mxu0 %v1522
    %2174 = vmatpush1.bf16.msra.mxu0 %v1521
    %2175 = vmatprep.subr.bf16.mxu0 %v1524
    %2176 = vmatpush1.bf16.msra.mxu0 %v1523
    %2177 = vmatprep.mubr.bf16.mxu0 %v401
    %2178 = vmatmul.mubr.bf16.gmra.mrb[0].mxu0 %v387
    %v2179 = vpop.f32.mrb[0].mxu0
    %v2180 = vadd.f32 %v354, %v2179
    %v2181 = vpop.f32.mrb[0].mxu0
    %v2182 = vadd.f32 %v358, %v2181
    %v2183 = vpop.f32.mrb[0].mxu0
    %v2184 = vpop.f32.mrb[0].mxu0
    %2185 = vdwg.mxu0
    %2186 = vmatprep.subr.bf16.mxu0 %v1526
    %2187 = vmatpush1.bf16.msra.mxu0 %v1525
    %2188 = vmatprep.subr.bf16.mxu0 %v1528
    %2189 = vmatpush1.bf16.msra.mxu0 %v1527
    %2190 = vmatprep.subr.bf16.mxu0 %v1530
    %2191 = vmatpush1.bf16.msra.mxu0 %v1529
    %2192 = vmatprep.subr.bf16.mxu0 %v1532
    %2193 = vmatpush1.bf16.msra.mxu0 %v1531
    %2194 = vmatprep.subr.bf16.mxu0 %v1534
    %2195 = vmatpush1.bf16.msra.mxu0 %v1533
    %2196 = vmatprep.subr.bf16.mxu0 %v1536
    %2197 = vmatpush1.bf16.msra.mxu0 %v1535
    %2198 = vmatprep.subr.bf16.mxu0 %v1538
    %2199 = vmatpush1.bf16.msra.mxu0 %v1537
    %2200 = vmatprep.subr.bf16.mxu0 %v1540
    %2201 = vmatpush1.bf16.msra.mxu0 %v1539
    %2202 = vmatprep.subr.bf16.mxu0 %v1542
    %2203 = vmatpush1.bf16.msra.mxu0 %v1541
    %2204 = vmatprep.subr.bf16.mxu0 %v1544
    %2205 = vmatpush1.bf16.msra.mxu0 %v1543
    %2206 = vmatprep.subr.bf16.mxu0 %v1546
    %2207 = vmatpush1.bf16.msra.mxu0 %v1545
    %2208 = vmatprep.subr.bf16.mxu0 %v1548
    %2209 = vmatpush1.bf16.msra.mxu0 %v1547
    %2210 = vmatprep.subr.bf16.mxu0 %v1550
    %2211 = vmatpush1.bf16.msra.mxu0 %v1549
    %2212 = vmatprep.subr.bf16.mxu0 %v1552
    %2213 = vmatpush1.bf16.msra.mxu0 %v1551
    %2214 = vmatprep.subr.bf16.mxu0 %v1554
    %2215 = vmatpush1.bf16.msra.mxu0 %v1553
    %2216 = vmatprep.subr.bf16.mxu0 %v1556
    %2217 = vmatpush1.bf16.msra.mxu0 %v1555
    %2218 = vmatprep.mubr.bf16.mxu0 %v411
    %2219 = vmatmul.mubr.bf16.gmra.mrb[0].mxu0 %v409
    %v2220 = vpop.f32.mrb[0].mxu0
    %v2221 = vadd.f32 %v2180, %v2220
    %v2222 = vpop.f32.mrb[0].mxu0
    %v2223 = vadd.f32 %v2182, %v2222
    %v2224 = vpop.f32.mrb[0].mxu0
    %v2225 = vpop.f32.mrb[0].mxu0
    %2226 = vdwg.mxu0
    %2227 = vmatprep.subr.bf16.mxu0 %v1558
    %2228 = vmatpush1.bf16.msra.mxu0 %v1557
    %2229 = vmatprep.subr.bf16.mxu0 %v1560
    %2230 = vmatpush1.bf16.msra.mxu0 %v1559
    %2231 = vmatprep.subr.bf16.mxu0 %v1562
    %2232 = vmatpush1.bf16.msra.mxu0 %v1561
    %2233 = vmatprep.subr.bf16.mxu0 %v1564
    %2234 = vmatpush1.bf16.msra.mxu0 %v1563
    %2235 = vmatprep.subr.bf16.mxu0 %v1566
    %2236 = vmatpush1.bf16.msra.mxu0 %v1565
    %2237 = vmatprep.subr.bf16.mxu0 %v1568
    %2238 = vmatpush1.bf16.msra.mxu0 %v1567
    %2239 = vmatprep.subr.bf16.mxu0 %v1570
    %2240 = vmatpush1.bf16.msra.mxu0 %v1569
    %2241 = vmatprep.subr.bf16.mxu0 %v1572
    %2242 = vmatpush1.bf16.msra.mxu0 %v1571
    %2243 = vmatprep.subr.bf16.mxu0 %v1574
    %2244 = vmatpush1.bf16.msra.mxu0 %v1573
    %2245 = vmatprep.subr.bf16.mxu0 %v1576
    %2246 = vmatpush1.bf16.msra.mxu0 %v1575
    %2247 = vmatprep.subr.bf16.mxu0 %v1578
    %2248 = vmatpush1.bf16.msra.mxu0 %v1577
    %2249 = vmatprep.subr.bf16.mxu0 %v1580
    %2250 = vmatpush1.bf16.msra.mxu0 %v1579
    %2251 = vmatprep.subr.bf16.mxu0 %v1582
    %2252 = vmatpush1.bf16.msra.mxu0 %v1581
    %2253 = vmatprep.subr.bf16.mxu0 %v1584
    %2254 = vmatpush1.bf16.msra.mxu0 %v1583
    %2255 = vmatprep.subr.bf16.mxu0 %v1586
    %2256 = vmatpush1.bf16.msra.mxu0 %v1585
    %2257 = vmatprep.subr.bf16.mxu0 %v1588
    %2258 = vmatpush1.bf16.msra.mxu0 %v1587
    %2259 = vmatprep.mubr.bf16.mxu0 %v408
    %2260 = vmatmul.mubr.bf16.gmra.mrb[0].mxu0 %v394
    %v2261 = vpop.f32.mrb[0].mxu0
    %v2262 = vadd.f32 %v2221, %v2261
    %v2263 = vpop.f32.mrb[0].mxu0
    %v2264 = vadd.f32 %v2223, %v2263
    %v2265 = vpop.f32.mrb[0].mxu0
    %v2266 = vpop.f32.mrb[0].mxu0
    %2267 = vdwg.mxu0
    %2268 = vmatprep.subr.bf16.mxu0 %v1590
    %2269 = vmatpush1.bf16.msra.mxu0 %v1589
    %2270 = vmatprep.subr.bf16.mxu0 %v1592
    %2271 = vmatpush1.bf16.msra.mxu0 %v1591
    %2272 = vmatprep.subr.bf16.mxu0 %v1594
    %2273 = vmatpush1.bf16.msra.mxu0 %v1593
    %2274 = vmatprep.subr.bf16.mxu0 %v1596
    %2275 = vmatpush1.bf16.msra.mxu0 %v1595
    %2276 = vmatprep.subr.bf16.mxu0 %v1598
    %2277 = vmatpush1.bf16.msra.mxu0 %v1597
    %2278 = vmatprep.subr.bf16.mxu0 %v1600
    %2279 = vmatpush1.bf16.msra.mxu0 %v1599
    %2280 = vmatprep.subr.bf16.mxu0 %v1602
    %2281 = vmatpush1.bf16.msra.mxu0 %v1601
    %2282 = vmatprep.subr.bf16.mxu0 %v1604
    %2283 = vmatpush1.bf16.msra.mxu0 %v1603
    %2284 = vmatprep.subr.bf16.mxu0 %v1606
    %2285 = vmatpush1.bf16.msra.mxu0 %v1605
    %2286 = vmatprep.subr.bf16.mxu0 %v1608
    %2287 = vmatpush1.bf16.msra.mxu0 %v1607
    %2288 = vmatprep.subr.bf16.mxu0 %v1610
    %2289 = vmatpush1.bf16.msra.mxu0 %v1609
    %2290 = vmatprep.subr.bf16.mxu0 %v1612
    %2291 = vmatpush1.bf16.msra.mxu0 %v1611
    %2292 = vmatprep.subr.bf16.mxu0 %v1614
    %2293 = vmatpush1.bf16.msra.mxu0 %v1613
    %2294 = vmatprep.subr.bf16.mxu0 %v1616
    %2295 = vmatpush1.bf16.msra.mxu0 %v1615
    %2296 = vmatprep.subr.bf16.mxu0 %v1618
    %2297 = vmatpush1.bf16.msra.mxu0 %v1617
    %2298 = vmatprep.subr.bf16.mxu0 %v1620
    %2299 = vmatpush1.bf16.msra.mxu0 %v1619
    %2300 = vmatprep.mubr.bf16.mxu0 %v412
    %2301 = vmatmul.mubr.bf16.gmra.mrb[0].mxu0 %v410
    %v2302 = vpop.f32.mrb[0].mxu0
    %v2303 = vadd.f32 %v2262, %v2302
    %v2304 = vpop.f32.mrb[0].mxu0
    %v2305 = vadd.f32 %v2264, %v2304
    %v2306 = vpop.f32.mrb[0].mxu0
    %v2307 = vpop.f32.mrb[0].mxu0
    %2308 = vdwg.mxu0
    %2309 = vmatprep.subr.bf16.mxu0 %v1622
    %2310 = vmatpush1.bf16.msra.mxu0 %v1621
    %2311 = vmatprep.subr.bf16.mxu0 %v1624
    %2312 = vmatpush1.bf16.msra.mxu0 %v1623
    %2313 = vmatprep.subr.bf16.mxu0 %v1626
    %2314 = vmatpush1.bf16.msra.mxu0 %v1625
    %2315 = vmatprep.subr.bf16.mxu0 %v1628
    %2316 = vmatpush1.bf16.msra.mxu0 %v1627
    %2317 = vmatprep.subr.bf16.mxu0 %v1630
    %2318 = vmatpush1.bf16.msra.mxu0 %v1629
    %2319 = vmatprep.subr.bf16.mxu0 %v1632
    %2320 = vmatpush1.bf16.msra.mxu0 %v1631
    %2321 = vmatprep.subr.bf16.mxu0 %v1634
    %2322 = vmatpush1.bf16.msra.mxu0 %v1633
    %2323 = vmatprep.subr.bf16.mxu0 %v1636
    %2324 = vmatpush1.bf16.msra.mxu0 %v1635
    %2325 = vmatprep.subr.bf16.mxu0 %v1638
    %2326 = vmatpush1.bf16.msra.mxu0 %v1637
    %2327 = vmatprep.subr.bf16.mxu0 %v1640
    %2328 = vmatpush1.bf16.msra.mxu0 %v1639
    %2329 = vmatprep.subr.bf16.mxu0 %v1642
    %2330 = vmatpush1.bf16.msra.mxu0 %v1641
    %2331 = vmatprep.subr.bf16.mxu0 %v1644
    %2332 = vmatpush1.bf16.msra.mxu0 %v1643
    %2333 = vmatprep.subr.bf16.mxu0 %v1646
    %2334 = vmatpush1.bf16.msra.mxu0 %v1645
    %2335 = vmatprep.subr.bf16.mxu0 %v1648
    %2336 = vmatpush1.bf16.msra.mxu0 %v1647
    %2337 = vmatprep.subr.bf16.mxu0 %v1650
    %2338 = vmatpush1.bf16.msra.mxu0 %v1649
    %2339 = vmatprep.subr.bf16.mxu0 %v1652
    %2340 = vmatpush1.bf16.msra.mxu0 %v1651
    %2341 = vmatprep.mubr.bf16.mxu0 %v450
    %2342 = vmatmul.mubr.bf16.gmra.mrb[0].mxu0 %v436
    %v2343 = vpop.f32.mrb[0].mxu0
    %v2344 = vadd.f32 %v2303, %v2343
    %v2345 = vpop.f32.mrb[0].mxu0
    %v2346 = vadd.f32 %v2305, %v2345
    %v2347 = vpop.f32.mrb[0].mxu0
    %v2348 = vpop.f32.mrb[0].mxu0
    %2349 = vdwg.mxu0
    %2350 = vmatprep.subr.bf16.mxu0 %v1654
    %2351 = vmatpush1.bf16.msra.mxu0 %v1653
    %2352 = vmatprep.subr.bf16.mxu0 %v1656
    %2353 = vmatpush1.bf16.msra.mxu0 %v1655
    %2354 = vmatprep.subr.bf16.mxu0 %v1658
    %2355 = vmatpush1.bf16.msra.mxu0 %v1657
    %2356 = vmatprep.subr.bf16.mxu0 %v1660
    %2357 = vmatpush1.bf16.msra.mxu0 %v1659
    %2358 = vmatprep.subr.bf16.mxu0 %v1662
    %2359 = vmatpush1.bf16.msra.mxu0 %v1661
    %2360 = vmatprep.subr.bf16.mxu0 %v1664
    %2361 = vmatpush1.bf16.msra.mxu0 %v1663
    %2362 = vmatprep.subr.bf16.mxu0 %v1666
    %2363 = vmatpush1.bf16.msra.mxu0 %v1665
    %2364 = vmatprep.subr.bf16.mxu0 %v1668
    %2365 = vmatpush1.bf16.msra.mxu0 %v1667
    %2366 = vmatprep.subr.bf16.mxu0 %v1670
    %2367 = vmatpush1.bf16.msra.mxu0 %v1669
    %2368 = vmatprep.subr.bf16.mxu0 %v1672
    %2369 = vmatpush1.bf16.msra.mxu0 %v1671
    %2370 = vmatprep.subr.bf16.mxu0 %v1674
    %2371 = vmatpush1.bf16.msra.mxu0 %v1673
    %2372 = vmatprep.subr.bf16.mxu0 %v1676
    %2373 = vmatpush1.bf16.msra.mxu0 %v1675
    %2374 = vmatprep.subr.bf16.mxu0 %v1678
    %2375 = vmatpush1.bf16.msra.mxu0 %v1677
    %2376 = vmatprep.subr.bf16.mxu0 %v1680
    %2377 = vmatpush1.bf16.msra.mxu0 %v1679
    %2378 = vmatprep.subr.bf16.mxu0 %v1682
    %2379 = vmatpush1.bf16.msra.mxu0 %v1681
    %2380 = vmatprep.subr.bf16.mxu0 %v1684
    %2381 = vmatpush1.bf16.msra.mxu0 %v1683
    %2382 = vmatprep.mubr.bf16.mxu0 %v460
    %2383 = vmatmul.mubr.bf16.gmra.mrb[0].mxu0 %v458
    %v2384 = vpop.f32.mrb[0].mxu0
    %v2385 = vadd.f32 %v2344, %v2384
    %v2386 = vpop.f32.mrb[0].mxu0
    %v2387 = vadd.f32 %v2346, %v2386
    %v2388 = vpop.f32.mrb[0].mxu0
    %v2389 = vpop.f32.mrb[0].mxu0
    %2390 = vdwg.mxu0
    %2391 = vmatprep.subr.bf16.mxu0 %v1686
    %2392 = vmatpush1.bf16.msra.mxu0 %v1685
    %2393 = vmatprep.subr.bf16.mxu0 %v1688
    %2394 = vmatpush1.bf16.msra.mxu0 %v1687
    %2395 = vmatprep.subr.bf16.mxu0 %v1690
    %2396 = vmatpush1.bf16.msra.mxu0 %v1689
    %2397 = vmatprep.subr.bf16.mxu0 %v1692
    %2398 = vmatpush1.bf16.msra.mxu0 %v1691
    %2399 = vmatprep.subr.bf16.mxu0 %v1694
    %2400 = vmatpush1.bf16.msra.mxu0 %v1693
    %2401 = vmatprep.subr.bf16.mxu0 %v1696
    %2402 = vmatpush1.bf16.msra.mxu0 %v1695
    %2403 = vmatprep.subr.bf16.mxu0 %v1698
    %2404 = vmatpush1.bf16.msra.mxu0 %v1697
    %2405 = vmatprep.subr.bf16.mxu0 %v1700
    %2406 = vmatpush1.bf16.msra.mxu0 %v1699
    %2407 = vmatprep.subr.bf16.mxu0 %v1702
    %2408 = vmatpush1.bf16.msra.mxu0 %v1701
    %2409 = vmatprep.subr.bf16.mxu0 %v1704
    %2410 = vmatpush1.bf16.msra.mxu0 %v1703
    %2411 = vmatprep.subr.bf16.mxu0 %v1706
    %2412 = vmatpush1.bf16.msra.mxu0 %v1705
    %2413 = vmatprep.subr.bf16.mxu0 %v1708
    %2414 = vmatpush1.bf16.msra.mxu0 %v1707
    %2415 = vmatprep.subr.bf16.mxu0 %v1710
    %2416 = vmatpush1.bf16.msra.mxu0 %v1709
    %2417 = vmatprep.subr.bf16.mxu0 %v1712
    %2418 = vmatpush1.bf16.msra.mxu0 %v1711
    %2419 = vmatprep.subr.bf16.mxu0 %v1714
    %2420 = vmatpush1.bf16.msra.mxu0 %v1713
    %2421 = vmatprep.subr.bf16.mxu0 %v1716
    %2422 = vmatpush1.bf16.msra.mxu0 %v1715
    %2423 = vmatprep.mubr.bf16.mxu0 %v457
    %2424 = vmatmul.mubr.bf16.gmra.mrb[0].mxu0 %v443
    %v2425 = vpop.f32.mrb[0].mxu0
    %v2426 = vadd.f32 %v2385, %v2425
    %v2427 = vpop.f32.mrb[0].mxu0
    %v2428 = vadd.f32 %v2387, %v2427
    %v2429 = vpop.f32.mrb[0].mxu0
    %v2430 = vpop.f32.mrb[0].mxu0
    %2431 = vdwg.mxu0
    %2432 = vmatprep.subr.bf16.mxu0 %v1718
    %2433 = vmatpush1.bf16.msra.mxu0 %v1717
    %2434 = vmatprep.subr.bf16.mxu0 %v1720
    %2435 = vmatpush1.bf16.msra.mxu0 %v1719
    %2436 = vmatprep.subr.bf16.mxu0 %v1722
    %2437 = vmatpush1.bf16.msra.mxu0 %v1721
    %2438 = vmatprep.subr.bf16.mxu0 %v1724
    %2439 = vmatpush1.bf16.msra.mxu0 %v1723
    %2440 = vmatprep.subr.bf16.mxu0 %v1726
    %2441 = vmatpush1.bf16.msra.mxu0 %v1725
    %2442 = vmatprep.subr.bf16.mxu0 %v1728
    %2443 = vmatpush1.bf16.msra.mxu0 %v1727
    %2444 = vmatprep.subr.bf16.mxu0 %v1730
    %2445 = vmatpush1.bf16.msra.mxu0 %v1729
    %2446 = vmatprep.subr.bf16.mxu0 %v1732
    %2447 = vmatpush1.bf16.msra.mxu0 %v1731
    %2448 = vmatprep.subr.bf16.mxu0 %v1734
    %2449 = vmatpush1.bf16.msra.mxu0 %v1733
    %2450 = vmatprep.subr.bf16.mxu0 %v1736
    %2451 = vmatpush1.bf16.msra.mxu0 %v1735
    %2452 = vmatprep.subr.bf16.mxu0 %v1738
    %2453 = vmatpush1.bf16.msra.mxu0 %v1737
    %2454 = vmatprep.subr.bf16.mxu0 %v1740
    %2455 = vmatpush1.bf16.msra.mxu0 %v1739
    %2456 = vmatprep.subr.bf16.mxu0 %v1742
    %2457 = vmatpush1.bf16.msra.mxu0 %v1741
    %2458 = vmatprep.subr.bf16.mxu0 %v1744
    %2459 = vmatpush1.bf16.msra.mxu0 %v1743
    %2460 = vmatprep.subr.bf16.mxu0 %v1746
    %2461 = vmatpush1.bf16.msra.mxu0 %v1745
    %2462 = vmatprep.subr.bf16.mxu0 %v1748
    %2463 = vmatpush1.bf16.msra.mxu0 %v1747
    %2464 = vmatprep.mubr.bf16.mxu0 %v461
    %2465 = vmatmul.mubr.bf16.gmra.mrb[0].mxu0 %v459
    %v2466 = vpop.f32.mrb[0].mxu0
    %v2467 = vadd.f32 %v2426, %v2466
    %v2468 = vpop.f32.mrb[0].mxu0
    %v2469 = vadd.f32 %v2428, %v2468
    %v2470 = vpop.f32.mrb[0].mxu0
    %v2471 = vpop.f32.mrb[0].mxu0
    %2472 = vdwg.mxu0
    %2473 = vmatprep.subr.bf16.mxu0 %v1750
    %2474 = vmatpush1.bf16.msra.mxu0 %v1749
    %2475 = vmatprep.subr.bf16.mxu0 %v1752
    %2476 = vmatpush1.bf16.msra.mxu0 %v1751
    %2477 = vmatprep.subr.bf16.mxu0 %v1754
    %2478 = vmatpush1.bf16.msra.mxu0 %v1753
    %2479 = vmatprep.subr.bf16.mxu0 %v1756
    %2480 = vmatpush1.bf16.msra.mxu0 %v1755
    %2481 = vmatprep.subr.bf16.mxu0 %v1758
    %2482 = vmatpush1.bf16.msra.mxu0 %v1757
    %2483 = vmatprep.subr.bf16.mxu0 %v1760
    %2484 = vmatpush1.bf16.msra.mxu0 %v1759
    %2485 = vmatprep.subr.bf16.mxu0 %v1762
    %2486 = vmatpush1.bf16.msra.mxu0 %v1761
    %2487 = vmatprep.subr.bf16.mxu0 %v1764
    %2488 = vmatpush1.bf16.msra.mxu0 %v1763
    %2489 = vmatprep.subr.bf16.mxu0 %v1766
    %2490 = vmatpush1.bf16.msra.mxu0 %v1765
    %2491 = vmatprep.subr.bf16.mxu0 %v1768
    %2492 = vmatpush1.bf16.msra.mxu0 %v1767
    %2493 = vmatprep.subr.bf16.mxu0 %v1770
    %2494 = vmatpush1.bf16.msra.mxu0 %v1769
    %2495 = vmatprep.subr.bf16.mxu0 %v1772
    %2496 = vmatpush1.bf16.msra.mxu0 %v1771
    %2497 = vmatprep.subr.bf16.mxu0 %v1774
    %2498 = vmatpush1.bf16.msra.mxu0 %v1773
    %2499 = vmatprep.subr.bf16.mxu0 %v1776
    %2500 = vmatpush1.bf16.msra.mxu0 %v1775
    %2501 = vmatprep.subr.bf16.mxu0 %v1778
    %2502 = vmatpush1.bf16.msra.mxu0 %v1777
    %2503 = vmatprep.subr.bf16.mxu0 %v1780
    %2504 = vmatpush1.bf16.msra.mxu0 %v1779
    %2505 = vmatprep.mubr.bf16.mxu0 %v498
    %2506 = vmatmul.mubr.bf16.gmra.mrb[0].mxu0 %v484
    %v2507 = vpop.f32.mrb[0].mxu0
    %v2508 = vadd.f32 %v2467, %v2507
    %v2509 = vpop.f32.mrb[0].mxu0
    %v2510 = vadd.f32 %v2469, %v2509
    %v2511 = vpop.f32.mrb[0].mxu0
    %v2512 = vpop.f32.mrb[0].mxu0
    %2513 = vdwg.mxu0
    %2514 = vmatprep.subr.bf16.mxu0 %v1782
    %2515 = vmatpush1.bf16.msra.mxu0 %v1781
    %2516 = vmatprep.subr.bf16.mxu0 %v1784
    %2517 = vmatpush1.bf16.msra.mxu0 %v1783
    %2518 = vmatprep.subr.bf16.mxu0 %v1786
    %2519 = vmatpush1.bf16.msra.mxu0 %v1785
    %2520 = vmatprep.subr.bf16.mxu0 %v1788
    %2521 = vmatpush1.bf16.msra.mxu0 %v1787
    %2522 = vmatprep.subr.bf16.mxu0 %v1790
    %2523 = vmatpush1.bf16.msra.mxu0 %v1789
    %2524 = vmatprep.subr.bf16.mxu0 %v1792
    %2525 = vmatpush1.bf16.msra.mxu0 %v1791
    %2526 = vmatprep.subr.bf16.mxu0 %v1794
    %2527 = vmatpush1.bf16.msra.mxu0 %v1793
    %2528 = vmatprep.subr.bf16.mxu0 %v1796
    %2529 = vmatpush1.bf16.msra.mxu0 %v1795
    %2530 = vmatprep.subr.bf16.mxu0 %v1798
    %2531 = vmatpush1.bf16.msra.mxu0 %v1797
    %2532 = vmatprep.subr.bf16.mxu0 %v1800
    %2533 = vmatpush1.bf16.msra.mxu0 %v1799
    %2534 = vmatprep.subr.bf16.mxu0 %v1802
    %2535 = vmatpush1.bf16.msra.mxu0 %v1801
    %2536 = vmatprep.subr.bf16.mxu0 %v1804
    %2537 = vmatpush1.bf16.msra.mxu0 %v1803
    %2538 = vmatprep.subr.bf16.mxu0 %v1806
    %2539 = vmatpush1.bf16.msra.mxu0 %v1805
    %2540 = vmatprep.subr.bf16.mxu0 %v1808
    %2541 = vmatpush1.bf16.msra.mxu0 %v1807
    %2542 = vmatprep.subr.bf16.mxu0 %v1810
    %2543 = vmatpush1.bf16.msra.mxu0 %v1809
    %2544 = vmatprep.subr.bf16.mxu0 %v1812
    %2545 = vmatpush1.bf16.msra.mxu0 %v1811
    %2546 = vmatprep.mubr.bf16.mxu0 %v500
    %2547 = vmatmul.mubr.bf16.gmra.mrb[0].mxu0 %v499
    %v2548 = vpop.f32.mrb[0].mxu0
    %v2549 = vadd.f32 %v2508, %v2548
    %v2550 = vpop.f32.mrb[0].mxu0
    %v2551 = vadd.f32 %v2510, %v2550
    %v2552 = vpop.f32.mrb[0].mxu0
    %v2553 = vpop.f32.mrb[0].mxu0
    %2554 = vdwg.mxu0
    %2555 = vmatprep.subr.bf16.mxu0 %v1814
    %2556 = vmatpush1.bf16.msra.mxu0 %v1813
    %2557 = vmatprep.subr.bf16.mxu0 %v1816
    %2558 = vmatpush1.bf16.msra.mxu0 %v1815
    %2559 = vmatprep.subr.bf16.mxu0 0
    %2560 = vmatpush1.bf16.msra.mxu0 0
    %2561 = vmatprep.subr.bf16.mxu0 0
    %2562 = vmatpush1.bf16.msra.mxu0 0
    %2563 = vmatprep.subr.bf16.mxu0 0
    %2564 = vmatpush1.bf16.msra.mxu0 0
    %2565 = vmatprep.subr.bf16.mxu0 0
    %2566 = vmatpush1.bf16.msra.mxu0 0
    %2567 = vmatprep.subr.bf16.mxu0 0
    %2568 = vmatpush1.bf16.msra.mxu0 0
    %2569 = vmatprep.subr.bf16.mxu0 0
    %2570 = vmatpush1.bf16.msra.mxu0 0
    %2571 = vmatprep.subr.bf16.mxu0 0
    %2572 = vmatpush1.bf16.msra.mxu0 0
    %2573 = vmatprep.subr.bf16.mxu0 0
    %2574 = vmatpush1.bf16.msra.mxu0 0
    %2575 = vmatprep.subr.bf16.mxu0 0
    %2576 = vmatpush1.bf16.msra.mxu0 0
    %2577 = vmatprep.subr.bf16.mxu0 0
    %2578 = vmatpush1.bf16.msra.mxu0 0
    %2579 = vmatprep.subr.bf16.mxu0 0
    %2580 = vmatpush1.bf16.msra.mxu0 0
    %2581 = vmatprep.subr.bf16.mxu0 0
    %2582 = vmatpush1.bf16.msra.mxu0 0
    %2583 = vmatprep.subr.bf16.mxu0 0
    %2584 = vmatpush1.bf16.msra.mxu0 0
    %2585 = vmatprep.subr.bf16.mxu0 0
    %2586 = vmatpush1.bf16.msra.mxu0 0
    %2587 = vmatprep.mubr.bf16.mxu0 0
    %2588 = vmatmul.mubr.bf16.gmra.mrb[0].mxu0 %v2143
    %v2589 = vpop.f32.mrb[0].mxu0
    %v2590 = vadd.f32 %v2549, %v2589
    %v2591 = vpop.f32.mrb[0].mxu0
    %v2592 = vadd.f32 %v2551, %v2591
    %v2593 = vpop.f32.mrb[0].mxu0
    %v2594 = vpop.f32.mrb[0].mxu0
    %2595 = vdwg.mxu0
    %v2596 = vmax.f32 %v2590, 0.0
    %v2597 = vmax.f32 %v2592, 0.0
    %v2598 = vpack.c.bf16 %v2596, %v2596
    %v2599 = vpack.c.bf16 %v2597, %v2597
    %v2600 = vld [vmem:[%s3] sm:$0xf]
    %v2601 = vld [vmem:[%s3 + $0x4] sm:$0xf]
    %v2602 = vld [vmem:[%s3 + $0x8] sm:$0xf]
    %v2603 = vld [vmem:[%s3 + $0xc] sm:$0xf]
    %v2604 = vld [vmem:[%s3 + $0x10] sm:$0xf]
    %v2605 = vld [vmem:[%s3 + $0x14] sm:$0xf]
    %v2606 = vld [vmem:[%s3 + $0x18] sm:$0xf]
    %v2607 = vld [vmem:[%s3 + $0x1c] sm:$0xf]
    %v2608 = vld [vmem:[%s3 + $0x20] sm:$0xf]
    %v2609 = vld [vmem:[%s3 + $0x24] sm:$0xf]
    %v2610 = vld [vmem:[%s3 + $0x28] sm:$0xf]
    %v2611 = vld [vmem:[%s3 + $0x2c] sm:$0xf]
    %v2612 = vld [vmem:[%s3 + $0x30] sm:$0xf]
    %v2613 = vld [vmem:[%s3 + $0x34] sm:$0xf]
    %v2614 = vld [vmem:[%s3 + $0x38] sm:$0xf]
    %v2615 = vld [vmem:[%s3 + $0x3c] sm:$0xf]
    %v2616 = vld [vmem:[%s3 + $0x40] sm:$0xf]
    %v2617 = vld [vmem:[%s3 + $0x44] sm:$0xf]
    %v2618 = vld [vmem:[%s3 + $0x48] sm:$0xf]
    %v2619 = vld [vmem:[%s3 + $0x4c] sm:$0xf]
    %v2620 = vld [vmem:[%s3 + $0x50] sm:$0xf]
    %v2621 = vld [vmem:[%s3 + $0x54] sm:$0xf]
    %v2622 = vld [vmem:[%s3 + $0x58] sm:$0xf]
    %v2623 = vld [vmem:[%s3 + $0x5c] sm:$0xf]
    %v2624 = vld [vmem:[%s3 + $0x60] sm:$0xf]
    %v2625 = vld [vmem:[%s3 + $0x64] sm:$0xf]
    %v2626 = vld [vmem:[%s3 + $0x68] sm:$0xf]
    %v2627 = vld [vmem:[%s3 + $0x6c] sm:$0xf]
    %v2628 = vld [vmem:[%s3 + $0x70] sm:$0xf]
    %v2629 = vld [vmem:[%s3 + $0x74] sm:$0xf]
    %v2630 = vld [vmem:[%s3 + $0x78] sm:$0xf]
    %v2631 = vld [vmem:[%s3 + $0x7c] sm:$0xf]
    %v2632 = vld [vmem:[%s4] sm:$0x1]
    %v2634 = vlaneseq
    %v2635 = vshrl.u32 %v2634, 7
    %v2636 = vsub.s32 0, %v2635
    %v2637 = vrot.slane %v2632, %v2636
    %v2671 = vunpack.c.l.b16 %v2600
    %v2672 = vunpack.c.l.b16 %v2601
    %v2673 = vunpack.c.l.b16 %v2602
    %v2674 = vunpack.c.l.b16 %v2603
    %v2675 = vunpack.c.l.b16 %v2604
    %v2676 = vunpack.c.l.b16 %v2605
    %v2677 = vunpack.c.l.b16 %v2606
    %v2678 = vunpack.c.l.b16 %v2607
    %v2679 = vunpack.c.l.b16 %v2608
    %v2680 = vunpack.c.l.b16 %v2609
    %v2681 = vunpack.c.l.b16 %v2610
    %v2682 = vunpack.c.l.b16 %v2611
    %v2683 = vunpack.c.l.b16 %v2612
    %v2684 = vunpack.c.l.b16 %v2613
    %v2685 = vunpack.c.l.b16 %v2614
    %v2686 = vunpack.c.l.b16 %v2615
    %v2687 = vunpack.c.l.b16 %v2616
    %v2688 = vunpack.c.l.b16 %v2617
    %v2689 = vunpack.c.l.b16 %v2618
    %v2690 = vunpack.c.l.b16 %v2619
    %v2691 = vunpack.c.l.b16 %v2620
    %v2692 = vunpack.c.l.b16 %v2621
    %v2693 = vunpack.c.l.b16 %v2622
    %v2694 = vunpack.c.l.b16 %v2623
    %v2695 = vunpack.c.l.b16 %v2624
    %v2696 = vunpack.c.l.b16 %v2625
    %v2697 = vunpack.c.l.b16 %v2626
    %v2698 = vunpack.c.l.b16 %v2627
    %v2699 = vunpack.c.l.b16 %v2628
    %v2700 = vunpack.c.l.b16 %v2629
    %v2701 = vunpack.c.l.b16 %v2630
    %v2702 = vunpack.c.l.b16 %v2631
    %v2703 = vpack.c.b16 %v2672, %v2671
    %v2704 = vpack.c.b16 %v2674, %v2673
    %v2705 = vpack.c.b16 %v2676, %v2675
    %v2706 = vpack.c.b16 %v2678, %v2677
    %v2707 = vpack.c.b16 %v2680, %v2679
    %v2708 = vpack.c.b16 %v2682, %v2681
    %v2709 = vpack.c.b16 %v2684, %v2683
    %v2710 = vpack.c.b16 %v2686, %v2685
    %v2711 = vpack.c.b16 %v2688, %v2687
    %v2712 = vpack.c.b16 %v2690, %v2689
    %v2713 = vpack.c.b16 %v2692, %v2691
    %v2714 = vpack.c.b16 %v2694, %v2693
    %v2715 = vpack.c.b16 %v2696, %v2695
    %v2716 = vpack.c.b16 %v2698, %v2697
    %v2717 = vpack.c.b16 %v2700, %v2699
    %v2718 = vpack.c.b16 %v2702, %v2701
    %2735 = vmatprep.subr.bf16.mxu0 0
    %2736 = vmatpush1.bf16.msra.mxu0 %v2703
    %2737 = vmatprep.subr.bf16.mxu0 0
    %2738 = vmatpush1.bf16.msra.mxu0 %v2704
    %2739 = vmatprep.subr.bf16.mxu0 0
    %2740 = vmatpush1.bf16.msra.mxu0 %v2705
    %2741 = vmatprep.subr.bf16.mxu0 0
    %2742 = vmatpush1.bf16.msra.mxu0 %v2706
    %2743 = vmatprep.subr.bf16.mxu0 0
    %2744 = vmatpush1.bf16.msra.mxu0 %v2707
    %2745 = vmatprep.subr.bf16.mxu0 0
    %2746 = vmatpush1.bf16.msra.mxu0 %v2708
    %2747 = vmatprep.subr.bf16.mxu0 0
    %2748 = vmatpush1.bf16.msra.mxu0 %v2709
    %2749 = vmatprep.subr.bf16.mxu0 0
    %2750 = vmatpush1.bf16.msra.mxu0 %v2710
    %2751 = vmatprep.subr.bf16.mxu0 0
    %2752 = vmatpush1.bf16.msra.mxu0 %v2711
    %2753 = vmatprep.subr.bf16.mxu0 0
    %2754 = vmatpush1.bf16.msra.mxu0 %v2712
    %2755 = vmatprep.subr.bf16.mxu0 0
    %2756 = vmatpush1.bf16.msra.mxu0 %v2713
    %2757 = vmatprep.subr.bf16.mxu0 0
    %2758 = vmatpush1.bf16.msra.mxu0 %v2714
    %2759 = vmatprep.subr.bf16.mxu0 0
    %2760 = vmatpush1.bf16.msra.mxu0 %v2715
    %2761 = vmatprep.subr.bf16.mxu0 0
    %2762 = vmatpush1.bf16.msra.mxu0 %v2716
    %2763 = vmatprep.subr.bf16.mxu0 0
    %2764 = vmatpush1.bf16.msra.mxu0 %v2717
    %2765 = vmatprep.subr.bf16.mxu0 0
    %2766 = vmatpush1.bf16.msra.mxu0 %v2718
    %2767 = vmatprep.mubr.bf16.mxu0 %v2599
    %2768 = vmatmul.mubr.bf16.gmra.mrb[0].mxu0 %v2598
    %v2769 = vpop.f32.mrb[0].mxu0
    %v2770 = vadd.f32 %v2637, %v2769
    %v2771 = vpop.f32.mrb[0].mxu0
    %v2772 = vpop.f32.mrb[0].mxu0
    %v2773 = vpop.f32.mrb[0].mxu0
    %2774 = vdwg.mxu0
    %2775 = vst [vmem:[#allocation2] sm:$0x3] %v2770
    // Predicated region
    $region22: #{dqn_forward.5} parent=1 // pred_check
      _
    $region23: #{dqn_forward.5} parent=1 // pred_check_branch
      %2777 = sbr.rel (0) target = $region25
    $region24: #{dqn_forward.5} parent=1 // pred_region
      %s2779 = ssub.s32 32, 32
      %2780 = vsyncadd [#allocation3], %s2779
      %s2782 = sshll.u32 [#allocation2], 4
      %s2783 = int_to_ptr.vmem [resolvable:$true] %s2782
      %2785 = dma.vmem_to_hbm [thread:$0]  %s2783, 32, %s5, [#allocation3]
    $region25: #{dqn_forward.5} parent=1 // pred_fallthru
      _
    // Predicated region
    $region26: #{dqn_forward.5} parent=1 // pred_check
      _
    $region27: #{dqn_forward.5} parent=1 // pred_check_branch
      %2787 = sbr.rel (0) target = $region29
    $region28: #{dqn_forward.5} parent=1 // pred_region
      %2788 = dma.done [#allocation3], 32
    $region29: #{dqn_forward.5} parent=1 // pred_fallthru
      _
    %2789 = vsyncpa [#allocation3], 1

</llo_original>
